<compile_context>
chip_gen: v7x
topology: tpu7x:2x2x1
jax: 0.10.0
libtpu: 0.0.40
codegen_flags: <defaults>
</compile_context>

<pallas_src>
import jax
import jax.numpy as jnp
from jax.experimental import pallas as pl
from jax.experimental.pallas import tpu as pltpu

# ---------------- model dimensions (small, tile-friendly) ----------------
B = 2            # batch
L = 16           # sequence length
H = 128          # encoder hidden size (stand-in for 768)
FFN = 256        # encoder FFN intermediate size
NUM_LAYERS = 2   # encoder layers
VOCAB = 64       # vocabulary size
MAX_POS = 8      # position embedding table size (position_idx in [0, 4))
N_NODES = 16     # DFG nodes
FEAT = 128       # DFG node feature size (stand-in for 768)
GHID = 128       # GraphEmbedding hidden size (stand-in for 256)
CLS_HID = 128    # classifier dense size
N_CLASSES = 2
LANE = 128       # lane-padded classifier output width
LN_EPS = 1e-5

BL = B * L
BN = B * N_NODES


# =========================== Pallas kernel ===============================

def _ln(x, g, b):
    mu = jnp.mean(x, axis=-1, keepdims=True)
    var = jnp.mean((x - mu) ** 2, axis=-1, keepdims=True)
    return (x - mu) * jax.lax.rsqrt(var + LN_EPS) * g + b


def _bf16(x):
    return x.astype(jnp.bfloat16)


def fused_forward_kernel(
        ids_ref, posc_ref, posr_ref, attn_ref,
        wemb_ref, pemb_ref, eg_ref, eb_ref,
        wqkv_ref, bqkv_ref, wo_ref, bo_ref, ln1g_ref, ln1b_ref,
        w1_ref, b1_ref, w2_ref, b2_ref, ln2g_ref, ln2b_ref,
        feat_ref, adj_ref, amask_ref,
        gw1_ref, gb1_ref, gw2_ref, gb2_ref,
        cwd_ref, cbd_ref, cwo_ref, cbo_ref,
        out_ref):
    """Whole GraphCodeBERT forward for the full batch in one invocation."""
    ids = ids_ref[...]                                   # (BL, 1) int32
    posc = posc_ref[...]                                 # (BL, 1) int32
    posr = posr_ref[...]                                 # (1, BL) int32
    am = attn_ref[...]                                   # (BL, BL) f32, block-diag

    # ---- in-kernel embedding gathers via one-hot matmuls (bf16 MXU) ----
    vcol = jax.lax.broadcasted_iota(jnp.int32, (BL, VOCAB), 1)
    onehot_w = _bf16(vcol == ids)
    emb = jnp.dot(onehot_w, wemb_ref[...],
                  preferred_element_type=jnp.float32)    # (BL, H) f32

    pcol = jax.lax.broadcasted_iota(jnp.int32, (BL, MAX_POS), 1)
    onehot_p = _bf16(pcol == posc)
    pose = jnp.dot(onehot_p, pemb_ref[...],
                   preferred_element_type=jnp.float32)   # (BL, H) f32

    # ---- embedding mix: node->token masked averaging (flat block-diag) ----
    nodes = (posc == 0).astype(jnp.float32)              # (BL, 1)
    token = (posr >= 2).astype(jnp.float32)              # (1, BL)
    m = nodes * token * am                                # zero off-block
    m = m * pl.reciprocal(jnp.sum(m, axis=-1, keepdims=True) + 1e-10,
                          approx=True)
    avg = jnp.dot(_bf16(m), _bf16(emb),
                  preferred_element_type=jnp.float32)
    mixed = emb * (1.0 - nodes) + avg * nodes
    x = _ln(mixed + pose, eg_ref[...], eb_ref[...])       # (BL, H) f32

    # additive attention bias; off-block entries of `am` are 0 -> -1e9 there,
    # so cross-batch positions softmax to ~0 and the flat softmax matches the
    # per-batch softmax.
    bias = (1.0 - am) * (-1e9)

    # ---- transformer encoder layers (weights stacked over NUM_LAYERS) ----
    for l in range(NUM_LAYERS):
        xb = _bf16(x)
        qkv = jnp.dot(xb, wqkv_ref[l],
                      preferred_element_type=jnp.float32) + bqkv_ref[l]
        q = _bf16(qkv[:, 0 * H:1 * H])     # 1/sqrt(H) folded into Wq/bq
        k = _bf16(qkv[:, 1 * H:2 * H])
        v = _bf16(qkv[:, 2 * H:3 * H])

        # q @ k^T with contraction on the feature dim (no explicit transpose)
        scores = jax.lax.dot_general(
            q, k, (((1,), (1,)), ((), ())),
            preferred_element_type=jnp.float32) + bias    # (BL, BL)
        scores = scores - jnp.max(scores, axis=-1, keepdims=True)
        p = jnp.exp(scores)
        p = p * pl.reciprocal(jnp.sum(p, axis=-1, keepdims=True), approx=True)
        ctx = jnp.dot(_bf16(p), v, preferred_element_type=jnp.float32)

        attn_out = jnp.dot(_bf16(ctx), wo_ref[l],
                           preferred_element_type=jnp.float32) + bo_ref[l]
        xr = _ln(x + attn_out, ln1g_ref[l], ln1b_ref[l])  # (BL, H) f32

        h = jnp.dot(_bf16(xr), w1_ref[l],
                    preferred_element_type=jnp.float32) + b1_ref[l]
        h = jax.nn.gelu(h, approximate=True)
        y = jnp.dot(_bf16(h), w2_ref[l],
                    preferred_element_type=jnp.float32) + b2_ref[l]
        x = _ln(xr + y, ln2g_ref[l], ln2b_ref[l])         # (BL, H) f32

    # ---- [CLS] token select: static row slices (rows 0, L, 2L, ...) ----
    vec = jnp.concatenate([x[b * L:b * L + 1, :] for b in range(B)], axis=0)

    # ---- GraphEmbedding: 2-layer GCN (flat block-diag adj) + masked sum ----
    feat = feat_ref[...]                                  # (BN, FEAT) bf16
    adj = adj_ref[...]                                    # (BN, BN) bf16

    g = jnp.dot(feat, gw1_ref[...], preferred_element_type=jnp.float32)
    g = jnp.maximum(jnp.dot(adj, _bf16(g),
                            preferred_element_type=jnp.float32)
                    + gb1_ref[...], 0.0)
    g = jnp.dot(_bf16(g), gw2_ref[...], preferred_element_type=jnp.float32)
    g = jnp.maximum(jnp.dot(adj, _bf16(g),
                            preferred_element_type=jnp.float32)
                    + gb2_ref[...], 0.0)

    gm = g * amask_ref[...]                               # (BN, GHID) f32
    g_emb = jnp.concatenate(
        [jnp.sum(gm[b * N_NODES:(b + 1) * N_NODES, :], axis=0, keepdims=True)
         for b in range(B)], axis=0)                      # (B, GHID)

    # ---- classifier: cat -> dense -> tanh -> out_proj (lane-padded out) ----
    cat = _bf16(jnp.concatenate([vec, g_emb], axis=1))    # (B, H+GHID)
    hcls = jnp.tanh(jnp.dot(cat, cwd_ref[...],
                            preferred_element_type=jnp.float32) + cbd_ref[...])
    out_ref[...] = jnp.dot(_bf16(hcls), cwo_ref[...],
                           preferred_element_type=jnp.float32) + cbo_ref[...]


# =========================== parameters ====================================

def _w(key, shape, scale=0.02):
    return (scale * jax.random.normal(key, shape)).astype(jnp.float32)


def init_params(key):
    keys = iter(jax.random.split(key, 2 + NUM_LAYERS * 6 + 2 + 2))
    inv_sqrt_h = 1.0 / float(H) ** 0.5
    p = {
        'word_emb': _w(next(keys), (VOCAB, H)).astype(jnp.bfloat16),
        'pos_emb': _w(next(keys), (MAX_POS, H)).astype(jnp.bfloat16),
        'emb_ln_g': jnp.ones((1, H), jnp.float32),
        'emb_ln_b': jnp.zeros((1, H), jnp.float32),
    }
    wqkv, bqkv, wo, bo = [], [], [], []
    ln1g, ln1b, w1, b1, w2, b2, ln2g, ln2b = ([] for _ in range(8))
    for _ in range(NUM_LAYERS):
        wq = _w(next(keys), (H, H)) * inv_sqrt_h   # fold 1/sqrt(H) into Wq
        wk = _w(next(keys), (H, H))
        wv = _w(next(keys), (H, H))
        wqkv.append(jnp.concatenate([wq, wk, wv], axis=1))       # (H, 3H)
        bqkv.append(jnp.zeros((1, 3 * H), jnp.float32))          # bq scaled (zero)
        wo.append(_w(next(keys), (H, H)))
        bo.append(jnp.zeros((1, H), jnp.float32))
        ln1g.append(jnp.ones((1, H), jnp.float32))
        ln1b.append(jnp.zeros((1, H), jnp.float32))
        w1.append(_w(next(keys), (H, FFN)))
        b1.append(jnp.zeros((1, FFN), jnp.float32))
        w2.append(_w(next(keys), (FFN, H)))
        b2.append(jnp.zeros((1, H), jnp.float32))
        ln2g.append(jnp.ones((1, H), jnp.float32))
        ln2b.append(jnp.zeros((1, H), jnp.float32))
    p.update({
        'wqkv': jnp.stack(wqkv).astype(jnp.bfloat16),
        'bqkv': jnp.stack(bqkv),
        'wo': jnp.stack(wo).astype(jnp.bfloat16), 'bo': jnp.stack(bo),
        'ln1_g': jnp.stack(ln1g), 'ln1_b': jnp.stack(ln1b),
        'w1': jnp.stack(w1).astype(jnp.bfloat16), 'b1': jnp.stack(b1),
        'w2': jnp.stack(w2).astype(jnp.bfloat16), 'b2': jnp.stack(b2),
        'ln2_g': jnp.stack(ln2g), 'ln2_b': jnp.stack(ln2b),
    })
    p['gcn_w1'] = _w(next(keys), (FEAT, GHID)).astype(jnp.bfloat16)
    p['gcn_b1'] = jnp.zeros((1, GHID), jnp.float32)
    p['gcn_w2'] = _w(next(keys), (GHID, GHID)).astype(jnp.bfloat16)
    p['gcn_b2'] = jnp.zeros((1, GHID), jnp.float32)
    p['cls_wd'] = _w(next(keys), (H + GHID, CLS_HID)).astype(jnp.bfloat16)
    p['cls_bd'] = jnp.zeros((1, CLS_HID), jnp.float32)
    cls_wo = _w(next(keys), (CLS_HID, N_CLASSES))
    p['cls_wo'] = jnp.pad(cls_wo, ((0, 0), (0, LANE - N_CLASSES))
                          ).astype(jnp.bfloat16)                 # lane-pad
    p['cls_bo'] = jnp.zeros((1, LANE), jnp.float32)
    return p


# =========================== forward ========================================

def _block_diag(x):
    """(B, n, n) -> (B*n, B*n) block-diagonal."""
    b, n = x.shape[0], x.shape[1]
    eye = jnp.eye(b, dtype=x.dtype)
    return jnp.einsum('bij,bc->bicj', x, eye).reshape(b * n, b * n)


@jax.jit
def _forward_core(params, inputs_ids, attn_mask, position_idx,
                  adj, adj_mask, adj_feature):
    # glue / layout plumbing (jitted away into one executable)
    attn_bd = _block_diag(attn_mask.astype(jnp.float32))          # (BL, BL)
    adj_bd = _block_diag(adj.astype(jnp.float32)).astype(jnp.bfloat16)
    ids_col = inputs_ids.reshape(BL, 1).astype(jnp.int32)
    pos_col = position_idx.reshape(BL, 1).astype(jnp.int32)
    pos_row = position_idx.reshape(1, BL).astype(jnp.int32)
    feat = adj_feature.reshape(BN, FEAT).astype(jnp.bfloat16)
    amask = adj_mask.reshape(BN, 1).astype(jnp.float32)

    # single fused Pallas kernel: embeds + embed-mix + encoder + GCN + classifier
    logits_pad = pl.pallas_call(
        fused_forward_kernel,
        out_shape=jax.ShapeDtypeStruct((B, LANE), jnp.float32),
    )(ids_col, pos_col, pos_row, attn_bd,
      params['word_emb'], params['pos_emb'],
      params['emb_ln_g'], params['emb_ln_b'],
      params['wqkv'], params['bqkv'], params['wo'], params['bo'],
      params['ln1_g'], params['ln1_b'],
      params['w1'], params['b1'], params['w2'], params['b2'],
      params['ln2_g'], params['ln2_b'],
      feat, adj_bd, amask,
      params['gcn_w1'], params['gcn_b1'], params['gcn_w2'], params['gcn_b2'],
      params['cls_wd'], params['cls_bd'], params['cls_wo'], params['cls_bo'])

    return logits_pad[:, :N_CLASSES]


def graphcodebert_forward(params, inputs_ids, attn_mask, position_idx,
                          adj, adj_mask, adj_feature, labels=None):
    # TODO(synk): build_dfg/preprocess_adj/preprocess_features (tokenizer-driven
    # CPU graph construction) are replaced by precomputed adj/adj_mask/adj_feature.
    logits = _forward_core(params, inputs_ids, attn_mask, position_idx,
                           adj, adj_mask, adj_feature)
    prob = jax.nn.sigmoid(logits)

    if labels is not None:
        labels = labels.astype(jnp.float32)
        loss = (jnp.log(prob[:, 0] + 1e-10) * labels
                + jnp.log((1.0 - prob)[:, 0] + 1e-10) * (1.0 - labels))
        return -jnp.mean(loss), logits
    return prob


# =================================== main ==================================

if __name__ == "__main__":
    key = jax.random.PRNGKey(0)
    kp, ki, ka, kpos, kadj, kam, kaf = jax.random.split(key, 7)

    params = init_params(kp)
    inputs_ids = jax.random.randint(ki, (B, L), 0, VOCAB)
    position_idx = jax.random.randint(kpos, (B, L), 0, 4)
    attn_mask = (jax.random.uniform(ka, (B, L, L)) > 0.3).astype(jnp.float32)
    adj = jax.random.uniform(kadj, (B, N_NODES, N_NODES), dtype=jnp.float32)
    adj_mask = (jax.random.uniform(kam, (B, N_NODES, 1)) > 0.2).astype(jnp.float32)
    adj_feature = jax.random.normal(kaf, (B, N_NODES, FEAT), dtype=jnp.float32)

    prob = graphcodebert_forward(params, inputs_ids, attn_mask, position_idx,
                                 adj, adj_mask, adj_feature)
    jax.block_until_ready(prob)
    assert prob.shape == (B, N_CLASSES)
    print("KERNEL_OK")
</pallas_src>

<mosaic_0001>
module attributes {stable_mosaic.version = 11 : i64} {
  func.func @fused_forward_kernel(%arg0: memref<32x1xi32, #tpu.memory_space<vmem>>, %arg1: memref<32x1xi32, #tpu.memory_space<vmem>>, %arg2: memref<1x32xi32, #tpu.memory_space<vmem>>, %arg3: memref<32x32xf32, #tpu.memory_space<vmem>>, %arg4: memref<64x128xbf16, #tpu.memory_space<vmem>>, %arg5: memref<8x128xbf16, #tpu.memory_space<vmem>>, %arg6: memref<1x128xf32, #tpu.memory_space<vmem>>, %arg7: memref<1x128xf32, #tpu.memory_space<vmem>>, %arg8: memref<2x128x384xbf16, #tpu.memory_space<vmem>>, %arg9: memref<2x1x384xf32, #tpu.memory_space<vmem>>, %arg10: memref<2x128x128xbf16, #tpu.memory_space<vmem>>, %arg11: memref<2x1x128xf32, #tpu.memory_space<vmem>>, %arg12: memref<2x1x128xf32, #tpu.memory_space<vmem>>, %arg13: memref<2x1x128xf32, #tpu.memory_space<vmem>>, %arg14: memref<2x128x256xbf16, #tpu.memory_space<vmem>>, %arg15: memref<2x1x256xf32, #tpu.memory_space<vmem>>, %arg16: memref<2x256x128xbf16, #tpu.memory_space<vmem>>, %arg17: memref<2x1x128xf32, #tpu.memory_space<vmem>>, %arg18: memref<2x1x128xf32, #tpu.memory_space<vmem>>, %arg19: memref<2x1x128xf32, #tpu.memory_space<vmem>>, %arg20: memref<32x128xbf16, #tpu.memory_space<vmem>>, %arg21: memref<32x32xbf16, #tpu.memory_space<vmem>>, %arg22: memref<32x1xf32, #tpu.memory_space<vmem>>, %arg23: memref<128x128xbf16, #tpu.memory_space<vmem>>, %arg24: memref<1x128xf32, #tpu.memory_space<vmem>>, %arg25: memref<128x128xbf16, #tpu.memory_space<vmem>>, %arg26: memref<1x128xf32, #tpu.memory_space<vmem>>, %arg27: memref<256x128xbf16, #tpu.memory_space<vmem>>, %arg28: memref<1x128xf32, #tpu.memory_space<vmem>>, %arg29: memref<128x128xbf16, #tpu.memory_space<vmem>>, %arg30: memref<1x128xf32, #tpu.memory_space<vmem>>, %arg31: memref<2x128xf32, #tpu.memory_space<vmem>>) attributes {dimension_semantics = [], scalar_prefetch = 0 : i64, scratch_operands = 0 : i64, tpu.core_type = #tpu.core_type<tc>} {
    %c0 = arith.constant 0 : index
    %c0_0 = arith.constant 0 : index
    %0 = vector.load %arg0[%c0, %c0_0] : memref<32x1xi32, #tpu.memory_space<vmem>>, vector<32x1xi32>
    %c0_1 = arith.constant 0 : index
    %c0_2 = arith.constant 0 : index
    %1 = vector.load %arg1[%c0_1, %c0_2] : memref<32x1xi32, #tpu.memory_space<vmem>>, vector<32x1xi32>
    %c0_3 = arith.constant 0 : index
    %c0_4 = arith.constant 0 : index
    %2 = vector.load %arg2[%c0_3, %c0_4] : memref<1x32xi32, #tpu.memory_space<vmem>>, vector<1x32xi32>
    %c0_5 = arith.constant 0 : index
    %c0_6 = arith.constant 0 : index
    %3 = vector.load %arg3[%c0_5, %c0_6] : memref<32x32xf32, #tpu.memory_space<vmem>>, vector<32x32xf32>
    %4 = tpu.iota {dimensions = array<i32: 1>} : vector<32x64xi32>
    %5 = vector.broadcast %0 : vector<32x1xi32> to vector<32x64xi32>
    %6 = arith.cmpi eq, %4, %5 : vector<32x64xi32>
    %7 = arith.extui %6 : vector<32x64xi1> to vector<32x64xi32>
    %8 = arith.sitofp %7 : vector<32x64xi32> to vector<32x64xf32>
    %9 = arith.truncf %8 : vector<32x64xf32> to vector<32x64xbf16>
    %c0_7 = arith.constant 0 : index
    %c0_8 = arith.constant 0 : index
    %10 = vector.load %arg4[%c0_7, %c0_8] : memref<64x128xbf16, #tpu.memory_space<vmem>>, vector<64x128xbf16>
    %cst = arith.constant dense<0.000000e+00> : vector<32x128xf32>
    %11 = tpu.matmul %9, %10, %cst {dimension_numbers = #tpu.dot_dimension_numbers<[1], [0], [0], [1], [0, 0, 1, 1], [], []>} : vector<32x64xbf16>, vector<64x128xbf16>, vector<32x128xf32> -> vector<32x128xf32>
    %12 = tpu.iota {dimensions = array<i32: 1>} : vector<32x8xi32>
    %13 = vector.broadcast %1 : vector<32x1xi32> to vector<32x8xi32>
    %14 = arith.cmpi eq, %12, %13 : vector<32x8xi32>
    %15 = arith.extui %14 : vector<32x8xi1> to vector<32x8xi32>
    %16 = arith.sitofp %15 : vector<32x8xi32> to vector<32x8xf32>
    %17 = arith.truncf %16 : vector<32x8xf32> to vector<32x8xbf16>
    %c0_9 = arith.constant 0 : index
    %c0_10 = arith.constant 0 : index
    %18 = vector.load %arg5[%c0_9, %c0_10] : memref<8x128xbf16, #tpu.memory_space<vmem>>, vector<8x128xbf16>
    %cst_11 = arith.constant dense<0.000000e+00> : vector<32x128xf32>
    %19 = tpu.matmul %17, %18, %cst_11 {dimension_numbers = #tpu.dot_dimension_numbers<[1], [0], [0], [1], [0, 0, 1, 1], [], []>} : vector<32x8xbf16>, vector<8x128xbf16>, vector<32x128xf32> -> vector<32x128xf32>
    %c0_i32 = arith.constant 0 : i32
    %20 = vector.broadcast %c0_i32 : i32 to vector<32x1xi32>
    %21 = arith.cmpi eq, %1, %20 : vector<32x1xi32>
    %22 = arith.extui %21 : vector<32x1xi1> to vector<32x1xi32>
    %23 = arith.sitofp %22 : vector<32x1xi32> to vector<32x1xf32>
    %c2_i32 = arith.constant 2 : i32
    %24 = vector.broadcast %c2_i32 : i32 to vector<1x32xi32>
    %25 = arith.cmpi sge, %2, %24 : vector<1x32xi32>
    %26 = arith.extui %25 : vector<1x32xi1> to vector<1x32xi32>
    %27 = arith.sitofp %26 : vector<1x32xi32> to vector<1x32xf32>
    %28 = vector.broadcast %23 : vector<32x1xf32> to vector<32x32xf32>
    %29 = vector.broadcast %27 : vector<1x32xf32> to vector<32x32xf32>
    %30 = arith.mulf %28, %29 : vector<32x32xf32>
    %31 = arith.mulf %30, %3 : vector<32x32xf32>
    %cst_12 = arith.constant dense<0.000000e+00> : vector<32xf32>
    %32 = vector.multi_reduction <add>, %31, %cst_12 [1] : vector<32x32xf32> to vector<32xf32>
    %33 = vector.shape_cast %32 : vector<32xf32> to vector<32x1xf32>
    %cst_13 = arith.constant 1.000000e-10 : f32
    %34 = vector.broadcast %cst_13 : f32 to vector<32x1xf32>
    %35 = arith.addf %33, %34 : vector<32x1xf32>
    %36 = tpu.reciprocal %35 {approx = true} : vector<32x1xf32> -> vector<32x1xf32>
    %37 = vector.broadcast %36 : vector<32x1xf32> to vector<32x32xf32>
    %38 = arith.mulf %31, %37 : vector<32x32xf32>
    %39 = arith.truncf %38 : vector<32x32xf32> to vector<32x32xbf16>
    %40 = arith.truncf %11 : vector<32x128xf32> to vector<32x128xbf16>
    %cst_14 = arith.constant dense<0.000000e+00> : vector<32x128xf32>
    %41 = tpu.matmul %39, %40, %cst_14 {dimension_numbers = #tpu.dot_dimension_numbers<[1], [0], [0], [1], [0, 0, 1, 1], [], []>} : vector<32x32xbf16>, vector<32x128xbf16>, vector<32x128xf32> -> vector<32x128xf32>
    %cst_15 = arith.constant 1.000000e+00 : f32
    %42 = vector.broadcast %cst_15 : f32 to vector<32x1xf32>
    %43 = arith.subf %42, %23 : vector<32x1xf32>
    %44 = vector.broadcast %43 : vector<32x1xf32> to vector<32x128xf32>
    %45 = arith.mulf %11, %44 : vector<32x128xf32>
    %46 = vector.broadcast %23 : vector<32x1xf32> to vector<32x128xf32>
    %47 = arith.mulf %41, %46 : vector<32x128xf32>
    %48 = arith.addf %45, %47 : vector<32x128xf32>
    %49 = arith.addf %48, %19 : vector<32x128xf32>
    %c0_16 = arith.constant 0 : index
    %c0_17 = arith.constant 0 : index
    %50 = vector.load %arg6[%c0_16, %c0_17] : memref<1x128xf32, #tpu.memory_space<vmem>>, vector<1x128xf32>
    %c0_18 = arith.constant 0 : index
    %c0_19 = arith.constant 0 : index
    %51 = vector.load %arg7[%c0_18, %c0_19] : memref<1x128xf32, #tpu.memory_space<vmem>>, vector<1x128xf32>
    %cst_20 = arith.constant dense<0.000000e+00> : vector<32xf32>
    %52 = vector.multi_reduction <add>, %49, %cst_20 [1] : vector<32x128xf32> to vector<32xf32>
    %53 = vector.shape_cast %52 : vector<32xf32> to vector<32x1xf32>
    %cst_21 = arith.constant 1.280000e+02 : f32
    %54 = vector.broadcast %cst_21 : f32 to vector<32x1xf32>
    %55 = arith.divf %53, %54 : vector<32x1xf32>
    %56 = vector.broadcast %55 : vector<32x1xf32> to vector<32x128xf32>
    %57 = arith.subf %49, %56 : vector<32x128xf32>
    %58 = arith.mulf %57, %57 : vector<32x128xf32>
    %cst_22 = arith.constant dense<0.000000e+00> : vector<32xf32>
    %59 = vector.multi_reduction <add>, %58, %cst_22 [1] : vector<32x128xf32> to vector<32xf32>
    %60 = vector.shape_cast %59 : vector<32xf32> to vector<32x1xf32>
    %cst_23 = arith.constant 1.280000e+02 : f32
    %61 = vector.broadcast %cst_23 : f32 to vector<32x1xf32>
    %62 = arith.divf %60, %61 : vector<32x1xf32>
    %63 = vector.broadcast %55 : vector<32x1xf32> to vector<32x128xf32>
    %64 = arith.subf %49, %63 : vector<32x128xf32>
    %cst_24 = arith.constant 9.99999974E-6 : f32
    %65 = vector.broadcast %cst_24 : f32 to vector<32x1xf32>
    %66 = arith.addf %62, %65 : vector<32x1xf32>
    %67 = math.rsqrt %66 : vector<32x1xf32>
    %68 = vector.broadcast %67 : vector<32x1xf32> to vector<32x128xf32>
    %69 = arith.mulf %64, %68 : vector<32x128xf32>
    %70 = vector.broadcast %50 : vector<1x128xf32> to vector<32x128xf32>
    %71 = arith.mulf %69, %70 : vector<32x128xf32>
    %72 = vector.broadcast %51 : vector<1x128xf32> to vector<32x128xf32>
    %73 = arith.addf %71, %72 : vector<32x128xf32>
    %cst_25 = arith.constant 1.000000e+00 : f32
    %74 = vector.broadcast %cst_25 : f32 to vector<32x32xf32>
    %75 = arith.subf %74, %3 : vector<32x32xf32>
    %cst_26 = arith.constant -1.000000e+09 : f32
    %76 = vector.broadcast %cst_26 : f32 to vector<32x32xf32>
    %77 = arith.mulf %75, %76 : vector<32x32xf32>
    %78 = arith.truncf %73 : vector<32x128xf32> to vector<32x128xbf16>
    %c0_27 = arith.constant 0 : index
    %c0_28 = arith.constant 0 : index
    %c0_29 = arith.constant 0 : index
    %79 = vector.load %arg8[%c0_27, %c0_28, %c0_29] : memref<2x128x384xbf16, #tpu.memory_space<vmem>>, vector<1x128x384xbf16>
    %80 = vector.shape_cast %79 : vector<1x128x384xbf16> to vector<128x384xbf16>
    %cst_30 = arith.constant dense<0.000000e+00> : vector<32x384xf32>
    %81 = tpu.matmul %78, %80, %cst_30 {dimension_numbers = #tpu.dot_dimension_numbers<[1], [0], [0], [1], [0, 0, 1, 1], [], []>} : vector<32x128xbf16>, vector<128x384xbf16>, vector<32x384xf32> -> vector<32x384xf32>
    %c0_31 = arith.constant 0 : index
    %c0_32 = arith.constant 0 : index
    %c0_33 = arith.constant 0 : index
    %82 = vector.load %arg9[%c0_31, %c0_32, %c0_33] : memref<2x1x384xf32, #tpu.memory_space<vmem>>, vector<1x1x384xf32>
    %83 = vector.shape_cast %82 : vector<1x1x384xf32> to vector<1x384xf32>
    %84 = vector.broadcast %83 : vector<1x384xf32> to vector<32x384xf32>
    %85 = arith.addf %81, %84 : vector<32x384xf32>
    %86 = vector.extract_strided_slice %85 {offsets = [0, 0], sizes = [32, 128], strides = [1, 1]} : vector<32x384xf32> to vector<32x128xf32>
    %87 = arith.truncf %86 : vector<32x128xf32> to vector<32x128xbf16>
    %88 = vector.extract_strided_slice %85 {offsets = [0, 128], sizes = [32, 128], strides = [1, 1]} : vector<32x384xf32> to vector<32x128xf32>
    %89 = arith.truncf %88 : vector<32x128xf32> to vector<32x128xbf16>
    %90 = vector.extract_strided_slice %85 {offsets = [0, 256], sizes = [32, 128], strides = [1, 1]} : vector<32x384xf32> to vector<32x128xf32>
    %91 = arith.truncf %90 : vector<32x128xf32> to vector<32x128xbf16>
    %cst_34 = arith.constant dense<0.000000e+00> : vector<32x32xf32>
    %92 = tpu.matmul %87, %89, %cst_34 {dimension_numbers = #tpu.dot_dimension_numbers<[1], [1], [0], [0], [0, 0, 1, 0], [], []>} : vector<32x128xbf16>, vector<32x128xbf16>, vector<32x32xf32> -> vector<32x32xf32>
    %93 = arith.addf %92, %77 : vector<32x32xf32>
    %cst_35 = arith.constant dense<0xFF800000> : vector<32xf32>
    %94 = vector.multi_reduction <maximumf>, %93, %cst_35 [1] : vector<32x32xf32> to vector<32xf32>
    %95 = vector.shape_cast %94 : vector<32xf32> to vector<32x1xf32>
    %96 = vector.broadcast %95 : vector<32x1xf32> to vector<32x32xf32>
    %97 = arith.subf %93, %96 : vector<32x32xf32>
    %98 = math.exp %97 : vector<32x32xf32>
    %cst_36 = arith.constant dense<0.000000e+00> : vector<32xf32>
    %99 = vector.multi_reduction <add>, %98, %cst_36 [1] : vector<32x32xf32> to vector<32xf32>
    %100 = vector.shape_cast %99 : vector<32xf32> to vector<32x1xf32>
    %101 = tpu.reciprocal %100 {approx = true} : vector<32x1xf32> -> vector<32x1xf32>
    %102 = vector.broadcast %101 : vector<32x1xf32> to vector<32x32xf32>
    %103 = arith.mulf %98, %102 : vector<32x32xf32>
    %104 = arith.truncf %103 : vector<32x32xf32> to vector<32x32xbf16>
    %cst_37 = arith.constant dense<0.000000e+00> : vector<32x128xf32>
    %105 = tpu.matmul %104, %91, %cst_37 {dimension_numbers = #tpu.dot_dimension_numbers<[1], [0], [0], [1], [0, 0, 1, 1], [], []>} : vector<32x32xbf16>, vector<32x128xbf16>, vector<32x128xf32> -> vector<32x128xf32>
    %106 = arith.truncf %105 : vector<32x128xf32> to vector<32x128xbf16>
    %c0_38 = arith.constant 0 : index
    %c0_39 = arith.constant 0 : index
    %c0_40 = arith.constant 0 : index
    %107 = vector.load %arg10[%c0_38, %c0_39, %c0_40] : memref<2x128x128xbf16, #tpu.memory_space<vmem>>, vector<1x128x128xbf16>
    %108 = vector.shape_cast %107 : vector<1x128x128xbf16> to vector<128x128xbf16>
    %cst_41 = arith.constant dense<0.000000e+00> : vector<32x128xf32>
    %109 = tpu.matmul %106, %108, %cst_41 {dimension_numbers = #tpu.dot_dimension_numbers<[1], [0], [0], [1], [0, 0, 1, 1], [], []>} : vector<32x128xbf16>, vector<128x128xbf16>, vector<32x128xf32> -> vector<32x128xf32>
    %c0_42 = arith.constant 0 : index
    %c0_43 = arith.constant 0 : index
    %c0_44 = arith.constant 0 : index
    %110 = vector.load %arg11[%c0_42, %c0_43, %c0_44] : memref<2x1x128xf32, #tpu.memory_space<vmem>>, vector<1x1x128xf32>
    %111 = vector.shape_cast %110 : vector<1x1x128xf32> to vector<1x128xf32>
    %112 = vector.broadcast %111 : vector<1x128xf32> to vector<32x128xf32>
    %113 = arith.addf %109, %112 : vector<32x128xf32>
    %114 = arith.addf %73, %113 : vector<32x128xf32>
    %c0_45 = arith.constant 0 : index
    %c0_46 = arith.constant 0 : index
    %c0_47 = arith.constant 0 : index
    %115 = vector.load %arg12[%c0_45, %c0_46, %c0_47] : memref<2x1x128xf32, #tpu.memory_space<vmem>>, vector<1x1x128xf32>
    %116 = vector.shape_cast %115 : vector<1x1x128xf32> to vector<1x128xf32>
    %c0_48 = arith.constant 0 : index
    %c0_49 = arith.constant 0 : index
    %c0_50 = arith.constant 0 : index
    %117 = vector.load %arg13[%c0_48, %c0_49, %c0_50] : memref<2x1x128xf32, #tpu.memory_space<vmem>>, vector<1x1x128xf32>
    %118 = vector.shape_cast %117 : vector<1x1x128xf32> to vector<1x128xf32>
    %cst_51 = arith.constant dense<0.000000e+00> : vector<32xf32>
    %119 = vector.multi_reduction <add>, %114, %cst_51 [1] : vector<32x128xf32> to vector<32xf32>
    %120 = vector.shape_cast %119 : vector<32xf32> to vector<32x1xf32>
    %cst_52 = arith.constant 1.280000e+02 : f32
    %121 = vector.broadcast %cst_52 : f32 to vector<32x1xf32>
    %122 = arith.divf %120, %121 : vector<32x1xf32>
    %123 = vector.broadcast %122 : vector<32x1xf32> to vector<32x128xf32>
    %124 = arith.subf %114, %123 : vector<32x128xf32>
    %125 = arith.mulf %124, %124 : vector<32x128xf32>
    %cst_53 = arith.constant dense<0.000000e+00> : vector<32xf32>
    %126 = vector.multi_reduction <add>, %125, %cst_53 [1] : vector<32x128xf32> to vector<32xf32>
    %127 = vector.shape_cast %126 : vector<32xf32> to vector<32x1xf32>
    %cst_54 = arith.constant 1.280000e+02 : f32
    %128 = vector.broadcast %cst_54 : f32 to vector<32x1xf32>
    %129 = arith.divf %127, %128 : vector<32x1xf32>
    %130 = vector.broadcast %122 : vector<32x1xf32> to vector<32x128xf32>
    %131 = arith.subf %114, %130 : vector<32x128xf32>
    %cst_55 = arith.constant 9.99999974E-6 : f32
    %132 = vector.broadcast %cst_55 : f32 to vector<32x1xf32>
    %133 = arith.addf %129, %132 : vector<32x1xf32>
    %134 = math.rsqrt %133 : vector<32x1xf32>
    %135 = vector.broadcast %134 : vector<32x1xf32> to vector<32x128xf32>
    %136 = arith.mulf %131, %135 : vector<32x128xf32>
    %137 = vector.broadcast %116 : vector<1x128xf32> to vector<32x128xf32>
    %138 = arith.mulf %136, %137 : vector<32x128xf32>
    %139 = vector.broadcast %118 : vector<1x128xf32> to vector<32x128xf32>
    %140 = arith.addf %138, %139 : vector<32x128xf32>
    %141 = arith.truncf %140 : vector<32x128xf32> to vector<32x128xbf16>
    %c0_56 = arith.constant 0 : index
    %c0_57 = arith.constant 0 : index
    %c0_58 = arith.constant 0 : index
    %142 = vector.load %arg14[%c0_56, %c0_57, %c0_58] : memref<2x128x256xbf16, #tpu.memory_space<vmem>>, vector<1x128x256xbf16>
    %143 = vector.shape_cast %142 : vector<1x128x256xbf16> to vector<128x256xbf16>
    %cst_59 = arith.constant dense<0.000000e+00> : vector<32x256xf32>
    %144 = tpu.matmul %141, %143, %cst_59 {dimension_numbers = #tpu.dot_dimension_numbers<[1], [0], [0], [1], [0, 0, 1, 1], [], []>} : vector<32x128xbf16>, vector<128x256xbf16>, vector<32x256xf32> -> vector<32x256xf32>
    %c0_60 = arith.constant 0 : index
    %c0_61 = arith.constant 0 : index
    %c0_62 = arith.constant 0 : index
    %145 = vector.load %arg15[%c0_60, %c0_61, %c0_62] : memref<2x1x256xf32, #tpu.memory_space<vmem>>, vector<1x1x256xf32>
    %146 = vector.shape_cast %145 : vector<1x1x256xf32> to vector<1x256xf32>
    %147 = vector.broadcast %146 : vector<1x256xf32> to vector<32x256xf32>
    %148 = arith.addf %144, %147 : vector<32x256xf32>
    %149 = arith.mulf %148, %148 : vector<32x256xf32>
    %150 = arith.mulf %148, %149 : vector<32x256xf32>
    %cst_63 = arith.constant 4.471500e-02 : f32
    %151 = vector.broadcast %cst_63 : f32 to vector<32x256xf32>
    %152 = arith.mulf %151, %150 : vector<32x256xf32>
    %153 = arith.addf %148, %152 : vector<32x256xf32>
    %cst_64 = arith.constant 0.797884583 : f32
    %154 = vector.broadcast %cst_64 : f32 to vector<32x256xf32>
    %155 = arith.mulf %154, %153 : vector<32x256xf32>
    %156 = math.tanh %155 : vector<32x256xf32>
    %cst_65 = arith.constant 1.000000e+00 : f32
    %157 = vector.broadcast %cst_65 : f32 to vector<32x256xf32>
    %158 = arith.addf %157, %156 : vector<32x256xf32>
    %cst_66 = arith.constant 5.000000e-01 : f32
    %159 = vector.broadcast %cst_66 : f32 to vector<32x256xf32>
    %160 = arith.mulf %159, %158 : vector<32x256xf32>
    %161 = arith.mulf %148, %160 : vector<32x256xf32>
    %162 = arith.truncf %161 : vector<32x256xf32> to vector<32x256xbf16>
    %c0_67 = arith.constant 0 : index
    %c0_68 = arith.constant 0 : index
    %c0_69 = arith.constant 0 : index
    %163 = vector.load %arg16[%c0_67, %c0_68, %c0_69] : memref<2x256x128xbf16, #tpu.memory_space<vmem>>, vector<1x256x128xbf16>
    %164 = vector.shape_cast %163 : vector<1x256x128xbf16> to vector<256x128xbf16>
    %cst_70 = arith.constant dense<0.000000e+00> : vector<32x128xf32>
    %165 = tpu.matmul %162, %164, %cst_70 {dimension_numbers = #tpu.dot_dimension_numbers<[1], [0], [0], [1], [0, 0, 1, 1], [], []>} : vector<32x256xbf16>, vector<256x128xbf16>, vector<32x128xf32> -> vector<32x128xf32>
    %c0_71 = arith.constant 0 : index
    %c0_72 = arith.constant 0 : index
    %c0_73 = arith.constant 0 : index
    %166 = vector.load %arg17[%c0_71, %c0_72, %c0_73] : memref<2x1x128xf32, #tpu.memory_space<vmem>>, vector<1x1x128xf32>
    %167 = vector.shape_cast %166 : vector<1x1x128xf32> to vector<1x128xf32>
    %168 = vector.broadcast %167 : vector<1x128xf32> to vector<32x128xf32>
    %169 = arith.addf %165, %168 : vector<32x128xf32>
    %170 = arith.addf %140, %169 : vector<32x128xf32>
    %c0_74 = arith.constant 0 : index
    %c0_75 = arith.constant 0 : index
    %c0_76 = arith.constant 0 : index
    %171 = vector.load %arg18[%c0_74, %c0_75, %c0_76] : memref<2x1x128xf32, #tpu.memory_space<vmem>>, vector<1x1x128xf32>
    %172 = vector.shape_cast %171 : vector<1x1x128xf32> to vector<1x128xf32>
    %c0_77 = arith.constant 0 : index
    %c0_78 = arith.constant 0 : index
    %c0_79 = arith.constant 0 : index
    %173 = vector.load %arg19[%c0_77, %c0_78, %c0_79] : memref<2x1x128xf32, #tpu.memory_space<vmem>>, vector<1x1x128xf32>
    %174 = vector.shape_cast %173 : vector<1x1x128xf32> to vector<1x128xf32>
    %cst_80 = arith.constant dense<0.000000e+00> : vector<32xf32>
    %175 = vector.multi_reduction <add>, %170, %cst_80 [1] : vector<32x128xf32> to vector<32xf32>
    %176 = vector.shape_cast %175 : vector<32xf32> to vector<32x1xf32>
    %cst_81 = arith.constant 1.280000e+02 : f32
    %177 = vector.broadcast %cst_81 : f32 to vector<32x1xf32>
    %178 = arith.divf %176, %177 : vector<32x1xf32>
    %179 = vector.broadcast %178 : vector<32x1xf32> to vector<32x128xf32>
    %180 = arith.subf %170, %179 : vector<32x128xf32>
    %181 = arith.mulf %180, %180 : vector<32x128xf32>
    %cst_82 = arith.constant dense<0.000000e+00> : vector<32xf32>
    %182 = vector.multi_reduction <add>, %181, %cst_82 [1] : vector<32x128xf32> to vector<32xf32>
    %183 = vector.shape_cast %182 : vector<32xf32> to vector<32x1xf32>
    %cst_83 = arith.constant 1.280000e+02 : f32
    %184 = vector.broadcast %cst_83 : f32 to vector<32x1xf32>
    %185 = arith.divf %183, %184 : vector<32x1xf32>
    %186 = vector.broadcast %178 : vector<32x1xf32> to vector<32x128xf32>
    %187 = arith.subf %170, %186 : vector<32x128xf32>
    %cst_84 = arith.constant 9.99999974E-6 : f32
    %188 = vector.broadcast %cst_84 : f32 to vector<32x1xf32>
    %189 = arith.addf %185, %188 : vector<32x1xf32>
    %190 = math.rsqrt %189 : vector<32x1xf32>
    %191 = vector.broadcast %190 : vector<32x1xf32> to vector<32x128xf32>
    %192 = arith.mulf %187, %191 : vector<32x128xf32>
    %193 = vector.broadcast %172 : vector<1x128xf32> to vector<32x128xf32>
    %194 = arith.mulf %192, %193 : vector<32x128xf32>
    %195 = vector.broadcast %174 : vector<1x128xf32> to vector<32x128xf32>
    %196 = arith.addf %194, %195 : vector<32x128xf32>
    %197 = arith.truncf %196 : vector<32x128xf32> to vector<32x128xbf16>
    %c1 = arith.constant 1 : index
    %c0_85 = arith.constant 0 : index
    %c0_86 = arith.constant 0 : index
    %198 = vector.load %arg8[%c1, %c0_85, %c0_86] : memref<2x128x384xbf16, #tpu.memory_space<vmem>>, vector<1x128x384xbf16>
    %199 = vector.shape_cast %198 : vector<1x128x384xbf16> to vector<128x384xbf16>
    %cst_87 = arith.constant dense<0.000000e+00> : vector<32x384xf32>
    %200 = tpu.matmul %197, %199, %cst_87 {dimension_numbers = #tpu.dot_dimension_numbers<[1], [0], [0], [1], [0, 0, 1, 1], [], []>} : vector<32x128xbf16>, vector<128x384xbf16>, vector<32x384xf32> -> vector<32x384xf32>
    %c1_88 = arith.constant 1 : index
    %c0_89 = arith.constant 0 : index
    %c0_90 = arith.constant 0 : index
    %201 = vector.load %arg9[%c1_88, %c0_89, %c0_90] : memref<2x1x384xf32, #tpu.memory_space<vmem>>, vector<1x1x384xf32>
    %202 = vector.shape_cast %201 : vector<1x1x384xf32> to vector<1x384xf32>
    %203 = vector.broadcast %202 : vector<1x384xf32> to vector<32x384xf32>
    %204 = arith.addf %200, %203 : vector<32x384xf32>
    %205 = vector.extract_strided_slice %204 {offsets = [0, 0], sizes = [32, 128], strides = [1, 1]} : vector<32x384xf32> to vector<32x128xf32>
    %206 = arith.truncf %205 : vector<32x128xf32> to vector<32x128xbf16>
    %207 = vector.extract_strided_slice %204 {offsets = [0, 128], sizes = [32, 128], strides = [1, 1]} : vector<32x384xf32> to vector<32x128xf32>
    %208 = arith.truncf %207 : vector<32x128xf32> to vector<32x128xbf16>
    %209 = vector.extract_strided_slice %204 {offsets = [0, 256], sizes = [32, 128], strides = [1, 1]} : vector<32x384xf32> to vector<32x128xf32>
    %210 = arith.truncf %209 : vector<32x128xf32> to vector<32x128xbf16>
    %cst_91 = arith.constant dense<0.000000e+00> : vector<32x32xf32>
    %211 = tpu.matmul %206, %208, %cst_91 {dimension_numbers = #tpu.dot_dimension_numbers<[1], [1], [0], [0], [0, 0, 1, 0], [], []>} : vector<32x128xbf16>, vector<32x128xbf16>, vector<32x32xf32> -> vector<32x32xf32>
    %212 = arith.addf %211, %77 : vector<32x32xf32>
    %cst_92 = arith.constant dense<0xFF800000> : vector<32xf32>
    %213 = vector.multi_reduction <maximumf>, %212, %cst_92 [1] : vector<32x32xf32> to vector<32xf32>
    %214 = vector.shape_cast %213 : vector<32xf32> to vector<32x1xf32>
    %215 = vector.broadcast %214 : vector<32x1xf32> to vector<32x32xf32>
    %216 = arith.subf %212, %215 : vector<32x32xf32>
    %217 = math.exp %216 : vector<32x32xf32>
    %cst_93 = arith.constant dense<0.000000e+00> : vector<32xf32>
    %218 = vector.multi_reduction <add>, %217, %cst_93 [1] : vector<32x32xf32> to vector<32xf32>
    %219 = vector.shape_cast %218 : vector<32xf32> to vector<32x1xf32>
    %220 = tpu.reciprocal %219 {approx = true} : vector<32x1xf32> -> vector<32x1xf32>
    %221 = vector.broadcast %220 : vector<32x1xf32> to vector<32x32xf32>
    %222 = arith.mulf %217, %221 : vector<32x32xf32>
    %223 = arith.truncf %222 : vector<32x32xf32> to vector<32x32xbf16>
    %cst_94 = arith.constant dense<0.000000e+00> : vector<32x128xf32>
    %224 = tpu.matmul %223, %210, %cst_94 {dimension_numbers = #tpu.dot_dimension_numbers<[1], [0], [0], [1], [0, 0, 1, 1], [], []>} : vector<32x32xbf16>, vector<32x128xbf16>, vector<32x128xf32> -> vector<32x128xf32>
    %225 = arith.truncf %224 : vector<32x128xf32> to vector<32x128xbf16>
    %c1_95 = arith.constant 1 : index
    %c0_96 = arith.constant 0 : index
    %c0_97 = arith.constant 0 : index
    %226 = vector.load %arg10[%c1_95, %c0_96, %c0_97] : memref<2x128x128xbf16, #tpu.memory_space<vmem>>, vector<1x128x128xbf16>
    %227 = vector.shape_cast %226 : vector<1x128x128xbf16> to vector<128x128xbf16>
    %cst_98 = arith.constant dense<0.000000e+00> : vector<32x128xf32>
    %228 = tpu.matmul %225, %227, %cst_98 {dimension_numbers = #tpu.dot_dimension_numbers<[1], [0], [0], [1], [0, 0, 1, 1], [], []>} : vector<32x128xbf16>, vector<128x128xbf16>, vector<32x128xf32> -> vector<32x128xf32>
    %c1_99 = arith.constant 1 : index
    %c0_100 = arith.constant 0 : index
    %c0_101 = arith.constant 0 : index
    %229 = vector.load %arg11[%c1_99, %c0_100, %c0_101] : memref<2x1x128xf32, #tpu.memory_space<vmem>>, vector<1x1x128xf32>
    %230 = vector.shape_cast %229 : vector<1x1x128xf32> to vector<1x128xf32>
    %231 = vector.broadcast %230 : vector<1x128xf32> to vector<32x128xf32>
    %232 = arith.addf %228, %231 : vector<32x128xf32>
    %233 = arith.addf %196, %232 : vector<32x128xf32>
    %c1_102 = arith.constant 1 : index
    %c0_103 = arith.constant 0 : index
    %c0_104 = arith.constant 0 : index
    %234 = vector.load %arg12[%c1_102, %c0_103, %c0_104] : memref<2x1x128xf32, #tpu.memory_space<vmem>>, vector<1x1x128xf32>
    %235 = vector.shape_cast %234 : vector<1x1x128xf32> to vector<1x128xf32>
    %c1_105 = arith.constant 1 : index
    %c0_106 = arith.constant 0 : index
    %c0_107 = arith.constant 0 : index
    %236 = vector.load %arg13[%c1_105, %c0_106, %c0_107] : memref<2x1x128xf32, #tpu.memory_space<vmem>>, vector<1x1x128xf32>
    %237 = vector.shape_cast %236 : vector<1x1x128xf32> to vector<1x128xf32>
    %cst_108 = arith.constant dense<0.000000e+00> : vector<32xf32>
    %238 = vector.multi_reduction <add>, %233, %cst_108 [1] : vector<32x128xf32> to vector<32xf32>
    %239 = vector.shape_cast %238 : vector<32xf32> to vector<32x1xf32>
    %cst_109 = arith.constant 1.280000e+02 : f32
    %240 = vector.broadcast %cst_109 : f32 to vector<32x1xf32>
    %241 = arith.divf %239, %240 : vector<32x1xf32>
    %242 = vector.broadcast %241 : vector<32x1xf32> to vector<32x128xf32>
    %243 = arith.subf %233, %242 : vector<32x128xf32>
    %244 = arith.mulf %243, %243 : vector<32x128xf32>
    %cst_110 = arith.constant dense<0.000000e+00> : vector<32xf32>
    %245 = vector.multi_reduction <add>, %244, %cst_110 [1] : vector<32x128xf32> to vector<32xf32>
    %246 = vector.shape_cast %245 : vector<32xf32> to vector<32x1xf32>
    %cst_111 = arith.constant 1.280000e+02 : f32
    %247 = vector.broadcast %cst_111 : f32 to vector<32x1xf32>
    %248 = arith.divf %246, %247 : vector<32x1xf32>
    %249 = vector.broadcast %241 : vector<32x1xf32> to vector<32x128xf32>
    %250 = arith.subf %233, %249 : vector<32x128xf32>
    %cst_112 = arith.constant 9.99999974E-6 : f32
    %251 = vector.broadcast %cst_112 : f32 to vector<32x1xf32>
    %252 = arith.addf %248, %251 : vector<32x1xf32>
    %253 = math.rsqrt %252 : vector<32x1xf32>
    %254 = vector.broadcast %253 : vector<32x1xf32> to vector<32x128xf32>
    %255 = arith.mulf %250, %254 : vector<32x128xf32>
    %256 = vector.broadcast %235 : vector<1x128xf32> to vector<32x128xf32>
    %257 = arith.mulf %255, %256 : vector<32x128xf32>
    %258 = vector.broadcast %237 : vector<1x128xf32> to vector<32x128xf32>
    %259 = arith.addf %257, %258 : vector<32x128xf32>
    %260 = arith.truncf %259 : vector<32x128xf32> to vector<32x128xbf16>
    %c1_113 = arith.constant 1 : index
    %c0_114 = arith.constant 0 : index
    %c0_115 = arith.constant 0 : index
    %261 = vector.load %arg14[%c1_113, %c0_114, %c0_115] : memref<2x128x256xbf16, #tpu.memory_space<vmem>>, vector<1x128x256xbf16>
    %262 = vector.shape_cast %261 : vector<1x128x256xbf16> to vector<128x256xbf16>
    %cst_116 = arith.constant dense<0.000000e+00> : vector<32x256xf32>
    %263 = tpu.matmul %260, %262, %cst_116 {dimension_numbers = #tpu.dot_dimension_numbers<[1], [0], [0], [1], [0, 0, 1, 1], [], []>} : vector<32x128xbf16>, vector<128x256xbf16>, vector<32x256xf32> -> vector<32x256xf32>
    %c1_117 = arith.constant 1 : index
    %c0_118 = arith.constant 0 : index
    %c0_119 = arith.constant 0 : index
    %264 = vector.load %arg15[%c1_117, %c0_118, %c0_119] : memref<2x1x256xf32, #tpu.memory_space<vmem>>, vector<1x1x256xf32>
    %265 = vector.shape_cast %264 : vector<1x1x256xf32> to vector<1x256xf32>
    %266 = vector.broadcast %265 : vector<1x256xf32> to vector<32x256xf32>
    %267 = arith.addf %263, %266 : vector<32x256xf32>
    %268 = arith.mulf %267, %267 : vector<32x256xf32>
    %269 = arith.mulf %267, %268 : vector<32x256xf32>
    %cst_120 = arith.constant 4.471500e-02 : f32
    %270 = vector.broadcast %cst_120 : f32 to vector<32x256xf32>
    %271 = arith.mulf %270, %269 : vector<32x256xf32>
    %272 = arith.addf %267, %271 : vector<32x256xf32>
    %cst_121 = arith.constant 0.797884583 : f32
    %273 = vector.broadcast %cst_121 : f32 to vector<32x256xf32>
    %274 = arith.mulf %273, %272 : vector<32x256xf32>
    %275 = math.tanh %274 : vector<32x256xf32>
    %cst_122 = arith.constant 1.000000e+00 : f32
    %276 = vector.broadcast %cst_122 : f32 to vector<32x256xf32>
    %277 = arith.addf %276, %275 : vector<32x256xf32>
    %cst_123 = arith.constant 5.000000e-01 : f32
    %278 = vector.broadcast %cst_123 : f32 to vector<32x256xf32>
    %279 = arith.mulf %278, %277 : vector<32x256xf32>
    %280 = arith.mulf %267, %279 : vector<32x256xf32>
    %281 = arith.truncf %280 : vector<32x256xf32> to vector<32x256xbf16>
    %c1_124 = arith.constant 1 : index
    %c0_125 = arith.constant 0 : index
    %c0_126 = arith.constant 0 : index
    %282 = vector.load %arg16[%c1_124, %c0_125, %c0_126] : memref<2x256x128xbf16, #tpu.memory_space<vmem>>, vector<1x256x128xbf16>
    %283 = vector.shape_cast %282 : vector<1x256x128xbf16> to vector<256x128xbf16>
    %cst_127 = arith.constant dense<0.000000e+00> : vector<32x128xf32>
    %284 = tpu.matmul %281, %283, %cst_127 {dimension_numbers = #tpu.dot_dimension_numbers<[1], [0], [0], [1], [0, 0, 1, 1], [], []>} : vector<32x256xbf16>, vector<256x128xbf16>, vector<32x128xf32> -> vector<32x128xf32>
    %c1_128 = arith.constant 1 : index
    %c0_129 = arith.constant 0 : index
    %c0_130 = arith.constant 0 : index
    %285 = vector.load %arg17[%c1_128, %c0_129, %c0_130] : memref<2x1x128xf32, #tpu.memory_space<vmem>>, vector<1x1x128xf32>
    %286 = vector.shape_cast %285 : vector<1x1x128xf32> to vector<1x128xf32>
    %287 = vector.broadcast %286 : vector<1x128xf32> to vector<32x128xf32>
    %288 = arith.addf %284, %287 : vector<32x128xf32>
    %289 = arith.addf %259, %288 : vector<32x128xf32>
    %c1_131 = arith.constant 1 : index
    %c0_132 = arith.constant 0 : index
    %c0_133 = arith.constant 0 : index
    %290 = vector.load %arg18[%c1_131, %c0_132, %c0_133] : memref<2x1x128xf32, #tpu.memory_space<vmem>>, vector<1x1x128xf32>
    %291 = vector.shape_cast %290 : vector<1x1x128xf32> to vector<1x128xf32>
    %c1_134 = arith.constant 1 : index
    %c0_135 = arith.constant 0 : index
    %c0_136 = arith.constant 0 : index
    %292 = vector.load %arg19[%c1_134, %c0_135, %c0_136] : memref<2x1x128xf32, #tpu.memory_space<vmem>>, vector<1x1x128xf32>
    %293 = vector.shape_cast %292 : vector<1x1x128xf32> to vector<1x128xf32>
    %cst_137 = arith.constant dense<0.000000e+00> : vector<32xf32>
    %294 = vector.multi_reduction <add>, %289, %cst_137 [1] : vector<32x128xf32> to vector<32xf32>
    %295 = vector.shape_cast %294 : vector<32xf32> to vector<32x1xf32>
    %cst_138 = arith.constant 1.280000e+02 : f32
    %296 = vector.broadcast %cst_138 : f32 to vector<32x1xf32>
    %297 = arith.divf %295, %296 : vector<32x1xf32>
    %298 = vector.broadcast %297 : vector<32x1xf32> to vector<32x128xf32>
    %299 = arith.subf %289, %298 : vector<32x128xf32>
    %300 = arith.mulf %299, %299 : vector<32x128xf32>
    %cst_139 = arith.constant dense<0.000000e+00> : vector<32xf32>
    %301 = vector.multi_reduction <add>, %300, %cst_139 [1] : vector<32x128xf32> to vector<32xf32>
    %302 = vector.shape_cast %301 : vector<32xf32> to vector<32x1xf32>
    %cst_140 = arith.constant 1.280000e+02 : f32
    %303 = vector.broadcast %cst_140 : f32 to vector<32x1xf32>
    %304 = arith.divf %302, %303 : vector<32x1xf32>
    %305 = vector.broadcast %297 : vector<32x1xf32> to vector<32x128xf32>
    %306 = arith.subf %289, %305 : vector<32x128xf32>
    %cst_141 = arith.constant 9.99999974E-6 : f32
    %307 = vector.broadcast %cst_141 : f32 to vector<32x1xf32>
    %308 = arith.addf %304, %307 : vector<32x1xf32>
    %309 = math.rsqrt %308 : vector<32x1xf32>
    %310 = vector.broadcast %309 : vector<32x1xf32> to vector<32x128xf32>
    %311 = arith.mulf %306, %310 : vector<32x128xf32>
    %312 = vector.broadcast %291 : vector<1x128xf32> to vector<32x128xf32>
    %313 = arith.mulf %311, %312 : vector<32x128xf32>
    %314 = vector.broadcast %293 : vector<1x128xf32> to vector<32x128xf32>
    %315 = arith.addf %313, %314 : vector<32x128xf32>
    %316 = vector.extract_strided_slice %315 {offsets = [0, 0], sizes = [1, 128], strides = [1, 1]} : vector<32x128xf32> to vector<1x128xf32>
    %317 = vector.extract_strided_slice %315 {offsets = [16, 0], sizes = [1, 128], strides = [1, 1]} : vector<32x128xf32> to vector<1x128xf32>
    %318 = tpu.concatenate %316, %317 in 0 : vector<1x128xf32>, vector<1x128xf32> -> vector<2x128xf32>
    %c0_142 = arith.constant 0 : index
    %c0_143 = arith.constant 0 : index
    %319 = vector.load %arg20[%c0_142, %c0_143] : memref<32x128xbf16, #tpu.memory_space<vmem>>, vector<32x128xbf16>
    %c0_144 = arith.constant 0 : index
    %c0_145 = arith.constant 0 : index
    %320 = vector.load %arg21[%c0_144, %c0_145] : memref<32x32xbf16, #tpu.memory_space<vmem>>, vector<32x32xbf16>
    %c0_146 = arith.constant 0 : index
    %c0_147 = arith.constant 0 : index
    %321 = vector.load %arg23[%c0_146, %c0_147] : memref<128x128xbf16, #tpu.memory_space<vmem>>, vector<128x128xbf16>
    %cst_148 = arith.constant dense<0.000000e+00> : vector<32x128xf32>
    %322 = tpu.matmul %319, %321, %cst_148 {dimension_numbers = #tpu.dot_dimension_numbers<[1], [0], [0], [1], [0, 0, 1, 1], [], []>} : vector<32x128xbf16>, vector<128x128xbf16>, vector<32x128xf32> -> vector<32x128xf32>
    %323 = arith.truncf %322 : vector<32x128xf32> to vector<32x128xbf16>
    %cst_149 = arith.constant dense<0.000000e+00> : vector<32x128xf32>
    %324 = tpu.matmul %320, %323, %cst_149 {dimension_numbers = #tpu.dot_dimension_numbers<[1], [0], [0], [1], [0, 0, 1, 1], [], []>} : vector<32x32xbf16>, vector<32x128xbf16>, vector<32x128xf32> -> vector<32x128xf32>
    %c0_150 = arith.constant 0 : index
    %c0_151 = arith.constant 0 : index
    %325 = vector.load %arg24[%c0_150, %c0_151] : memref<1x128xf32, #tpu.memory_space<vmem>>, vector<1x128xf32>
    %326 = vector.broadcast %325 : vector<1x128xf32> to vector<32x128xf32>
    %327 = arith.addf %324, %326 : vector<32x128xf32>
    %cst_152 = arith.constant 0.000000e+00 : f32
    %328 = vector.broadcast %cst_152 : f32 to vector<32x128xf32>
    %329 = arith.maximumf %327, %328 : vector<32x128xf32>
    %330 = arith.truncf %329 : vector<32x128xf32> to vector<32x128xbf16>
    %c0_153 = arith.constant 0 : index
    %c0_154 = arith.constant 0 : index
    %331 = vector.load %arg25[%c0_153, %c0_154] : memref<128x128xbf16, #tpu.memory_space<vmem>>, vector<128x128xbf16>
    %cst_155 = arith.constant dense<0.000000e+00> : vector<32x128xf32>
    %332 = tpu.matmul %330, %331, %cst_155 {dimension_numbers = #tpu.dot_dimension_numbers<[1], [0], [0], [1], [0, 0, 1, 1], [], []>} : vector<32x128xbf16>, vector<128x128xbf16>, vector<32x128xf32> -> vector<32x128xf32>
    %333 = arith.truncf %332 : vector<32x128xf32> to vector<32x128xbf16>
    %cst_156 = arith.constant dense<0.000000e+00> : vector<32x128xf32>
    %334 = tpu.matmul %320, %333, %cst_156 {dimension_numbers = #tpu.dot_dimension_numbers<[1], [0], [0], [1], [0, 0, 1, 1], [], []>} : vector<32x32xbf16>, vector<32x128xbf16>, vector<32x128xf32> -> vector<32x128xf32>
    %c0_157 = arith.constant 0 : index
    %c0_158 = arith.constant 0 : index
    %335 = vector.load %arg26[%c0_157, %c0_158] : memref<1x128xf32, #tpu.memory_space<vmem>>, vector<1x128xf32>
    %336 = vector.broadcast %335 : vector<1x128xf32> to vector<32x128xf32>
    %337 = arith.addf %334, %336 : vector<32x128xf32>
    %cst_159 = arith.constant 0.000000e+00 : f32
    %338 = vector.broadcast %cst_159 : f32 to vector<32x128xf32>
    %339 = arith.maximumf %337, %338 : vector<32x128xf32>
    %c0_160 = arith.constant 0 : index
    %c0_161 = arith.constant 0 : index
    %340 = vector.load %arg22[%c0_160, %c0_161] : memref<32x1xf32, #tpu.memory_space<vmem>>, vector<32x1xf32>
    %341 = vector.broadcast %340 : vector<32x1xf32> to vector<32x128xf32>
    %342 = arith.mulf %339, %341 : vector<32x128xf32>
    %343 = vector.extract_strided_slice %342 {offsets = [0, 0], sizes = [16, 128], strides = [1, 1]} : vector<32x128xf32> to vector<16x128xf32>
    %cst_162 = arith.constant dense<0.000000e+00> : vector<128xf32>
    %344 = vector.multi_reduction <add>, %343, %cst_162 [0] : vector<16x128xf32> to vector<128xf32>
    %345 = vector.shape_cast %344 : vector<128xf32> to vector<1x128xf32>
    %346 = vector.extract_strided_slice %342 {offsets = [16, 0], sizes = [16, 128], strides = [1, 1]} : vector<32x128xf32> to vector<16x128xf32>
    %cst_163 = arith.constant dense<0.000000e+00> : vector<128xf32>
    %347 = vector.multi_reduction <add>, %346, %cst_163 [0] : vector<16x128xf32> to vector<128xf32>
    %348 = vector.shape_cast %347 : vector<128xf32> to vector<1x128xf32>
    %349 = tpu.concatenate %345, %348 in 0 : vector<1x128xf32>, vector<1x128xf32> -> vector<2x128xf32>
    %350 = tpu.concatenate %318, %349 in 1 : vector<2x128xf32>, vector<2x128xf32> -> vector<2x256xf32>
    %351 = arith.truncf %350 : vector<2x256xf32> to vector<2x256xbf16>
    %c0_164 = arith.constant 0 : index
    %c0_165 = arith.constant 0 : index
    %352 = vector.load %arg27[%c0_164, %c0_165] : memref<256x128xbf16, #tpu.memory_space<vmem>>, vector<256x128xbf16>
    %cst_166 = arith.constant dense<0.000000e+00> : vector<2x128xf32>
    %353 = tpu.matmul %351, %352, %cst_166 {dimension_numbers = #tpu.dot_dimension_numbers<[1], [0], [0], [1], [0, 0, 1, 1], [], []>} : vector<2x256xbf16>, vector<256x128xbf16>, vector<2x128xf32> -> vector<2x128xf32>
    %c0_167 = arith.constant 0 : index
    %c0_168 = arith.constant 0 : index
    %354 = vector.load %arg28[%c0_167, %c0_168] : memref<1x128xf32, #tpu.memory_space<vmem>>, vector<1x128xf32>
    %355 = vector.broadcast %354 : vector<1x128xf32> to vector<2x128xf32>
    %356 = arith.addf %353, %355 : vector<2x128xf32>
    %357 = math.tanh %356 : vector<2x128xf32>
    %358 = arith.truncf %357 : vector<2x128xf32> to vector<2x128xbf16>
    %c0_169 = arith.constant 0 : index
    %c0_170 = arith.constant 0 : index
    %359 = vector.load %arg29[%c0_169, %c0_170] : memref<128x128xbf16, #tpu.memory_space<vmem>>, vector<128x128xbf16>
    %cst_171 = arith.constant dense<0.000000e+00> : vector<2x128xf32>
    %360 = tpu.matmul %358, %359, %cst_171 {dimension_numbers = #tpu.dot_dimension_numbers<[1], [0], [0], [1], [0, 0, 1, 1], [], []>} : vector<2x128xbf16>, vector<128x128xbf16>, vector<2x128xf32> -> vector<2x128xf32>
    %c0_172 = arith.constant 0 : index
    %c0_173 = arith.constant 0 : index
    %361 = vector.load %arg30[%c0_172, %c0_173] : memref<1x128xf32, #tpu.memory_space<vmem>>, vector<1x128xf32>
    %362 = vector.broadcast %361 : vector<1x128xf32> to vector<2x128xf32>
    %363 = arith.addf %360, %362 : vector<2x128xf32>
    %c0_174 = arith.constant 0 : index
    %c0_175 = arith.constant 0 : index
    %364 = vector.load %arg31[%c0_174, %c0_175] : memref<2x128xf32, #tpu.memory_space<vmem>>, vector<2x128xf32>
    tpu.vector_store %arg31[%c0_174, %c0_175], %363 {strides = array<i32>} : memref<2x128xf32, #tpu.memory_space<vmem>>, vector<2x128xf32>,
    return
  }
}

</mosaic_0001>

<llo_original>
// kernel: _forward_core.1
$region0: #{_forward_core.1}
  #allocation0 [shape = 'u32[]', space=smem, size = 0x4, offset = 0x4, fixed_abs, tag = 'smem constant byte address 0x4 - core index']
  #allocation1 [shape = 'u32[144,128]{1,0:T(1,128)}', space=vmem, size = 0x12000, scoped, tag = 'internal scratch']
  %s0 = inlined_call_operand.smem [shape: u32[32], index: -1, kind: input, shape index: {}]
  %s1 = sld [smem:[%s0]]
  %s2 = scalar_lea.smem %s0, 1
  %s3 = sld [smem:[%s2]]
  %s4 = scalar_lea.smem %s0, 2
  %s5 = sld [smem:[%s4]]
  %s6 = scalar_lea.smem %s0, 3
  %s7 = sld [smem:[%s6]]
  %s8 = scalar_lea.smem %s0, 4
  %s9 = sld [smem:[%s8]]
  %s10 = scalar_lea.smem %s0, 5
  %s11 = sld [smem:[%s10]]
  %s12 = scalar_lea.smem %s0, 6
  %s13 = sld [smem:[%s12]]
  %s14 = scalar_lea.smem %s0, 7
  %s15 = sld [smem:[%s14]]
  %s16 = scalar_lea.smem %s0, 8
  %s17 = sld [smem:[%s16]]
  %s18 = scalar_lea.smem %s0, 9
  %s19 = sld [smem:[%s18]]
  %s20 = scalar_lea.smem %s0, 10
  %s21 = sld [smem:[%s20]]
  %s22 = scalar_lea.smem %s0, 11
  %s23 = sld [smem:[%s22]]
  %s24 = scalar_lea.smem %s0, 12
  %s25 = sld [smem:[%s24]]
  %s26 = scalar_lea.smem %s0, 13
  %s27 = sld [smem:[%s26]]
  %s28 = scalar_lea.smem %s0, 14
  %s29 = sld [smem:[%s28]]
  %s30 = scalar_lea.smem %s0, 15
  %s31 = sld [smem:[%s30]]
  %s32 = scalar_lea.smem %s0, 16
  %s33 = sld [smem:[%s32]]
  %s34 = scalar_lea.smem %s0, 17
  %s35 = sld [smem:[%s34]]
  %s36 = scalar_lea.smem %s0, 18
  %s37 = sld [smem:[%s36]]
  %s38 = scalar_lea.smem %s0, 19
  %s39 = sld [smem:[%s38]]
  %s40 = scalar_lea.smem %s0, 20
  %s41 = sld [smem:[%s40]]
  %s42 = scalar_lea.smem %s0, 21
  %s43 = sld [smem:[%s42]]
  %s44 = scalar_lea.smem %s0, 22
  %s45 = sld [smem:[%s44]]
  %s46 = scalar_lea.smem %s0, 23
  %s47 = sld [smem:[%s46]]
  %s48 = scalar_lea.smem %s0, 24
  %s49 = sld [smem:[%s48]]
  %s50 = scalar_lea.smem %s0, 25
  %s51 = sld [smem:[%s50]]
  %s52 = scalar_lea.smem %s0, 26
  %s53 = sld [smem:[%s52]]
  %s54 = scalar_lea.smem %s0, 27
  %s55 = sld [smem:[%s54]]
  %s56 = scalar_lea.smem %s0, 28
  %s57 = sld [smem:[%s56]]
  %s58 = scalar_lea.smem %s0, 29
  %s59 = sld [smem:[%s58]]
  %s60 = scalar_lea.smem %s0, 30
  %s61 = sld [smem:[%s60]]
  %s62 = scalar_lea.smem %s0, 31
  %s63 = sld [smem:[%s62]]
  %s64 = sld [smem:[#allocation0]]
  $region218: #{_forward_core.1} parent=0
    _
  %s66 = ssub.s32 1, %s64
  %s67 = scalar_select 0, %s66, %s64
  $region1: #{_forward_core.1} parent=0
    #allocation2 [shape = 'u8[16384]{0}', space=vmem, size = 0x4000, scoped, tag = 'input window, operand 4, single buffered']
    #allocation3 [shape = 's32[1]{0}', space=sflag, size = 0x4, scoped, tag = 'scoped memory for _forward_core.1']
    #allocation4 [shape = 's32[1]{0}', space=sflag, size = 0x4, scoped, tag = 'scoped memory for _forward_core.1']
    #allocation5 [shape = 'u8[2048]{0}', space=vmem, size = 0x800, scoped, tag = 'input window, operand 5, single buffered']
    #allocation6 [shape = 's32[1]{0}', space=sflag, size = 0x4, scoped, tag = 'scoped memory for _forward_core.1']
    #allocation7 [shape = 'u8[512]{0}', space=vmem, size = 0x400, scoped, tag = 'input window, operand 6, single buffered']
    #allocation8 [shape = 'u8[512]{0}', space=vmem, size = 0x400, scoped, tag = 'input window, operand 7, single buffered']
    #allocation9 [shape = 's32[1]{0}', space=sflag, size = 0x4, scoped, tag = 'scoped memory for _forward_core.1']
    #allocation10 [shape = 'u8[3072]{0}', space=vmem, size = 0xc00, scoped, tag = 'input window, operand 9, single buffered']
    #allocation11 [shape = 'u8[65536]{0}', space=vmem, size = 0x10000, scoped, tag = 'input window, operand 10, single buffered']
    #allocation12 [shape = 's32[1]{0}', space=sflag, size = 0x4, scoped, tag = 'scoped memory for _forward_core.1']
    #allocation13 [shape = 'u8[1024]{0}', space=vmem, size = 0x400, scoped, tag = 'input window, operand 12, single buffered']
    #allocation14 [shape = 'u8[1024]{0}', space=vmem, size = 0x400, scoped, tag = 'input window, operand 13, single buffered']
    #allocation15 [shape = 's32[1]{0}', space=sflag, size = 0x4, scoped, tag = 'scoped memory for _forward_core.1']
    #allocation16 [shape = 'u8[131072]{0}', space=vmem, size = 0x20000, scoped, tag = 'input window, operand 14, single buffered']
    #allocation17 [shape = 'u8[2048]{0}', space=vmem, size = 0x800, scoped, tag = 'input window, operand 15, single buffered']
    #allocation18 [shape = 's32[1]{0}', space=sflag, size = 0x4, scoped, tag = 'scoped memory for _forward_core.1']
    #allocation19 [shape = 'u8[131072]{0}', space=vmem, size = 0x20000, scoped, tag = 'input window, operand 16, single buffered']
    #allocation20 [shape = 'u8[1024]{0}', space=vmem, size = 0x400, scoped, tag = 'input window, operand 17, single buffered']
    #allocation21 [shape = 's32[1]{0}', space=sflag, size = 0x4, scoped, tag = 'scoped memory for _forward_core.1']
    #allocation22 [shape = 'u8[1024]{0}', space=vmem, size = 0x400, scoped, tag = 'input window, operand 18, single buffered']
    #allocation23 [shape = 'u8[1024]{0}', space=vmem, size = 0x400, scoped, tag = 'input window, operand 19, single buffered']
    #allocation24 [shape = 's32[1]{0}', space=sflag, size = 0x4, scoped, tag = 'scoped memory for _forward_core.1']
    #allocation25 [shape = 'u8[32768]{0}', space=vmem, size = 0x8000, scoped, tag = 'input window, operand 23, single buffered']
    #allocation26 [shape = 'u8[512]{0}', space=vmem, size = 0x400, scoped, tag = 'input window, operand 24, single buffered']
    #allocation27 [shape = 's32[1]{0}', space=sflag, size = 0x4, scoped, tag = 'scoped memory for _forward_core.1']
    #allocation28 [shape = 'u8[32768]{0}', space=vmem, size = 0x8000, scoped, tag = 'input window, operand 25, single buffered']
    #allocation29 [shape = 'u8[512]{0}', space=vmem, size = 0x400, scoped, tag = 'input window, operand 26, single buffered']
    #allocation30 [shape = 's32[1]{0}', space=sflag, size = 0x4, scoped, tag = 'scoped memory for _forward_core.1']
    #allocation31 [shape = 'u8[512]{0}', space=vmem, size = 0x400, scoped, tag = 'input window, operand 28, single buffered']
    #allocation32 [shape = 'u8[32768]{0}', space=vmem, size = 0x8000, scoped, tag = 'input window, operand 29, single buffered']
    #allocation33 [shape = 's32[1]{0}', space=sflag, size = 0x4, scoped, tag = 'scoped memory for _forward_core.1']
    #allocation34 [shape = 'u8[512]{0}', space=vmem, size = 0x400, scoped, tag = 'input window, operand 30, single buffered']
    #allocation35 [shape = 'u8[1024]{0}', space=vmem, size = 0x400, scoped, tag = 'output window, operand 0, single buffered']
    %68 = vsyncpa [#allocation3], 0
    %69 = vsyncpa [#allocation6], 0
    %70 = vsyncpa [#allocation9], 0
    %71 = vsyncpa [#allocation12], 0
    %72 = vsyncpa [#allocation15], 0
    %73 = vsyncpa [#allocation18], 0
    %74 = vsyncpa [#allocation21], 0
    %75 = vsyncpa [#allocation24], 0
    %76 = vsyncpa [#allocation27], 0
    %77 = vsyncpa [#allocation30], 0
    %78 = vsyncpa [#allocation33], 0
    %79 = vsyncpa [#allocation4], 0
    // Predicated region
    $region2: #{_forward_core.1} parent=1 // pred_check
      _
    $region3: #{_forward_core.1} parent=1 // pred_check_branch
      %81 = sbr.rel (0) target = $region5
    $region4: #{_forward_core.1} parent=1 // pred_region
      _
    $region5: #{_forward_core.1} parent=1 // pred_fallthru
      _
    // Predicated region
    $region6: #{_forward_core.1} parent=1 // pred_check
      _
    $region7: #{_forward_core.1} parent=1 // pred_check_branch
      %83 = sbr.rel (0) target = $region9
    $region8: #{_forward_core.1} parent=1 // pred_region
      _
    $region9: #{_forward_core.1} parent=1 // pred_fallthru
      _
    // Predicated region
    $region10: #{_forward_core.1} parent=1 // pred_check
      _
    $region11: #{_forward_core.1} parent=1 // pred_check_branch
      %85 = sbr.rel (0) target = $region13
    $region12: #{_forward_core.1} parent=1 // pred_region
      _
    $region13: #{_forward_core.1} parent=1 // pred_fallthru
      _
    // Predicated region
    $region14: #{_forward_core.1} parent=1 // pred_check
      _
    $region15: #{_forward_core.1} parent=1 // pred_check_branch
      %87 = sbr.rel (0) target = $region17
    $region16: #{_forward_core.1} parent=1 // pred_region
      _
    $region17: #{_forward_core.1} parent=1 // pred_fallthru
      _
    // Predicated region
    $region18: #{_forward_core.1} parent=1 // pred_check
      _
    $region19: #{_forward_core.1} parent=1 // pred_check_branch
      %89 = sbr.rel (0) target = $region21
    $region20: #{_forward_core.1} parent=1 // pred_region
      %s91 = ssub.s32 512, 512
      %92 = vsyncadd [#allocation3], %s91
      %s93 = sshll.u32 [#allocation2], 4
      %s94 = int_to_ptr.vmem [resolvable:$true] %s93
      %99 = dma.hbm_to_vmem [thread:$0]  %s9, 512, %s94, [#allocation3], 64, 64, 4
    $region21: #{_forward_core.1} parent=1 // pred_fallthru
      _
    // Predicated region
    $region22: #{_forward_core.1} parent=1 // pred_check
      _
    $region23: #{_forward_core.1} parent=1 // pred_check_branch
      %101 = sbr.rel (0) target = $region25
    $region24: #{_forward_core.1} parent=1 // pred_region
      %s103 = ssub.s32 64, 64
      %104 = vsyncadd [#allocation6], %s103
      %s106 = sshll.u32 [#allocation5], 4
      %s107 = int_to_ptr.vmem [resolvable:$true] %s106
      %109 = dma.hbm_to_vmem [thread:$0]  %s11, 64, %s107, [#allocation6]
    $region25: #{_forward_core.1} parent=1 // pred_fallthru
      _
    // Predicated region
    $region26: #{_forward_core.1} parent=1 // pred_check
      _
    $region27: #{_forward_core.1} parent=1 // pred_check_branch
      %111 = sbr.rel (0) target = $region29
    $region28: #{_forward_core.1} parent=1 // pred_region
      %s113 = ssub.s32 16, 16
      %114 = vsyncadd [#allocation6], %s113
      %s116 = sshll.u32 [#allocation7], 4
      %s117 = int_to_ptr.vmem [resolvable:$true] %s116
      %119 = dma.hbm_to_vmem [thread:$0]  %s13, 16, %s117, [#allocation6]
    $region29: #{_forward_core.1} parent=1 // pred_fallthru
      _
    // Predicated region
    $region30: #{_forward_core.1} parent=1 // pred_check
      _
    $region31: #{_forward_core.1} parent=1 // pred_check_branch
      %121 = sbr.rel (0) target = $region33
    $region32: #{_forward_core.1} parent=1 // pred_region
      %s123 = ssub.s32 16, 16
      %124 = vsyncadd [#allocation9], %s123
      %s126 = sshll.u32 [#allocation8], 4
      %s127 = int_to_ptr.vmem [resolvable:$true] %s126
      %129 = dma.hbm_to_vmem [thread:$0]  %s15, 16, %s127, [#allocation9]
    $region33: #{_forward_core.1} parent=1 // pred_fallthru
      _
    // Predicated region
    $region34: #{_forward_core.1} parent=1 // pred_check
      _
    $region35: #{_forward_core.1} parent=1 // pred_check_branch
      %131 = sbr.rel (0) target = $region37
    $region36: #{_forward_core.1} parent=1 // pred_region
      _
    $region37: #{_forward_core.1} parent=1 // pred_fallthru
      _
    // Predicated region
    $region38: #{_forward_core.1} parent=1 // pred_check
      _
    $region39: #{_forward_core.1} parent=1 // pred_check_branch
      %133 = sbr.rel (0) target = $region41
    $region40: #{_forward_core.1} parent=1 // pred_region
      %s135 = ssub.s32 96, 96
      %136 = vsyncadd [#allocation9], %s135
      %s137 = sshll.u32 [#allocation10], 4
      %s138 = int_to_ptr.vmem [resolvable:$true] %s137
      %143 = dma.hbm_to_vmem [thread:$0]  %s19, 96, %s138, [#allocation9], 48, 48, 3
    $region41: #{_forward_core.1} parent=1 // pred_fallthru
      _
    // Predicated region
    $region42: #{_forward_core.1} parent=1 // pred_check
      _
    $region43: #{_forward_core.1} parent=1 // pred_check_branch
      %145 = sbr.rel (0) target = $region45
    $region44: #{_forward_core.1} parent=1 // pred_region
      %s147 = ssub.s32 2048, 2048
      %148 = vsyncadd [#allocation12], %s147
      %s149 = sshll.u32 [#allocation11], 4
      %s150 = int_to_ptr.vmem [resolvable:$true] %s149
      %155 = dma.hbm_to_vmem [thread:$0]  %s21, 2048, %s150, [#allocation12], 64, 64, 4
    $region45: #{_forward_core.1} parent=1 // pred_fallthru
      _
    // Predicated region
    $region46: #{_forward_core.1} parent=1 // pred_check
      _
    $region47: #{_forward_core.1} parent=1 // pred_check_branch
      %157 = sbr.rel (0) target = $region49
    $region48: #{_forward_core.1} parent=1 // pred_region
      _
    $region49: #{_forward_core.1} parent=1 // pred_fallthru
      _
    // Predicated region
    $region50: #{_forward_core.1} parent=1 // pred_check
      _
    $region51: #{_forward_core.1} parent=1 // pred_check_branch
      %159 = sbr.rel (0) target = $region53
    $region52: #{_forward_core.1} parent=1 // pred_region
      %s161 = ssub.s32 32, 32
      %162 = vsyncadd [#allocation12], %s161
      %s163 = sshll.u32 [#allocation13], 4
      %s164 = int_to_ptr.vmem [resolvable:$true] %s163
      %169 = dma.hbm_to_vmem [thread:$0]  %s25, 32, %s164, [#allocation12], 16, 16, 1
    $region53: #{_forward_core.1} parent=1 // pred_fallthru
      _
    // Predicated region
    $region54: #{_forward_core.1} parent=1 // pred_check
      _
    $region55: #{_forward_core.1} parent=1 // pred_check_branch
      %171 = sbr.rel (0) target = $region57
    $region56: #{_forward_core.1} parent=1 // pred_region
      %s173 = ssub.s32 32, 32
      %174 = vsyncadd [#allocation15], %s173
      %s175 = sshll.u32 [#allocation14], 4
      %s176 = int_to_ptr.vmem [resolvable:$true] %s175
      %181 = dma.hbm_to_vmem [thread:$0]  %s27, 32, %s176, [#allocation15], 16, 16, 1
    $region57: #{_forward_core.1} parent=1 // pred_fallthru
      _
    // Predicated region
    $region58: #{_forward_core.1} parent=1 // pred_check
      _
    $region59: #{_forward_core.1} parent=1 // pred_check_branch
      %183 = sbr.rel (0) target = $region61
    $region60: #{_forward_core.1} parent=1 // pred_region
      %s185 = ssub.s32 4096, 4096
      %186 = vsyncadd [#allocation15], %s185
      %s187 = sshll.u32 [#allocation16], 4
      %s188 = int_to_ptr.vmem [resolvable:$true] %s187
      %193 = dma.hbm_to_vmem [thread:$0]  %s29, 4096, %s188, [#allocation15], 128, 128, 8
    $region61: #{_forward_core.1} parent=1 // pred_fallthru
      _
    // Predicated region
    $region62: #{_forward_core.1} parent=1 // pred_check
      _
    $region63: #{_forward_core.1} parent=1 // pred_check_branch
      %195 = sbr.rel (0) target = $region65
    $region64: #{_forward_core.1} parent=1 // pred_region
      %s197 = ssub.s32 64, 64
      %198 = vsyncadd [#allocation18], %s197
      %s199 = sshll.u32 [#allocation17], 4
      %s200 = int_to_ptr.vmem [resolvable:$true] %s199
      %205 = dma.hbm_to_vmem [thread:$0]  %s31, 64, %s200, [#allocation18], 32, 32, 2
    $region65: #{_forward_core.1} parent=1 // pred_fallthru
      _
    // Predicated region
    $region66: #{_forward_core.1} parent=1 // pred_check
      _
    $region67: #{_forward_core.1} parent=1 // pred_check_branch
      %207 = sbr.rel (0) target = $region69
    $region68: #{_forward_core.1} parent=1 // pred_region
      %s209 = ssub.s32 4096, 4096
      %210 = vsyncadd [#allocation18], %s209
      %s211 = sshll.u32 [#allocation19], 4
      %s212 = int_to_ptr.vmem [resolvable:$true] %s211
      %217 = dma.hbm_to_vmem [thread:$0]  %s33, 4096, %s212, [#allocation18], 64, 64, 4
    $region69: #{_forward_core.1} parent=1 // pred_fallthru
      _
    // Predicated region
    $region70: #{_forward_core.1} parent=1 // pred_check
      _
    $region71: #{_forward_core.1} parent=1 // pred_check_branch
      %219 = sbr.rel (0) target = $region73
    $region72: #{_forward_core.1} parent=1 // pred_region
      %s221 = ssub.s32 32, 32
      %222 = vsyncadd [#allocation21], %s221
      %s223 = sshll.u32 [#allocation20], 4
      %s224 = int_to_ptr.vmem [resolvable:$true] %s223
      %229 = dma.hbm_to_vmem [thread:$0]  %s35, 32, %s224, [#allocation21], 16, 16, 1
    $region73: #{_forward_core.1} parent=1 // pred_fallthru
      _
    // Predicated region
    $region74: #{_forward_core.1} parent=1 // pred_check
      _
    $region75: #{_forward_core.1} parent=1 // pred_check_branch
      %231 = sbr.rel (0) target = $region77
    $region76: #{_forward_core.1} parent=1 // pred_region
      %s233 = ssub.s32 32, 32
      %234 = vsyncadd [#allocation21], %s233
      %s235 = sshll.u32 [#allocation22], 4
      %s236 = int_to_ptr.vmem [resolvable:$true] %s235
      %241 = dma.hbm_to_vmem [thread:$0]  %s37, 32, %s236, [#allocation21], 16, 16, 1
    $region77: #{_forward_core.1} parent=1 // pred_fallthru
      _
    // Predicated region
    $region78: #{_forward_core.1} parent=1 // pred_check
      _
    $region79: #{_forward_core.1} parent=1 // pred_check_branch
      %243 = sbr.rel (0) target = $region81
    $region80: #{_forward_core.1} parent=1 // pred_region
      %s245 = ssub.s32 32, 32
      %246 = vsyncadd [#allocation24], %s245
      %s247 = sshll.u32 [#allocation23], 4
      %s248 = int_to_ptr.vmem [resolvable:$true] %s247
      %253 = dma.hbm_to_vmem [thread:$0]  %s39, 32, %s248, [#allocation24], 16, 16, 1
    $region81: #{_forward_core.1} parent=1 // pred_fallthru
      _
    // Predicated region
    $region82: #{_forward_core.1} parent=1 // pred_check
      _
    $region83: #{_forward_core.1} parent=1 // pred_check_branch
      %255 = sbr.rel (0) target = $region85
    $region84: #{_forward_core.1} parent=1 // pred_region
      _
    $region85: #{_forward_core.1} parent=1 // pred_fallthru
      _
    // Predicated region
    $region86: #{_forward_core.1} parent=1 // pred_check
      _
    $region87: #{_forward_core.1} parent=1 // pred_check_branch
      %257 = sbr.rel (0) target = $region89
    $region88: #{_forward_core.1} parent=1 // pred_region
      _
    $region89: #{_forward_core.1} parent=1 // pred_fallthru
      _
    // Predicated region
    $region90: #{_forward_core.1} parent=1 // pred_check
      _
    $region91: #{_forward_core.1} parent=1 // pred_check_branch
      %259 = sbr.rel (0) target = $region93
    $region92: #{_forward_core.1} parent=1 // pred_region
      _
    $region93: #{_forward_core.1} parent=1 // pred_fallthru
      _
    // Predicated region
    $region94: #{_forward_core.1} parent=1 // pred_check
      _
    $region95: #{_forward_core.1} parent=1 // pred_check_branch
      %261 = sbr.rel (0) target = $region97
    $region96: #{_forward_core.1} parent=1 // pred_region
      %s263 = ssub.s32 1024, 1024
      %264 = vsyncadd [#allocation24], %s263
      %s265 = sshll.u32 [#allocation25], 4
      %s266 = int_to_ptr.vmem [resolvable:$true] %s265
      %271 = dma.hbm_to_vmem [thread:$0]  %s47, 1024, %s266, [#allocation24], 64, 64, 4
    $region97: #{_forward_core.1} parent=1 // pred_fallthru
      _
    // Predicated region
    $region98: #{_forward_core.1} parent=1 // pred_check
      _
    $region99: #{_forward_core.1} parent=1 // pred_check_branch
      %273 = sbr.rel (0) target = $region101
    $region100: #{_forward_core.1} parent=1 // pred_region
      %s275 = ssub.s32 16, 16
      %276 = vsyncadd [#allocation27], %s275
      %s278 = sshll.u32 [#allocation26], 4
      %s279 = int_to_ptr.vmem [resolvable:$true] %s278
      %281 = dma.hbm_to_vmem [thread:$0]  %s49, 16, %s279, [#allocation27]
    $region101: #{_forward_core.1} parent=1 // pred_fallthru
      _
    // Predicated region
    $region102: #{_forward_core.1} parent=1 // pred_check
      _
    $region103: #{_forward_core.1} parent=1 // pred_check_branch
      %283 = sbr.rel (0) target = $region105
    $region104: #{_forward_core.1} parent=1 // pred_region
      %s285 = ssub.s32 1024, 1024
      %286 = vsyncadd [#allocation27], %s285
      %s287 = sshll.u32 [#allocation28], 4
      %s288 = int_to_ptr.vmem [resolvable:$true] %s287
      %293 = dma.hbm_to_vmem [thread:$0]  %s51, 1024, %s288, [#allocation27], 64, 64, 4
    $region105: #{_forward_core.1} parent=1 // pred_fallthru
      _
    // Predicated region
    $region106: #{_forward_core.1} parent=1 // pred_check
      _
    $region107: #{_forward_core.1} parent=1 // pred_check_branch
      %295 = sbr.rel (0) target = $region109
    $region108: #{_forward_core.1} parent=1 // pred_region
      %s297 = ssub.s32 16, 16
      %298 = vsyncadd [#allocation30], %s297
      %s300 = sshll.u32 [#allocation29], 4
      %s301 = int_to_ptr.vmem [resolvable:$true] %s300
      %303 = dma.hbm_to_vmem [thread:$0]  %s53, 16, %s301, [#allocation30]
    $region109: #{_forward_core.1} parent=1 // pred_fallthru
      _
    // Predicated region
    $region110: #{_forward_core.1} parent=1 // pred_check
      _
    $region111: #{_forward_core.1} parent=1 // pred_check_branch
      %305 = sbr.rel (0) target = $region113
    $region112: #{_forward_core.1} parent=1 // pred_region
      _
    $region113: #{_forward_core.1} parent=1 // pred_fallthru
      _
    // Predicated region
    $region114: #{_forward_core.1} parent=1 // pred_check
      _
    $region115: #{_forward_core.1} parent=1 // pred_check_branch
      %307 = sbr.rel (0) target = $region117
    $region116: #{_forward_core.1} parent=1 // pred_region
      %s309 = ssub.s32 16, 16
      %310 = vsyncadd [#allocation30], %s309
      %s312 = sshll.u32 [#allocation31], 4
      %s313 = int_to_ptr.vmem [resolvable:$true] %s312
      %315 = dma.hbm_to_vmem [thread:$0]  %s57, 16, %s313, [#allocation30]
    $region117: #{_forward_core.1} parent=1 // pred_fallthru
      _
    // Predicated region
    $region118: #{_forward_core.1} parent=1 // pred_check
      _
    $region119: #{_forward_core.1} parent=1 // pred_check_branch
      %317 = sbr.rel (0) target = $region121
    $region120: #{_forward_core.1} parent=1 // pred_region
      %s319 = ssub.s32 1024, 1024
      %320 = vsyncadd [#allocation33], %s319
      %s321 = sshll.u32 [#allocation32], 4
      %s322 = int_to_ptr.vmem [resolvable:$true] %s321
      %327 = dma.hbm_to_vmem [thread:$0]  %s59, 1024, %s322, [#allocation33], 64, 64, 4
    $region121: #{_forward_core.1} parent=1 // pred_fallthru
      _
    // Predicated region
    $region122: #{_forward_core.1} parent=1 // pred_check
      _
    $region123: #{_forward_core.1} parent=1 // pred_check_branch
      %329 = sbr.rel (0) target = $region125
    $region124: #{_forward_core.1} parent=1 // pred_region
      %s331 = ssub.s32 16, 16
      %332 = vsyncadd [#allocation33], %s331
      %s334 = sshll.u32 [#allocation34], 4
      %s335 = int_to_ptr.vmem [resolvable:$true] %s334
      %337 = dma.hbm_to_vmem [thread:$0]  %s61, 16, %s335, [#allocation33]
    $region125: #{_forward_core.1} parent=1 // pred_fallthru
      _
    // Predicated region
    $region126: #{_forward_core.1} parent=1 // pred_check
      _
    $region127: #{_forward_core.1} parent=1 // pred_check_branch
      %339 = sbr.rel (0) target = $region129
    $region128: #{_forward_core.1} parent=1 // pred_region
      %340 = dma.done [#allocation3], 512
    $region129: #{_forward_core.1} parent=1 // pred_fallthru
      _
    // Predicated region
    $region130: #{_forward_core.1} parent=1 // pred_check
      _
    $region131: #{_forward_core.1} parent=1 // pred_check_branch
      %342 = sbr.rel (0) target = $region133
    $region132: #{_forward_core.1} parent=1 // pred_region
      %343 = dma.done [#allocation6], 64
    $region133: #{_forward_core.1} parent=1 // pred_fallthru
      _
    // Predicated region
    $region134: #{_forward_core.1} parent=1 // pred_check
      _
    $region135: #{_forward_core.1} parent=1 // pred_check_branch
      %345 = sbr.rel (0) target = $region137
    $region136: #{_forward_core.1} parent=1 // pred_region
      %346 = dma.done [#allocation6], 16
    $region137: #{_forward_core.1} parent=1 // pred_fallthru
      _
    // Predicated region
    $region138: #{_forward_core.1} parent=1 // pred_check
      _
    $region139: #{_forward_core.1} parent=1 // pred_check_branch
      %348 = sbr.rel (0) target = $region141
    $region140: #{_forward_core.1} parent=1 // pred_region
      %349 = dma.done [#allocation9], 16
    $region141: #{_forward_core.1} parent=1 // pred_fallthru
      _
    // Predicated region
    $region142: #{_forward_core.1} parent=1 // pred_check
      _
    $region143: #{_forward_core.1} parent=1 // pred_check_branch
      %351 = sbr.rel (0) target = $region145
    $region144: #{_forward_core.1} parent=1 // pred_region
      %352 = dma.done [#allocation9], 96
    $region145: #{_forward_core.1} parent=1 // pred_fallthru
      _
    // Predicated region
    $region146: #{_forward_core.1} parent=1 // pred_check
      _
    $region147: #{_forward_core.1} parent=1 // pred_check_branch
      %354 = sbr.rel (0) target = $region149
    $region148: #{_forward_core.1} parent=1 // pred_region
      %355 = dma.done [#allocation12], 2048
    $region149: #{_forward_core.1} parent=1 // pred_fallthru
      _
    // Predicated region
    $region150: #{_forward_core.1} parent=1 // pred_check
      _
    $region151: #{_forward_core.1} parent=1 // pred_check_branch
      %357 = sbr.rel (0) target = $region153
    $region152: #{_forward_core.1} parent=1 // pred_region
      %358 = dma.done [#allocation12], 32
    $region153: #{_forward_core.1} parent=1 // pred_fallthru
      _
    // Predicated region
    $region154: #{_forward_core.1} parent=1 // pred_check
      _
    $region155: #{_forward_core.1} parent=1 // pred_check_branch
      %360 = sbr.rel (0) target = $region157
    $region156: #{_forward_core.1} parent=1 // pred_region
      %361 = dma.done [#allocation15], 32
    $region157: #{_forward_core.1} parent=1 // pred_fallthru
      _
    // Predicated region
    $region158: #{_forward_core.1} parent=1 // pred_check
      _
    $region159: #{_forward_core.1} parent=1 // pred_check_branch
      %363 = sbr.rel (0) target = $region161
    $region160: #{_forward_core.1} parent=1 // pred_region
      %364 = dma.done [#allocation15], 4096
    $region161: #{_forward_core.1} parent=1 // pred_fallthru
      _
    // Predicated region
    $region162: #{_forward_core.1} parent=1 // pred_check
      _
    $region163: #{_forward_core.1} parent=1 // pred_check_branch
      %366 = sbr.rel (0) target = $region165
    $region164: #{_forward_core.1} parent=1 // pred_region
      %367 = dma.done [#allocation18], 64
    $region165: #{_forward_core.1} parent=1 // pred_fallthru
      _
    // Predicated region
    $region166: #{_forward_core.1} parent=1 // pred_check
      _
    $region167: #{_forward_core.1} parent=1 // pred_check_branch
      %369 = sbr.rel (0) target = $region169
    $region168: #{_forward_core.1} parent=1 // pred_region
      %370 = dma.done [#allocation18], 4096
    $region169: #{_forward_core.1} parent=1 // pred_fallthru
      _
    // Predicated region
    $region170: #{_forward_core.1} parent=1 // pred_check
      _
    $region171: #{_forward_core.1} parent=1 // pred_check_branch
      %372 = sbr.rel (0) target = $region173
    $region172: #{_forward_core.1} parent=1 // pred_region
      %373 = dma.done [#allocation21], 32
    $region173: #{_forward_core.1} parent=1 // pred_fallthru
      _
    // Predicated region
    $region174: #{_forward_core.1} parent=1 // pred_check
      _
    $region175: #{_forward_core.1} parent=1 // pred_check_branch
      %375 = sbr.rel (0) target = $region177
    $region176: #{_forward_core.1} parent=1 // pred_region
      %376 = dma.done [#allocation21], 32
    $region177: #{_forward_core.1} parent=1 // pred_fallthru
      _
    // Predicated region
    $region178: #{_forward_core.1} parent=1 // pred_check
      _
    $region179: #{_forward_core.1} parent=1 // pred_check_branch
      %378 = sbr.rel (0) target = $region181
    $region180: #{_forward_core.1} parent=1 // pred_region
      %379 = dma.done [#allocation24], 32
    $region181: #{_forward_core.1} parent=1 // pred_fallthru
      _
    // Predicated region
    $region182: #{_forward_core.1} parent=1 // pred_check
      _
    $region183: #{_forward_core.1} parent=1 // pred_check_branch
      %381 = sbr.rel (0) target = $region185
    $region184: #{_forward_core.1} parent=1 // pred_region
      %382 = dma.done [#allocation24], 1024
    $region185: #{_forward_core.1} parent=1 // pred_fallthru
      _
    // Predicated region
    $region186: #{_forward_core.1} parent=1 // pred_check
      _
    $region187: #{_forward_core.1} parent=1 // pred_check_branch
      %384 = sbr.rel (0) target = $region189
    $region188: #{_forward_core.1} parent=1 // pred_region
      %385 = dma.done [#allocation27], 16
    $region189: #{_forward_core.1} parent=1 // pred_fallthru
      _
    // Predicated region
    $region190: #{_forward_core.1} parent=1 // pred_check
      _
    $region191: #{_forward_core.1} parent=1 // pred_check_branch
      %387 = sbr.rel (0) target = $region193
    $region192: #{_forward_core.1} parent=1 // pred_region
      %388 = dma.done [#allocation27], 1024
    $region193: #{_forward_core.1} parent=1 // pred_fallthru
      _
    // Predicated region
    $region194: #{_forward_core.1} parent=1 // pred_check
      _
    $region195: #{_forward_core.1} parent=1 // pred_check_branch
      %390 = sbr.rel (0) target = $region197
    $region196: #{_forward_core.1} parent=1 // pred_region
      %391 = dma.done [#allocation30], 16
    $region197: #{_forward_core.1} parent=1 // pred_fallthru
      _
    // Predicated region
    $region198: #{_forward_core.1} parent=1 // pred_check
      _
    $region199: #{_forward_core.1} parent=1 // pred_check_branch
      %393 = sbr.rel (0) target = $region201
    $region200: #{_forward_core.1} parent=1 // pred_region
      %394 = dma.done [#allocation30], 16
    $region201: #{_forward_core.1} parent=1 // pred_fallthru
      _
    // Predicated region
    $region202: #{_forward_core.1} parent=1 // pred_check
      _
    $region203: #{_forward_core.1} parent=1 // pred_check_branch
      %396 = sbr.rel (0) target = $region205
    $region204: #{_forward_core.1} parent=1 // pred_region
      %397 = dma.done [#allocation33], 1024
    $region205: #{_forward_core.1} parent=1 // pred_fallthru
      _
    // Predicated region
    $region206: #{_forward_core.1} parent=1 // pred_check
      _
    $region207: #{_forward_core.1} parent=1 // pred_check_branch
      %399 = sbr.rel (0) target = $region209
    $region208: #{_forward_core.1} parent=1 // pred_region
      %400 = dma.done [#allocation33], 16
    $region209: #{_forward_core.1} parent=1 // pred_fallthru
      _
    %v402 = vld [vmem:[%s1] sm:$0xff]
    %v403 = vld [vmem:[%s1 + $0x8] sm:$0xff]
    %v404 = vld [vmem:[%s1 + $0x10] sm:$0xff]
    %v405 = vld [vmem:[%s1 + $0x18] sm:$0xff]
    %v406 = vld [vmem:[%s3] sm:$0xff]
    %v407 = vld [vmem:[%s3 + $0x8] sm:$0xff]
    %v408 = vld [vmem:[%s3 + $0x10] sm:$0xff]
    %v409 = vld [vmem:[%s3 + $0x18] sm:$0xff]
    %v410 = vld [vmem:[%s5] sm:$0x1]
    %v411 = vld [vmem:[%s7] sm:$0xff]
    %v412 = vld [vmem:[%s7 + $0x8] sm:$0xff]
    %v413 = vld [vmem:[%s7 + $0x10] sm:$0xff]
    %v414 = vld [vmem:[%s7 + $0x18] sm:$0xff]
    %v415 = vlaneseq
    %v416 = vand.u32 %v415, 127
    %417 = vset.pattern.permute.xlu0 0
    %418 = vperm.xlu0 %417, %v402
    %v419 = vpop.permute.xlu0 %418
    %420 = vset.pattern.permute.xlu0 0
    %421 = vperm.xlu0 %420, %v403
    %v422 = vpop.permute.xlu0 %421
    %423 = vset.pattern.permute.xlu0 0
    %424 = vperm.xlu0 %423, %v404
    %v425 = vpop.permute.xlu0 %424
    %426 = vset.pattern.permute.xlu0 0
    %427 = vperm.xlu0 %426, %v405
    %v428 = vpop.permute.xlu0 %427
    %vm429 = vcmp.eq.s32.totalorder %v416, %v419
    %vm430 = vcmp.eq.s32.totalorder %v416, %v422
    %vm431 = vcmp.eq.s32.totalorder %v416, %v425
    %vm432 = vcmp.eq.s32.totalorder %v416, %v428
    %v433 = vsel %vm429, 1, 0
    %v434 = vsel %vm430, 1, 0
    %v435 = vsel %vm431, 1, 0
    %v436 = vsel %vm432, 1, 0
    %v437 = vcvt.s32.f32 %v433
    %v438 = vcvt.s32.f32 %v434
    %v439 = vcvt.s32.f32 %v435
    %v440 = vcvt.s32.f32 %v436
    %v441 = vpack.c.bf16 %v438, %v437
    %v442 = vpack.c.bf16 %v440, %v439
    %v443 = vld [vmem:[#allocation2] sm:$0xf]
    %v444 = vld [vmem:[#allocation2 + $0x4] sm:$0xf]
    %v445 = vld [vmem:[#allocation2 + $0x8] sm:$0xf]
    %v446 = vld [vmem:[#allocation2 + $0xc] sm:$0xf]
    %v447 = vld [vmem:[#allocation2 + $0x10] sm:$0xf]
    %v448 = vld [vmem:[#allocation2 + $0x14] sm:$0xf]
    %v449 = vld [vmem:[#allocation2 + $0x18] sm:$0xf]
    %v450 = vld [vmem:[#allocation2 + $0x1c] sm:$0xf]
    %v459 = vunpack.c.l.b16 %v443
    %v460 = vunpack.c.l.b16 %v444
    %v461 = vunpack.c.l.b16 %v445
    %v462 = vunpack.c.l.b16 %v446
    %v463 = vunpack.c.l.b16 %v447
    %v464 = vunpack.c.l.b16 %v448
    %v465 = vunpack.c.l.b16 %v449
    %v466 = vunpack.c.l.b16 %v450
    %v467 = vpack.c.b16 %v460, %v459
    %v468 = vpack.c.b16 %v462, %v461
    %v469 = vpack.c.b16 %v464, %v463
    %v470 = vpack.c.b16 %v466, %v465
    %vm475 = vcmask 523264
    %v477 = vsel %vm475, %v441, 0
    %v480 = vsel %vm475, %v442, 0
    %482 = vmatprep.subr.bf16.mxu0 0
    %483 = vmatpush1.bf16.msra.mxu0 %v467
    %484 = vmatprep.subr.bf16.mxu0 0
    %485 = vmatpush1.bf16.msra.mxu0 %v468
    %486 = vmatprep.subr.bf16.mxu0 0
    %487 = vmatpush1.bf16.msra.mxu0 %v469
    %488 = vmatprep.subr.bf16.mxu0 0
    %489 = vmatpush1.bf16.msra.mxu0 %v470
    %490 = vmatprep.subr.bf16.mxu0 0
    %491 = vmatpush1.bf16.msra.mxu0 0
    %492 = vmatprep.subr.bf16.mxu0 0
    %493 = vmatpush1.bf16.msra.mxu0 0
    %494 = vmatprep.subr.bf16.mxu0 0
    %495 = vmatpush1.bf16.msra.mxu0 0
    %496 = vmatprep.subr.bf16.mxu0 0
    %497 = vmatpush1.bf16.msra.mxu0 0
    %498 = vmatprep.subr.bf16.mxu0 0
    %499 = vmatpush1.bf16.msra.mxu0 0
    %500 = vmatprep.subr.bf16.mxu0 0
    %501 = vmatpush1.bf16.msra.mxu0 0
    %502 = vmatprep.subr.bf16.mxu0 0
    %503 = vmatpush1.bf16.msra.mxu0 0
    %504 = vmatprep.subr.bf16.mxu0 0
    %505 = vmatpush1.bf16.msra.mxu0 0
    %506 = vmatprep.subr.bf16.mxu0 0
    %507 = vmatpush1.bf16.msra.mxu0 0
    %508 = vmatprep.subr.bf16.mxu0 0
    %509 = vmatpush1.bf16.msra.mxu0 0
    %510 = vmatprep.subr.bf16.mxu0 0
    %511 = vmatpush1.bf16.msra.mxu0 0
    %512 = vmatprep.subr.bf16.mxu0 0
    %513 = vmatpush1.bf16.msra.mxu0 0
    %514 = vmatprep.mubr.bf16.mxu0 0
    %515 = vmatmul.mubr.bf16.gmra.mrb[0].mxu0 %v477
    %v516 = vpop.f32.mrb[0].mxu0
    %v517 = vadd.f32 0.0, %v516
    %v518 = vpop.f32.mrb[0].mxu0
    %v519 = vpop.f32.mrb[0].mxu0
    %v520 = vadd.f32 0.0, %v519
    %v521 = vpop.f32.mrb[0].mxu0
    %522 = vmatprep.mubr.bf16.mxu0 0
    %523 = vmatmul.mubr.bf16.gmra.mrb[0].mxu0 %v480
    %v524 = vpop.f32.mrb[0].mxu0
    %v525 = vadd.f32 0.0, %v524
    %v526 = vpop.f32.mrb[0].mxu0
    %v527 = vpop.f32.mrb[0].mxu0
    %v528 = vadd.f32 0.0, %v527
    %v529 = vpop.f32.mrb[0].mxu0
    %530 = vdwg.mxu0
    %531 = vset.pattern.permute.xlu0 0
    %532 = vperm.xlu0 %531, %v406
    %v533 = vpop.permute.xlu0 %532
    %534 = vset.pattern.permute.xlu0 0
    %535 = vperm.xlu0 %534, %v407
    %v536 = vpop.permute.xlu0 %535
    %537 = vset.pattern.permute.xlu0 0
    %538 = vperm.xlu0 %537, %v408
    %v539 = vpop.permute.xlu0 %538
    %540 = vset.pattern.permute.xlu0 0
    %541 = vperm.xlu0 %540, %v409
    %v542 = vpop.permute.xlu0 %541
    %vm543 = vcmp.eq.s32.totalorder %v416, %v533
    %vm544 = vcmp.eq.s32.totalorder %v416, %v536
    %vm545 = vcmp.eq.s32.totalorder %v416, %v539
    %vm546 = vcmp.eq.s32.totalorder %v416, %v542
    %v547 = vsel %vm543, 1, 0
    %v548 = vsel %vm544, 1, 0
    %v549 = vsel %vm545, 1, 0
    %v550 = vsel %vm546, 1, 0
    %v551 = vcvt.s32.f32 %v547
    %v552 = vcvt.s32.f32 %v548
    %v553 = vcvt.s32.f32 %v549
    %v554 = vcvt.s32.f32 %v550
    %v555 = vpack.c.bf16 %v552, %v551
    %v556 = vpack.c.bf16 %v554, %v553
    %v557 = vld [vmem:[#allocation5] sm:$0xf]
    %vm558 = vcmask 64512
    %v560 = vsel %vm558, %v555, 0
    %v563 = vsel %vm558, %v556, 0
    %vm565 = vcmask 1043456
    %v567 = vsel %vm565, %v557, 0
    %569 = vmatprep.subr.bf16.mxu0 0
    %570 = vmatpush1.bf16.msra.mxu0 %v567
    %571 = vmatprep.subr.bf16.mxu0 0
    %572 = vmatpush1.bf16.msra.mxu0 0
    %573 = vmatprep.subr.bf16.mxu0 0
    %574 = vmatpush1.bf16.msra.mxu0 0
    %575 = vmatprep.subr.bf16.mxu0 0
    %576 = vmatpush1.bf16.msra.mxu0 0
    %577 = vmatprep.subr.bf16.mxu0 0
    %578 = vmatpush1.bf16.msra.mxu0 0
    %579 = vmatprep.subr.bf16.mxu0 0
    %580 = vmatpush1.bf16.msra.mxu0 0
    %581 = vmatprep.subr.bf16.mxu0 0
    %582 = vmatpush1.bf16.msra.mxu0 0
    %583 = vmatprep.subr.bf16.mxu0 0
    %584 = vmatpush1.bf16.msra.mxu0 0
    %585 = vmatprep.subr.bf16.mxu0 0
    %586 = vmatpush1.bf16.msra.mxu0 0
    %587 = vmatprep.subr.bf16.mxu0 0
    %588 = vmatpush1.bf16.msra.mxu0 0
    %589 = vmatprep.subr.bf16.mxu0 0
    %590 = vmatpush1.bf16.msra.mxu0 0
    %591 = vmatprep.subr.bf16.mxu0 0
    %592 = vmatpush1.bf16.msra.mxu0 0
    %593 = vmatprep.subr.bf16.mxu0 0
    %594 = vmatpush1.bf16.msra.mxu0 0
    %595 = vmatprep.subr.bf16.mxu0 0
    %596 = vmatpush1.bf16.msra.mxu0 0
    %597 = vmatprep.subr.bf16.mxu0 0
    %598 = vmatpush1.bf16.msra.mxu0 0
    %599 = vmatprep.subr.bf16.mxu0 0
    %600 = vmatpush1.bf16.msra.mxu0 0
    %601 = vmatprep.mubr.bf16.mxu0 0
    %602 = vmatmul.mubr.bf16.gmra.mrb[0].mxu0 %v560
    %v603 = vpop.f32.mrb[0].mxu0
    %v604 = vadd.f32 0.0, %v603
    %v605 = vpop.f32.mrb[0].mxu0
    %v606 = vpop.f32.mrb[0].mxu0
    %v607 = vadd.f32 0.0, %v606
    %v608 = vpop.f32.mrb[0].mxu0
    %609 = vmatprep.mubr.bf16.mxu0 0
    %610 = vmatmul.mubr.bf16.gmra.mrb[0].mxu0 %v563
    %v611 = vpop.f32.mrb[0].mxu0
    %v612 = vadd.f32 0.0, %v611
    %v613 = vpop.f32.mrb[0].mxu0
    %v614 = vpop.f32.mrb[0].mxu0
    %v615 = vadd.f32 0.0, %v614
    %v616 = vpop.f32.mrb[0].mxu0
    %617 = vdwg.mxu0
    %vm618 = vcmp.eq.s32.totalorder %v406, 0
    %vm619 = vcmp.eq.s32.totalorder %v407, 0
    %vm620 = vcmp.eq.s32.totalorder %v408, 0
    %vm621 = vcmp.eq.s32.totalorder %v409, 0
    %v622 = vsel %vm618, 1, 0
    %v623 = vsel %vm619, 1, 0
    %v624 = vsel %vm620, 1, 0
    %v625 = vsel %vm621, 1, 0
    %v626 = vcvt.s32.f32 %v622
    %v627 = vcvt.s32.f32 %v623
    %v628 = vcvt.s32.f32 %v624
    %v629 = vcvt.s32.f32 %v625
    %vm630 = vcmp.ge.s32.totalorder %v410, 2
    %v631 = vsel %vm630, 1, 0
    %v632 = vcvt.s32.f32 %v631
    %634 = vset.pattern.permute.xlu0 0
    %635 = vperm.xlu0 %634, %v626
    %v636 = vpop.permute.xlu0 %635
    %639 = vset.pattern.permute.xlu0 0
    %640 = vperm.xlu0 %639, %v627
    %v641 = vpop.permute.xlu0 %640
    %644 = vset.pattern.permute.xlu0 0
    %645 = vperm.xlu0 %644, %v628
    %v646 = vpop.permute.xlu0 %645
    %649 = vset.pattern.permute.xlu0 0
    %650 = vperm.xlu0 %649, %v629
    %v651 = vpop.permute.xlu0 %650
    %v654 = vlaneseq
    %v655 = vshrl.u32 %v654, 7
    %v656 = vsub.s32 0, %v655
    %v657 = vrot.slane %v632, %v656
    %v659 = vmul.f32 %v636, %v657
    %v660 = vmul.f32 %v641, %v657
    %v661 = vmul.f32 %v646, %v657
    %v662 = vmul.f32 %v651, %v657
    %v663 = vmul.f32 %v659, %v411
    %v664 = vmul.f32 %v660, %v412
    %v665 = vmul.f32 %v661, %v413
    %v666 = vmul.f32 %v662, %v414
    %vm667 = vcmask 261120
    %v668 = vsel %vm667, %v663, 0.0
    %669 = vadd.xlane.f32.xlu0 %v668
    %v670 = vpop.xlane.xlu0 %669
    %v671 = vsel %vm667, %v664, 0.0
    %672 = vadd.xlane.f32.xlu0 %v671
    %v673 = vpop.xlane.xlu0 %672
    %v674 = vsel %vm667, %v665, 0.0
    %675 = vadd.xlane.f32.xlu0 %v674
    %v676 = vpop.xlane.xlu0 %675
    %v677 = vsel %vm667, %v666, 0.0
    %678 = vadd.xlane.f32.xlu0 %v677
    %v679 = vpop.xlane.xlu0 %678
    %v680 = vadd.f32 %v670, 1e-10
    %v681 = vadd.f32 %v673, 1e-10
    %v682 = vadd.f32 %v676, 1e-10
    %v683 = vadd.f32 %v679, 1e-10
    %v684 = vrcp.pop %v680
    %v685 = vrcp.pop %v681
    %v686 = vrcp.pop %v682
    %v687 = vrcp.pop %v683
    %v688 = vmul.f32 %v663, %v684
    %v689 = vmul.f32 %v664, %v685
    %v690 = vmul.f32 %v665, %v686
    %v691 = vmul.f32 %v666, %v687
    %v692 = vpack.c.bf16 %v689, %v688
    %v693 = vpack.c.bf16 %v691, %v690
    %v694 = vpack.c.bf16 %v520, %v517
    %v695 = vpack.c.bf16 %v528, %v525
    %v697 = vsel %vm667, %v692, 0
    %v700 = vsel %vm667, %v693, 0
    %702 = vmatprep.subr.bf16.mxu0 0
    %703 = vmatpush1.bf16.msra.mxu0 %v694
    %704 = vmatprep.subr.bf16.mxu0 0
    %705 = vmatpush1.bf16.msra.mxu0 %v695
    %706 = vmatprep.subr.bf16.mxu0 0
    %707 = vmatpush1.bf16.msra.mxu0 0
    %708 = vmatprep.subr.bf16.mxu0 0
    %709 = vmatpush1.bf16.msra.mxu0 0
    %710 = vmatprep.subr.bf16.mxu0 0
    %711 = vmatpush1.bf16.msra.mxu0 0
    %712 = vmatprep.subr.bf16.mxu0 0
    %713 = vmatpush1.bf16.msra.mxu0 0
    %714 = vmatprep.subr.bf16.mxu0 0
    %715 = vmatpush1.bf16.msra.mxu0 0
    %716 = vmatprep.subr.bf16.mxu0 0
    %717 = vmatpush1.bf16.msra.mxu0 0
    %718 = vmatprep.subr.bf16.mxu0 0
    %719 = vmatpush1.bf16.msra.mxu0 0
    %720 = vmatprep.subr.bf16.mxu0 0
    %721 = vmatpush1.bf16.msra.mxu0 0
    %722 = vmatprep.subr.bf16.mxu0 0
    %723 = vmatpush1.bf16.msra.mxu0 0
    %724 = vmatprep.subr.bf16.mxu0 0
    %725 = vmatpush1.bf16.msra.mxu0 0
    %726 = vmatprep.subr.bf16.mxu0 0
    %727 = vmatpush1.bf16.msra.mxu0 0
    %728 = vmatprep.subr.bf16.mxu0 0
    %729 = vmatpush1.bf16.msra.mxu0 0
    %730 = vmatprep.subr.bf16.mxu0 0
    %731 = vmatpush1.bf16.msra.mxu0 0
    %732 = vmatprep.subr.bf16.mxu0 0
    %733 = vmatpush1.bf16.msra.mxu0 0
    %734 = vmatprep.mubr.bf16.mxu0 0
    %735 = vmatmul.mubr.bf16.gmra.mrb[0].mxu0 %v697
    %v736 = vpop.f32.mrb[0].mxu0
    %v737 = vadd.f32 0.0, %v736
    %v738 = vpop.f32.mrb[0].mxu0
    %v739 = vpop.f32.mrb[0].mxu0
    %v740 = vadd.f32 0.0, %v739
    %v741 = vpop.f32.mrb[0].mxu0
    %742 = vmatprep.mubr.bf16.mxu0 0
    %743 = vmatmul.mubr.bf16.gmra.mrb[0].mxu0 %v700
    %v744 = vpop.f32.mrb[0].mxu0
    %v745 = vadd.f32 0.0, %v744
    %v746 = vpop.f32.mrb[0].mxu0
    %v747 = vpop.f32.mrb[0].mxu0
    %v748 = vadd.f32 0.0, %v747
    %v749 = vpop.f32.mrb[0].mxu0
    %750 = vdwg.mxu0
    %v751 = vsub.f32 1.0, %v626
    %v752 = vsub.f32 1.0, %v627
    %v753 = vsub.f32 1.0, %v628
    %v754 = vsub.f32 1.0, %v629
    %756 = vset.pattern.permute.xlu0 0
    %757 = vperm.xlu0 %756, %v751
    %v758 = vpop.permute.xlu0 %757
    %761 = vset.pattern.permute.xlu0 0
    %762 = vperm.xlu0 %761, %v752
    %v763 = vpop.permute.xlu0 %762
    %766 = vset.pattern.permute.xlu0 0
    %767 = vperm.xlu0 %766, %v753
    %v768 = vpop.permute.xlu0 %767
    %771 = vset.pattern.permute.xlu0 0
    %772 = vperm.xlu0 %771, %v754
    %v773 = vpop.permute.xlu0 %772
    %v775 = vmul.f32 %v517, %v758
    %v776 = vmul.f32 %v520, %v763
    %v777 = vmul.f32 %v525, %v768
    %v778 = vmul.f32 %v528, %v773
    %v779 = vmul.f32 %v737, %v636
    %v780 = vmul.f32 %v740, %v641
    %v781 = vmul.f32 %v745, %v646
    %v782 = vmul.f32 %v748, %v651
    %v783 = vadd.f32 %v775, %v779
    %v784 = vadd.f32 %v776, %v780
    %v785 = vadd.f32 %v777, %v781
    %v786 = vadd.f32 %v778, %v782
    %v787 = vadd.f32 %v783, %v604
    %v788 = vadd.f32 %v784, %v607
    %v789 = vadd.f32 %v785, %v612
    %v790 = vadd.f32 %v786, %v615
    %v791 = vld [vmem:[#allocation7] sm:$0x1]
    %v792 = vld [vmem:[#allocation8] sm:$0x1]
    %793 = vadd.xlane.f32.xlu0 %v787
    %v794 = vpop.xlane.xlu0 %793
    %795 = vadd.xlane.f32.xlu0 %v788
    %v796 = vpop.xlane.xlu0 %795
    %797 = vadd.xlane.f32.xlu0 %v789
    %v798 = vpop.xlane.xlu0 %797
    %799 = vadd.xlane.f32.xlu0 %v790
    %v800 = vpop.xlane.xlu0 %799
    %v801 = vrcp.pop 128.0
    %v802 = vmul.f32 %v794, %v801
    %v803 = vmul.f32 %v796, %v801
    %v804 = vmul.f32 %v798, %v801
    %v805 = vmul.f32 %v800, %v801
    %v806 = vsub.f32 %v787, %v802
    %v807 = vsub.f32 %v788, %v803
    %v808 = vsub.f32 %v789, %v804
    %v809 = vsub.f32 %v790, %v805
    %v810 = vmul.f32 %v806, %v806
    %v811 = vmul.f32 %v807, %v807
    %v812 = vmul.f32 %v808, %v808
    %v813 = vmul.f32 %v809, %v809
    %814 = vadd.xlane.f32.xlu0 %v810
    %v815 = vpop.xlane.xlu0 %814
    %816 = vadd.xlane.f32.xlu0 %v811
    %v817 = vpop.xlane.xlu0 %816
    %818 = vadd.xlane.f32.xlu0 %v812
    %v819 = vpop.xlane.xlu0 %818
    %820 = vadd.xlane.f32.xlu0 %v813
    %v821 = vpop.xlane.xlu0 %820
    %v822 = vmul.f32 %v815, %v801
    %v823 = vmul.f32 %v817, %v801
    %v824 = vmul.f32 %v819, %v801
    %v825 = vmul.f32 %v821, %v801
    %v826 = vadd.f32 %v822, 1e-05
    %v827 = vadd.f32 %v823, 1e-05
    %v828 = vadd.f32 %v824, 1e-05
    %v829 = vadd.f32 %v825, 1e-05
    %v830 = vrsqrt.pop %v826
    %v831 = vrsqrt.pop %v827
    %v832 = vrsqrt.pop %v828
    %v833 = vrsqrt.pop %v829
    %v834 = vmul.f32 %v806, %v830
    %v835 = vmul.f32 %v807, %v831
    %v836 = vmul.f32 %v808, %v832
    %v837 = vmul.f32 %v809, %v833
    %v839 = vlaneseq
    %v840 = vshrl.u32 %v839, 7
    %v841 = vsub.s32 0, %v840
    %v842 = vrot.slane %v791, %v841
    %v844 = vmul.f32 %v834, %v842
    %v845 = vmul.f32 %v835, %v842
    %v846 = vmul.f32 %v836, %v842
    %v847 = vmul.f32 %v837, %v842
    %v849 = vlaneseq
    %v850 = vshrl.u32 %v849, 7
    %v851 = vsub.s32 0, %v850
    %v852 = vrot.slane %v792, %v851
    %v854 = vadd.f32 %v844, %v852
    %v855 = vadd.f32 %v845, %v852
    %v856 = vadd.f32 %v846, %v852
    %v857 = vadd.f32 %v847, %v852
    %v858 = vsub.f32 1.0, %v411
    %v859 = vsub.f32 1.0, %v412
    %v860 = vsub.f32 1.0, %v413
    %v861 = vsub.f32 1.0, %v414
    %v862 = vmul.f32 %v858, -1e+09
    %v863 = vmul.f32 %v859, -1e+09
    %v864 = vmul.f32 %v860, -1e+09
    %v865 = vmul.f32 %v861, -1e+09
    %v866 = vpack.c.bf16 %v855, %v854
    %v867 = vpack.c.bf16 %v857, %v856
    %v868 = vld [vmem:[%s17] sm:$0xff]
    %v869 = vld [vmem:[%s17 + $0x8] sm:$0xf]
    %v870 = vld [vmem:[%s17 + $0xc] sm:$0xff]
    %v871 = vld [vmem:[%s17 + $0x14] sm:$0xf]
    %v872 = vld [vmem:[%s17 + $0x18] sm:$0xff]
    %v873 = vld [vmem:[%s17 + $0x20] sm:$0xf]
    %v874 = vld [vmem:[%s17 + $0x24] sm:$0xff]
    %v875 = vld [vmem:[%s17 + $0x2c] sm:$0xf]
    %v876 = vld [vmem:[%s17 + $0x30] sm:$0xff]
    %v877 = vld [vmem:[%s17 + $0x38] sm:$0xf]
    %v878 = vld [vmem:[%s17 + $0x3c] sm:$0xff]
    %v879 = vld [vmem:[%s17 + $0x44] sm:$0xf]
    %v880 = vld [vmem:[%s17 + $0x48] sm:$0xff]
    %v881 = vld [vmem:[%s17 + $0x50] sm:$0xf]
    %v882 = vld [vmem:[%s17 + $0x54] sm:$0xff]
    %v883 = vld [vmem:[%s17 + $0x5c] sm:$0xf]
    %v884 = vld [vmem:[%s17 + $0x60] sm:$0xff]
    %v885 = vld [vmem:[%s17 + $0x68] sm:$0xf]
    %v886 = vld [vmem:[%s17 + $0x6c] sm:$0xff]
    %v887 = vld [vmem:[%s17 + $0x74] sm:$0xf]
    %v888 = vld [vmem:[%s17 + $0x78] sm:$0xff]
    %v889 = vld [vmem:[%s17 + $0x80] sm:$0xf]
    %v890 = vld [vmem:[%s17 + $0x84] sm:$0xff]
    %v891 = vld [vmem:[%s17 + $0x8c] sm:$0xf]
    %v892 = vld [vmem:[%s17 + $0x90] sm:$0xff]
    %v893 = vld [vmem:[%s17 + $0x98] sm:$0xf]
    %v894 = vld [vmem:[%s17 + $0x9c] sm:$0xff]
    %v895 = vld [vmem:[%s17 + $0xa4] sm:$0xf]
    %v896 = vld [vmem:[%s17 + $0xa8] sm:$0xff]
    %v897 = vld [vmem:[%s17 + $0xb0] sm:$0xf]
    %v898 = vld [vmem:[%s17 + $0xb4] sm:$0xff]
    %v899 = vld [vmem:[%s17 + $0xbc] sm:$0xf]
    %v900 = vld [vmem:[#allocation10] sm:$0x7]
    %v902 = vlaneseq
    %v903 = vshrl.u32 %v902, 7
    %v904 = vsub.s32 0, %v903
    %v905 = vrot.slane %v900, %v904
    %v906 = vlaneseq
    %v907 = vshrl.u32 %v906, 7
    %v908 = vsub.s32 1, %v907
    %v909 = vrot.slane %v900, %v908
    %v910 = vlaneseq
    %v911 = vshrl.u32 %v910, 7
    %v912 = vsub.s32 2, %v911
    %v913 = vrot.slane %v900, %v912
    %v949 = vunpack.c.l.b16 %v868
    %v950 = vunpack.c.h.b16 %v868
    %v951 = vunpack.c.l.b16 %v869
    %v952 = vunpack.c.l.b16 %v870
    %v953 = vunpack.c.h.b16 %v870
    %v954 = vunpack.c.l.b16 %v871
    %v955 = vunpack.c.l.b16 %v872
    %v956 = vunpack.c.h.b16 %v872
    %v957 = vunpack.c.l.b16 %v873
    %v958 = vunpack.c.l.b16 %v874
    %v959 = vunpack.c.h.b16 %v874
    %v960 = vunpack.c.l.b16 %v875
    %v961 = vunpack.c.l.b16 %v876
    %v962 = vunpack.c.h.b16 %v876
    %v963 = vunpack.c.l.b16 %v877
    %v964 = vunpack.c.l.b16 %v878
    %v965 = vunpack.c.h.b16 %v878
    %v966 = vunpack.c.l.b16 %v879
    %v967 = vunpack.c.l.b16 %v880
    %v968 = vunpack.c.h.b16 %v880
    %v969 = vunpack.c.l.b16 %v881
    %v970 = vunpack.c.l.b16 %v882
    %v971 = vunpack.c.h.b16 %v882
    %v972 = vunpack.c.l.b16 %v883
    %v973 = vunpack.c.l.b16 %v884
    %v974 = vunpack.c.h.b16 %v884
    %v975 = vunpack.c.l.b16 %v885
    %v976 = vunpack.c.l.b16 %v886
    %v977 = vunpack.c.h.b16 %v886
    %v978 = vunpack.c.l.b16 %v887
    %v979 = vunpack.c.l.b16 %v888
    %v980 = vunpack.c.h.b16 %v888
    %v981 = vunpack.c.l.b16 %v889
    %v982 = vunpack.c.l.b16 %v890
    %v983 = vunpack.c.h.b16 %v890
    %v984 = vunpack.c.l.b16 %v891
    %v985 = vunpack.c.l.b16 %v892
    %v986 = vunpack.c.h.b16 %v892
    %v987 = vunpack.c.l.b16 %v893
    %v988 = vunpack.c.l.b16 %v894
    %v989 = vunpack.c.h.b16 %v894
    %v990 = vunpack.c.l.b16 %v895
    %v991 = vunpack.c.l.b16 %v896
    %v992 = vunpack.c.h.b16 %v896
    %v993 = vunpack.c.l.b16 %v897
    %v994 = vunpack.c.l.b16 %v898
    %v995 = vunpack.c.h.b16 %v898
    %v996 = vunpack.c.l.b16 %v899
    %v997 = vpack.c.b16 %v952, %v949
    %v998 = vpack.c.b16 %v953, %v950
    %v999 = vpack.c.b16 %v954, %v951
    %v1000 = vpack.c.b16 %v958, %v955
    %v1001 = vpack.c.b16 %v959, %v956
    %v1002 = vpack.c.b16 %v960, %v957
    %v1003 = vpack.c.b16 %v964, %v961
    %v1004 = vpack.c.b16 %v965, %v962
    %v1005 = vpack.c.b16 %v966, %v963
    %v1006 = vpack.c.b16 %v970, %v967
    %v1007 = vpack.c.b16 %v971, %v968
    %v1008 = vpack.c.b16 %v972, %v969
    %v1009 = vpack.c.b16 %v976, %v973
    %v1010 = vpack.c.b16 %v977, %v974
    %v1011 = vpack.c.b16 %v978, %v975
    %v1012 = vpack.c.b16 %v982, %v979
    %v1013 = vpack.c.b16 %v983, %v980
    %v1014 = vpack.c.b16 %v984, %v981
    %v1015 = vpack.c.b16 %v988, %v985
    %v1016 = vpack.c.b16 %v989, %v986
    %v1017 = vpack.c.b16 %v990, %v987
    %v1018 = vpack.c.b16 %v994, %v991
    %v1019 = vpack.c.b16 %v995, %v992
    %v1020 = vpack.c.b16 %v996, %v993
    %1045 = vmatprep.subr.bf16.mxu0 %v998
    %1046 = vmatpush1.bf16.msra.mxu0 %v997
    %1047 = vmatprep.subr.bf16.mxu0 %v1001
    %1048 = vmatpush1.bf16.msra.mxu0 %v1000
    %1049 = vmatprep.subr.bf16.mxu0 %v1004
    %1050 = vmatpush1.bf16.msra.mxu0 %v1003
    %1051 = vmatprep.subr.bf16.mxu0 %v1007
    %1052 = vmatpush1.bf16.msra.mxu0 %v1006
    %1053 = vmatprep.subr.bf16.mxu0 %v1010
    %1054 = vmatpush1.bf16.msra.mxu0 %v1009
    %1055 = vmatprep.subr.bf16.mxu0 %v1013
    %1056 = vmatpush1.bf16.msra.mxu0 %v1012
    %1057 = vmatprep.subr.bf16.mxu0 %v1016
    %1058 = vmatpush1.bf16.msra.mxu0 %v1015
    %1059 = vmatprep.subr.bf16.mxu0 %v1019
    %1060 = vmatpush1.bf16.msra.mxu0 %v1018
    %1061 = vmatprep.subr.bf16.mxu0 0
    %1062 = vmatpush1.bf16.msra.mxu0 0
    %1063 = vmatprep.subr.bf16.mxu0 0
    %1064 = vmatpush1.bf16.msra.mxu0 0
    %1065 = vmatprep.subr.bf16.mxu0 0
    %1066 = vmatpush1.bf16.msra.mxu0 0
    %1067 = vmatprep.subr.bf16.mxu0 0
    %1068 = vmatpush1.bf16.msra.mxu0 0
    %1069 = vmatprep.subr.bf16.mxu0 0
    %1070 = vmatpush1.bf16.msra.mxu0 0
    %1071 = vmatprep.subr.bf16.mxu0 0
    %1072 = vmatpush1.bf16.msra.mxu0 0
    %1073 = vmatprep.subr.bf16.mxu0 0
    %1074 = vmatpush1.bf16.msra.mxu0 0
    %1075 = vmatprep.subr.bf16.mxu0 0
    %1076 = vmatpush1.bf16.msra.mxu0 0
    %1077 = vmatprep.mubr.bf16.mxu0 0
    %1078 = vmatmul.mubr.bf16.gmra.mrb[0].mxu0 %v866
    %v1079 = vpop.f32.mrb[0].mxu0
    %v1080 = vadd.f32 %v905, %v1079
    %v1081 = vpop.f32.mrb[0].mxu0
    %v1082 = vadd.f32 %v909, %v1081
    %v1083 = vpop.f32.mrb[0].mxu0
    %v1084 = vadd.f32 %v905, %v1083
    %v1085 = vpop.f32.mrb[0].mxu0
    %v1086 = vadd.f32 %v909, %v1085
    %1087 = vmatprep.mubr.bf16.mxu0 0
    %1088 = vmatmul.mubr.bf16.gmra.mrb[0].mxu0 %v867
    %v1089 = vpop.f32.mrb[0].mxu0
    %v1090 = vadd.f32 %v905, %v1089
    %v1091 = vpop.f32.mrb[0].mxu0
    %v1092 = vadd.f32 %v909, %v1091
    %v1093 = vpop.f32.mrb[0].mxu0
    %v1094 = vadd.f32 %v905, %v1093
    %v1095 = vpop.f32.mrb[0].mxu0
    %v1096 = vadd.f32 %v909, %v1095
    %1097 = vdwg.mxu0
    %1098 = vmatprep.subr.bf16.mxu0 0
    %1099 = vmatpush1.bf16.msra.mxu0 %v999
    %1100 = vmatprep.subr.bf16.mxu0 0
    %1101 = vmatpush1.bf16.msra.mxu0 %v1002
    %1102 = vmatprep.subr.bf16.mxu0 0
    %1103 = vmatpush1.bf16.msra.mxu0 %v1005
    %1104 = vmatprep.subr.bf16.mxu0 0
    %1105 = vmatpush1.bf16.msra.mxu0 %v1008
    %1106 = vmatprep.subr.bf16.mxu0 0
    %1107 = vmatpush1.bf16.msra.mxu0 %v1011
    %1108 = vmatprep.subr.bf16.mxu0 0
    %1109 = vmatpush1.bf16.msra.mxu0 %v1014
    %1110 = vmatprep.subr.bf16.mxu0 0
    %1111 = vmatpush1.bf16.msra.mxu0 %v1017
    %1112 = vmatprep.subr.bf16.mxu0 0
    %1113 = vmatpush1.bf16.msra.mxu0 %v1020
    %1114 = vmatprep.subr.bf16.mxu0 0
    %1115 = vmatpush1.bf16.msra.mxu0 0
    %1116 = vmatprep.subr.bf16.mxu0 0
    %1117 = vmatpush1.bf16.msra.mxu0 0
    %1118 = vmatprep.subr.bf16.mxu0 0
    %1119 = vmatpush1.bf16.msra.mxu0 0
    %1120 = vmatprep.subr.bf16.mxu0 0
    %1121 = vmatpush1.bf16.msra.mxu0 0
    %1122 = vmatprep.subr.bf16.mxu0 0
    %1123 = vmatpush1.bf16.msra.mxu0 0
    %1124 = vmatprep.subr.bf16.mxu0 0
    %1125 = vmatpush1.bf16.msra.mxu0 0
    %1126 = vmatprep.subr.bf16.mxu0 0
    %1127 = vmatpush1.bf16.msra.mxu0 0
    %1128 = vmatprep.subr.bf16.mxu0 0
    %1129 = vmatpush1.bf16.msra.mxu0 0
    %1130 = vmatprep.mubr.bf16.mxu0 0
    %1131 = vmatmul.mubr.bf16.gmra.mrb[0].mxu0 %v866
    %v1132 = vpop.f32.mrb[0].mxu0
    %v1133 = vadd.f32 %v913, %v1132
    %v1134 = vpop.f32.mrb[0].mxu0
    %v1135 = vpop.f32.mrb[0].mxu0
    %v1136 = vadd.f32 %v913, %v1135
    %v1137 = vpop.f32.mrb[0].mxu0
    %1138 = vmatprep.mubr.bf16.mxu0 0
    %1139 = vmatmul.mubr.bf16.gmra.mrb[0].mxu0 %v867
    %v1140 = vpop.f32.mrb[0].mxu0
    %v1141 = vadd.f32 %v913, %v1140
    %v1142 = vpop.f32.mrb[0].mxu0
    %v1143 = vpop.f32.mrb[0].mxu0
    %v1144 = vadd.f32 %v913, %v1143
    %v1145 = vpop.f32.mrb[0].mxu0
    %1146 = vdwg.mxu0
    %v1147 = vpack.c.bf16 %v1084, %v1080
    %v1148 = vpack.c.bf16 %v1094, %v1090
    %v1149 = vpack.c.bf16 %v1086, %v1082
    %v1150 = vpack.c.bf16 %v1096, %v1092
    %v1151 = vpack.c.bf16 %v1136, %v1133
    %v1152 = vpack.c.bf16 %v1144, %v1141
    %1153 = vmatprep.subr.bf16.mxu0 0
    %1154 = vmatpush1.bf16.xpose.msra.mxu0 %v1149
    %1155 = vmatprep.subr.bf16.mxu0 0
    %1156 = vmatpush1.bf16.xpose.msra.mxu0 %v1150
    %1157 = vmatprep.subr.bf16.mxu0 0
    %1158 = vmatpush1.bf16.xpose.msra.mxu0 0
    %1159 = vmatprep.subr.bf16.mxu0 0
    %1160 = vmatpush1.bf16.xpose.msra.mxu0 0
    %1161 = vmatprep.subr.bf16.mxu0 0
    %1162 = vmatpush1.bf16.xpose.msra.mxu0 0
    %1163 = vmatprep.subr.bf16.mxu0 0
    %1164 = vmatpush1.bf16.xpose.msra.mxu0 0
    %1165 = vmatprep.subr.bf16.mxu0 0
    %1166 = vmatpush1.bf16.xpose.msra.mxu0 0
    %1167 = vmatprep.subr.bf16.mxu0 0
    %1168 = vmatpush1.bf16.xpose.msra.mxu0 0
    %1169 = vmatprep.subr.bf16.mxu0 0
    %1170 = vmatpush1.bf16.xpose.msra.mxu0 0
    %1171 = vmatprep.subr.bf16.mxu0 0
    %1172 = vmatpush1.bf16.xpose.msra.mxu0 0
    %1173 = vmatprep.subr.bf16.mxu0 0
    %1174 = vmatpush1.bf16.xpose.msra.mxu0 0
    %1175 = vmatprep.subr.bf16.mxu0 0
    %1176 = vmatpush1.bf16.xpose.msra.mxu0 0
    %1177 = vmatprep.subr.bf16.mxu0 0
    %1178 = vmatpush1.bf16.xpose.msra.mxu0 0
    %1179 = vmatprep.subr.bf16.mxu0 0
    %1180 = vmatpush1.bf16.xpose.msra.mxu0 0
    %1181 = vmatprep.subr.bf16.mxu0 0
    %1182 = vmatpush1.bf16.xpose.msra.mxu0 0
    %1183 = vmatprep.subr.bf16.mxu0 0
    %1184 = vmatpush1.bf16.xpose.msra.mxu0 0
    %1185 = vmatprep.mubr.bf16.mxu0 0
    %1186 = vmatmul.mubr.bf16.gmra.mrb[0].mxu0 %v1147
    %v1187 = vpop.f32.mrb[0].mxu0
    %v1188 = vadd.f32 %v862, %v1187
    %v1189 = vpop.f32.mrb[0].mxu0
    %v1190 = vpop.f32.mrb[0].mxu0
    %v1191 = vadd.f32 %v863, %v1190
    %v1192 = vpop.f32.mrb[0].mxu0
    %1193 = vmatprep.mubr.bf16.mxu0 0
    %1194 = vmatmul.mubr.bf16.gmra.mrb[0].mxu0 %v1148
    %v1195 = vpop.f32.mrb[0].mxu0
    %v1196 = vadd.f32 %v864, %v1195
    %v1197 = vpop.f32.mrb[0].mxu0
    %v1198 = vpop.f32.mrb[0].mxu0
    %v1199 = vadd.f32 %v865, %v1198
    %v1200 = vpop.f32.mrb[0].mxu0
    %1201 = vdwg.mxu0
    %v1202 = vsel %vm667, %v1188, -inf
    %1203 = vmax.xlane.f32.xlu0 %v1202
    %v1204 = vpop.xlane.xlu0 %1203
    %v1205 = vsel %vm667, %v1191, -inf
    %1206 = vmax.xlane.f32.xlu0 %v1205
    %v1207 = vpop.xlane.xlu0 %1206
    %v1208 = vsel %vm667, %v1196, -inf
    %1209 = vmax.xlane.f32.xlu0 %v1208
    %v1210 = vpop.xlane.xlu0 %1209
    %v1211 = vsel %vm667, %v1199, -inf
    %1212 = vmax.xlane.f32.xlu0 %v1211
    %v1213 = vpop.xlane.xlu0 %1212
    %v1214 = vsub.f32 %v1188, %v1204
    %v1215 = vsub.f32 %v1191, %v1207
    %v1216 = vsub.f32 %v1196, %v1210
    %v1217 = vsub.f32 %v1199, %v1213
    %v1218 = vmul.f32 %v1214, 1.442695
    %v1219 = vpow.pop %v1218
    %v1220 = vmul.f32 %v1215, 1.442695
    %v1221 = vpow.pop %v1220
    %v1222 = vmul.f32 %v1216, 1.442695
    %v1223 = vpow.pop %v1222
    %v1224 = vmul.f32 %v1217, 1.442695
    %v1225 = vpow.pop %v1224
    %v1226 = vsel %vm667, %v1219, 0.0
    %1227 = vadd.xlane.f32.xlu0 %v1226
    %v1228 = vpop.xlane.xlu0 %1227
    %v1229 = vsel %vm667, %v1221, 0.0
    %1230 = vadd.xlane.f32.xlu0 %v1229
    %v1231 = vpop.xlane.xlu0 %1230
    %v1232 = vsel %vm667, %v1223, 0.0
    %1233 = vadd.xlane.f32.xlu0 %v1232
    %v1234 = vpop.xlane.xlu0 %1233
    %v1235 = vsel %vm667, %v1225, 0.0
    %1236 = vadd.xlane.f32.xlu0 %v1235
    %v1237 = vpop.xlane.xlu0 %1236
    %v1238 = vrcp.pop %v1228
    %v1239 = vrcp.pop %v1231
    %v1240 = vrcp.pop %v1234
    %v1241 = vrcp.pop %v1237
    %v1242 = vmul.f32 %v1219, %v1238
    %v1243 = vmul.f32 %v1221, %v1239
    %v1244 = vmul.f32 %v1223, %v1240
    %v1245 = vmul.f32 %v1225, %v1241
    %v1246 = vpack.c.bf16 %v1243, %v1242
    %v1247 = vpack.c.bf16 %v1245, %v1244
    %v1249 = vsel %vm667, %v1246, 0
    %v1252 = vsel %vm667, %v1247, 0
    %1254 = vmatprep.subr.bf16.mxu0 0
    %1255 = vmatpush1.bf16.msra.mxu0 %v1151
    %1256 = vmatprep.subr.bf16.mxu0 0
    %1257 = vmatpush1.bf16.msra.mxu0 %v1152
    %1258 = vmatprep.subr.bf16.mxu0 0
    %1259 = vmatpush1.bf16.msra.mxu0 0
    %1260 = vmatprep.subr.bf16.mxu0 0
    %1261 = vmatpush1.bf16.msra.mxu0 0
    %1262 = vmatprep.subr.bf16.mxu0 0
    %1263 = vmatpush1.bf16.msra.mxu0 0
    %1264 = vmatprep.subr.bf16.mxu0 0
    %1265 = vmatpush1.bf16.msra.mxu0 0
    %1266 = vmatprep.subr.bf16.mxu0 0
    %1267 = vmatpush1.bf16.msra.mxu0 0
    %1268 = vmatprep.subr.bf16.mxu0 0
    %1269 = vmatpush1.bf16.msra.mxu0 0
    %1270 = vmatprep.subr.bf16.mxu0 0
    %1271 = vmatpush1.bf16.msra.mxu0 0
    %1272 = vmatprep.subr.bf16.mxu0 0
    %1273 = vmatpush1.bf16.msra.mxu0 0
    %1274 = vmatprep.subr.bf16.mxu0 0
    %1275 = vmatpush1.bf16.msra.mxu0 0
    %1276 = vmatprep.subr.bf16.mxu0 0
    %1277 = vmatpush1.bf16.msra.mxu0 0
    %1278 = vmatprep.subr.bf16.mxu0 0
    %1279 = vmatpush1.bf16.msra.mxu0 0
    %1280 = vmatprep.subr.bf16.mxu0 0
    %1281 = vmatpush1.bf16.msra.mxu0 0
    %1282 = vmatprep.subr.bf16.mxu0 0
    %1283 = vmatpush1.bf16.msra.mxu0 0
    %1284 = vmatprep.subr.bf16.mxu0 0
    %1285 = vmatpush1.bf16.msra.mxu0 0
    %1286 = vmatprep.mubr.bf16.mxu0 0
    %1287 = vmatmul.mubr.bf16.gmra.mrb[0].mxu0 %v1249
    %v1288 = vpop.f32.mrb[0].mxu0
    %v1289 = vadd.f32 0.0, %v1288
    %v1290 = vpop.f32.mrb[0].mxu0
    %v1291 = vpop.f32.mrb[0].mxu0
    %v1292 = vadd.f32 0.0, %v1291
    %v1293 = vpop.f32.mrb[0].mxu0
    %1294 = vmatprep.mubr.bf16.mxu0 0
    %1295 = vmatmul.mubr.bf16.gmra.mrb[0].mxu0 %v1252
    %v1296 = vpop.f32.mrb[0].mxu0
    %v1297 = vadd.f32 0.0, %v1296
    %v1298 = vpop.f32.mrb[0].mxu0
    %v1299 = vpop.f32.mrb[0].mxu0
    %v1300 = vadd.f32 0.0, %v1299
    %v1301 = vpop.f32.mrb[0].mxu0
    %1302 = vdwg.mxu0
    %v1303 = vpack.c.bf16 %v1292, %v1289
    %v1304 = vpack.c.bf16 %v1300, %v1297
    %v1305 = vld [vmem:[#allocation11] sm:$0xf]
    %v1306 = vld [vmem:[#allocation11 + $0x4] sm:$0xf]
    %v1307 = vld [vmem:[#allocation11 + $0x8] sm:$0xf]
    %v1308 = vld [vmem:[#allocation11 + $0xc] sm:$0xf]
    %v1309 = vld [vmem:[#allocation11 + $0x10] sm:$0xf]
    %v1310 = vld [vmem:[#allocation11 + $0x14] sm:$0xf]
    %v1311 = vld [vmem:[#allocation11 + $0x18] sm:$0xf]
    %v1312 = vld [vmem:[#allocation11 + $0x1c] sm:$0xf]
    %v1313 = vld [vmem:[#allocation11 + $0x20] sm:$0xf]
    %v1314 = vld [vmem:[#allocation11 + $0x24] sm:$0xf]
    %v1315 = vld [vmem:[#allocation11 + $0x28] sm:$0xf]
    %v1316 = vld [vmem:[#allocation11 + $0x2c] sm:$0xf]
    %v1317 = vld [vmem:[#allocation11 + $0x30] sm:$0xf]
    %v1318 = vld [vmem:[#allocation11 + $0x34] sm:$0xf]
    %v1319 = vld [vmem:[#allocation11 + $0x38] sm:$0xf]
    %v1320 = vld [vmem:[#allocation11 + $0x3c] sm:$0xf]
    %v1321 = vld [vmem:[%s23] sm:$0x1]
    %v1323 = vlaneseq
    %v1324 = vshrl.u32 %v1323, 7
    %v1325 = vsub.s32 0, %v1324
    %v1326 = vrot.slane %v1321, %v1325
    %v1344 = vunpack.c.l.b16 %v1305
    %v1345 = vunpack.c.l.b16 %v1306
    %v1346 = vunpack.c.l.b16 %v1307
    %v1347 = vunpack.c.l.b16 %v1308
    %v1348 = vunpack.c.l.b16 %v1309
    %v1349 = vunpack.c.l.b16 %v1310
    %v1350 = vunpack.c.l.b16 %v1311
    %v1351 = vunpack.c.l.b16 %v1312
    %v1352 = vunpack.c.l.b16 %v1313
    %v1353 = vunpack.c.l.b16 %v1314
    %v1354 = vunpack.c.l.b16 %v1315
    %v1355 = vunpack.c.l.b16 %v1316
    %v1356 = vunpack.c.l.b16 %v1317
    %v1357 = vunpack.c.l.b16 %v1318
    %v1358 = vunpack.c.l.b16 %v1319
    %v1359 = vunpack.c.l.b16 %v1320
    %v1360 = vpack.c.b16 %v1345, %v1344
    %v1361 = vpack.c.b16 %v1347, %v1346
    %v1362 = vpack.c.b16 %v1349, %v1348
    %v1363 = vpack.c.b16 %v1351, %v1350
    %v1364 = vpack.c.b16 %v1353, %v1352
    %v1365 = vpack.c.b16 %v1355, %v1354
    %v1366 = vpack.c.b16 %v1357, %v1356
    %v1367 = vpack.c.b16 %v1359, %v1358
    %1376 = vmatprep.subr.bf16.mxu0 0
    %1377 = vmatpush1.bf16.msra.mxu0 %v1360
    %1378 = vmatprep.subr.bf16.mxu0 0
    %1379 = vmatpush1.bf16.msra.mxu0 %v1361
    %1380 = vmatprep.subr.bf16.mxu0 0
    %1381 = vmatpush1.bf16.msra.mxu0 %v1362
    %1382 = vmatprep.subr.bf16.mxu0 0
    %1383 = vmatpush1.bf16.msra.mxu0 %v1363
    %1384 = vmatprep.subr.bf16.mxu0 0
    %1385 = vmatpush1.bf16.msra.mxu0 %v1364
    %1386 = vmatprep.subr.bf16.mxu0 0
    %1387 = vmatpush1.bf16.msra.mxu0 %v1365
    %1388 = vmatprep.subr.bf16.mxu0 0
    %1389 = vmatpush1.bf16.msra.mxu0 %v1366
    %1390 = vmatprep.subr.bf16.mxu0 0
    %1391 = vmatpush1.bf16.msra.mxu0 %v1367
    %1392 = vmatprep.subr.bf16.mxu0 0
    %1393 = vmatpush1.bf16.msra.mxu0 0
    %1394 = vmatprep.subr.bf16.mxu0 0
    %1395 = vmatpush1.bf16.msra.mxu0 0
    %1396 = vmatprep.subr.bf16.mxu0 0
    %1397 = vmatpush1.bf16.msra.mxu0 0
    %1398 = vmatprep.subr.bf16.mxu0 0
    %1399 = vmatpush1.bf16.msra.mxu0 0
    %1400 = vmatprep.subr.bf16.mxu0 0
    %1401 = vmatpush1.bf16.msra.mxu0 0
    %1402 = vmatprep.subr.bf16.mxu0 0
    %1403 = vmatpush1.bf16.msra.mxu0 0
    %1404 = vmatprep.subr.bf16.mxu0 0
    %1405 = vmatpush1.bf16.msra.mxu0 0
    %1406 = vmatprep.subr.bf16.mxu0 0
    %1407 = vmatpush1.bf16.msra.mxu0 0
    %1408 = vmatprep.mubr.bf16.mxu0 0
    %1409 = vmatmul.mubr.bf16.gmra.mrb[0].mxu0 %v1303
    %v1410 = vpop.f32.mrb[0].mxu0
    %v1411 = vadd.f32 %v1326, %v1410
    %v1412 = vpop.f32.mrb[0].mxu0
    %v1413 = vpop.f32.mrb[0].mxu0
    %v1414 = vadd.f32 %v1326, %v1413
    %v1415 = vpop.f32.mrb[0].mxu0
    %1416 = vmatprep.mubr.bf16.mxu0 0
    %1417 = vmatmul.mubr.bf16.gmra.mrb[0].mxu0 %v1304
    %v1418 = vpop.f32.mrb[0].mxu0
    %v1419 = vadd.f32 %v1326, %v1418
    %v1420 = vpop.f32.mrb[0].mxu0
    %v1421 = vpop.f32.mrb[0].mxu0
    %v1422 = vadd.f32 %v1326, %v1421
    %v1423 = vpop.f32.mrb[0].mxu0
    %1424 = vdwg.mxu0
    %v1425 = vadd.f32 %v854, %v1411
    %v1426 = vadd.f32 %v855, %v1414
    %v1427 = vadd.f32 %v856, %v1419
    %v1428 = vadd.f32 %v857, %v1422
    %v1429 = vld [vmem:[#allocation13] sm:$0x1]
    %v1430 = vld [vmem:[#allocation14] sm:$0x1]
    %1431 = vadd.xlane.f32.xlu0 %v1425
    %v1432 = vpop.xlane.xlu0 %1431
    %1433 = vadd.xlane.f32.xlu0 %v1426
    %v1434 = vpop.xlane.xlu0 %1433
    %1435 = vadd.xlane.f32.xlu0 %v1427
    %v1436 = vpop.xlane.xlu0 %1435
    %1437 = vadd.xlane.f32.xlu0 %v1428
    %v1438 = vpop.xlane.xlu0 %1437
    %v1439 = vmul.f32 %v1432, %v801
    %v1440 = vmul.f32 %v1434, %v801
    %v1441 = vmul.f32 %v1436, %v801
    %v1442 = vmul.f32 %v1438, %v801
    %v1443 = vsub.f32 %v1425, %v1439
    %v1444 = vsub.f32 %v1426, %v1440
    %v1445 = vsub.f32 %v1427, %v1441
    %v1446 = vsub.f32 %v1428, %v1442
    %v1447 = vmul.f32 %v1443, %v1443
    %v1448 = vmul.f32 %v1444, %v1444
    %v1449 = vmul.f32 %v1445, %v1445
    %v1450 = vmul.f32 %v1446, %v1446
    %1451 = vadd.xlane.f32.xlu0 %v1447
    %v1452 = vpop.xlane.xlu0 %1451
    %1453 = vadd.xlane.f32.xlu0 %v1448
    %v1454 = vpop.xlane.xlu0 %1453
    %1455 = vadd.xlane.f32.xlu0 %v1449
    %v1456 = vpop.xlane.xlu0 %1455
    %1457 = vadd.xlane.f32.xlu0 %v1450
    %v1458 = vpop.xlane.xlu0 %1457
    %v1459 = vmul.f32 %v1452, %v801
    %v1460 = vmul.f32 %v1454, %v801
    %v1461 = vmul.f32 %v1456, %v801
    %v1462 = vmul.f32 %v1458, %v801
    %v1463 = vadd.f32 %v1459, 1e-05
    %v1464 = vadd.f32 %v1460, 1e-05
    %v1465 = vadd.f32 %v1461, 1e-05
    %v1466 = vadd.f32 %v1462, 1e-05
    %v1467 = vrsqrt.pop %v1463
    %v1468 = vrsqrt.pop %v1464
    %v1469 = vrsqrt.pop %v1465
    %v1470 = vrsqrt.pop %v1466
    %v1471 = vmul.f32 %v1443, %v1467
    %v1472 = vmul.f32 %v1444, %v1468
    %v1473 = vmul.f32 %v1445, %v1469
    %v1474 = vmul.f32 %v1446, %v1470
    %v1476 = vlaneseq
    %v1477 = vshrl.u32 %v1476, 7
    %v1478 = vsub.s32 0, %v1477
    %v1479 = vrot.slane %v1429, %v1478
    %v1481 = vmul.f32 %v1471, %v1479
    %v1482 = vmul.f32 %v1472, %v1479
    %v1483 = vmul.f32 %v1473, %v1479
    %v1484 = vmul.f32 %v1474, %v1479
    %v1486 = vlaneseq
    %v1487 = vshrl.u32 %v1486, 7
    %v1488 = vsub.s32 0, %v1487
    %v1489 = vrot.slane %v1430, %v1488
    %v1491 = vadd.f32 %v1481, %v1489
    %v1492 = vadd.f32 %v1482, %v1489
    %v1493 = vadd.f32 %v1483, %v1489
    %v1494 = vadd.f32 %v1484, %v1489
    %v1495 = vpack.c.bf16 %v1492, %v1491
    %v1496 = vpack.c.bf16 %v1494, %v1493
    %v1497 = vld [vmem:[#allocation16] sm:$0xff]
    %v1498 = vld [vmem:[#allocation16 + $0x8] sm:$0xff]
    %v1499 = vld [vmem:[#allocation16 + $0x10] sm:$0xff]
    %v1500 = vld [vmem:[#allocation16 + $0x18] sm:$0xff]
    %v1501 = vld [vmem:[#allocation16 + $0x20] sm:$0xff]
    %v1502 = vld [vmem:[#allocation16 + $0x28] sm:$0xff]
    %v1503 = vld [vmem:[#allocation16 + $0x30] sm:$0xff]
    %v1504 = vld [vmem:[#allocation16 + $0x38] sm:$0xff]
    %v1505 = vld [vmem:[#allocation16 + $0x40] sm:$0xff]
    %v1506 = vld [vmem:[#allocation16 + $0x48] sm:$0xff]
    %v1507 = vld [vmem:[#allocation16 + $0x50] sm:$0xff]
    %v1508 = vld [vmem:[#allocation16 + $0x58] sm:$0xff]
    %v1509 = vld [vmem:[#allocation16 + $0x60] sm:$0xff]
    %v1510 = vld [vmem:[#allocation16 + $0x68] sm:$0xff]
    %v1511 = vld [vmem:[#allocation16 + $0x70] sm:$0xff]
    %v1512 = vld [vmem:[#allocation16 + $0x78] sm:$0xff]
    %v1513 = vld [vmem:[#allocation17] sm:$0x3]
    %v1515 = vlaneseq
    %v1516 = vshrl.u32 %v1515, 7
    %v1517 = vsub.s32 0, %v1516
    %v1518 = vrot.slane %v1513, %v1517
    %v1519 = vlaneseq
    %v1520 = vshrl.u32 %v1519, 7
    %v1521 = vsub.s32 1, %v1520
    %v1522 = vrot.slane %v1513, %v1521
    %v1541 = vunpack.c.l.b16 %v1497
    %v1542 = vunpack.c.h.b16 %v1497
    %v1543 = vunpack.c.l.b16 %v1498
    %v1544 = vunpack.c.h.b16 %v1498
    %v1545 = vunpack.c.l.b16 %v1499
    %v1546 = vunpack.c.h.b16 %v1499
    %v1547 = vunpack.c.l.b16 %v1500
    %v1548 = vunpack.c.h.b16 %v1500
    %v1549 = vunpack.c.l.b16 %v1501
    %v1550 = vunpack.c.h.b16 %v1501
    %v1551 = vunpack.c.l.b16 %v1502
    %v1552 = vunpack.c.h.b16 %v1502
    %v1553 = vunpack.c.l.b16 %v1503
    %v1554 = vunpack.c.h.b16 %v1503
    %v1555 = vunpack.c.l.b16 %v1504
    %v1556 = vunpack.c.h.b16 %v1504
    %v1557 = vunpack.c.l.b16 %v1505
    %v1558 = vunpack.c.h.b16 %v1505
    %v1559 = vunpack.c.l.b16 %v1506
    %v1560 = vunpack.c.h.b16 %v1506
    %v1561 = vunpack.c.l.b16 %v1507
    %v1562 = vunpack.c.h.b16 %v1507
    %v1563 = vunpack.c.l.b16 %v1508
    %v1564 = vunpack.c.h.b16 %v1508
    %v1565 = vunpack.c.l.b16 %v1509
    %v1566 = vunpack.c.h.b16 %v1509
    %v1567 = vunpack.c.l.b16 %v1510
    %v1568 = vunpack.c.h.b16 %v1510
    %v1569 = vunpack.c.l.b16 %v1511
    %v1570 = vunpack.c.h.b16 %v1511
    %v1571 = vunpack.c.l.b16 %v1512
    %v1572 = vunpack.c.h.b16 %v1512
    %v1573 = vpack.c.b16 %v1543, %v1541
    %v1574 = vpack.c.b16 %v1544, %v1542
    %v1575 = vpack.c.b16 %v1547, %v1545
    %v1576 = vpack.c.b16 %v1548, %v1546
    %v1577 = vpack.c.b16 %v1551, %v1549
    %v1578 = vpack.c.b16 %v1552, %v1550
    %v1579 = vpack.c.b16 %v1555, %v1553
    %v1580 = vpack.c.b16 %v1556, %v1554
    %v1581 = vpack.c.b16 %v1559, %v1557
    %v1582 = vpack.c.b16 %v1560, %v1558
    %v1583 = vpack.c.b16 %v1563, %v1561
    %v1584 = vpack.c.b16 %v1564, %v1562
    %v1585 = vpack.c.b16 %v1567, %v1565
    %v1586 = vpack.c.b16 %v1568, %v1566
    %v1587 = vpack.c.b16 %v1571, %v1569
    %v1588 = vpack.c.b16 %v1572, %v1570
    %1605 = vmatprep.subr.bf16.mxu0 %v1574
    %1606 = vmatpush1.bf16.msra.mxu0 %v1573
    %1607 = vmatprep.subr.bf16.mxu0 %v1576
    %1608 = vmatpush1.bf16.msra.mxu0 %v1575
    %1609 = vmatprep.subr.bf16.mxu0 %v1578
    %1610 = vmatpush1.bf16.msra.mxu0 %v1577
    %1611 = vmatprep.subr.bf16.mxu0 %v1580
    %1612 = vmatpush1.bf16.msra.mxu0 %v1579
    %1613 = vmatprep.subr.bf16.mxu0 %v1582
    %1614 = vmatpush1.bf16.msra.mxu0 %v1581
    %1615 = vmatprep.subr.bf16.mxu0 %v1584
    %1616 = vmatpush1.bf16.msra.mxu0 %v1583
    %1617 = vmatprep.subr.bf16.mxu0 %v1586
    %1618 = vmatpush1.bf16.msra.mxu0 %v1585
    %1619 = vmatprep.subr.bf16.mxu0 %v1588
    %1620 = vmatpush1.bf16.msra.mxu0 %v1587
    %1621 = vmatprep.subr.bf16.mxu0 0
    %1622 = vmatpush1.bf16.msra.mxu0 0
    %1623 = vmatprep.subr.bf16.mxu0 0
    %1624 = vmatpush1.bf16.msra.mxu0 0
    %1625 = vmatprep.subr.bf16.mxu0 0
    %1626 = vmatpush1.bf16.msra.mxu0 0
    %1627 = vmatprep.subr.bf16.mxu0 0
    %1628 = vmatpush1.bf16.msra.mxu0 0
    %1629 = vmatprep.subr.bf16.mxu0 0
    %1630 = vmatpush1.bf16.msra.mxu0 0
    %1631 = vmatprep.subr.bf16.mxu0 0
    %1632 = vmatpush1.bf16.msra.mxu0 0
    %1633 = vmatprep.subr.bf16.mxu0 0
    %1634 = vmatpush1.bf16.msra.mxu0 0
    %1635 = vmatprep.subr.bf16.mxu0 0
    %1636 = vmatpush1.bf16.msra.mxu0 0
    %1637 = vmatprep.mubr.bf16.mxu0 0
    %1638 = vmatmul.mubr.bf16.gmra.mrb[0].mxu0 %v1495
    %v1639 = vpop.f32.mrb[0].mxu0
    %v1640 = vadd.f32 %v1518, %v1639
    %v1641 = vpop.f32.mrb[0].mxu0
    %v1642 = vadd.f32 %v1522, %v1641
    %v1643 = vpop.f32.mrb[0].mxu0
    %v1644 = vadd.f32 %v1518, %v1643
    %v1645 = vpop.f32.mrb[0].mxu0
    %v1646 = vadd.f32 %v1522, %v1645
    %1647 = vmatprep.mubr.bf16.mxu0 0
    %1648 = vmatmul.mubr.bf16.gmra.mrb[0].mxu0 %v1496
    %v1649 = vpop.f32.mrb[0].mxu0
    %v1650 = vadd.f32 %v1518, %v1649
    %v1651 = vpop.f32.mrb[0].mxu0
    %v1652 = vadd.f32 %v1522, %v1651
    %v1653 = vpop.f32.mrb[0].mxu0
    %v1654 = vadd.f32 %v1518, %v1653
    %v1655 = vpop.f32.mrb[0].mxu0
    %v1656 = vadd.f32 %v1522, %v1655
    %1657 = vdwg.mxu0
    %v1658 = vmul.f32 %v1640, %v1640
    %v1659 = vmul.f32 %v1642, %v1642
    %v1660 = vmul.f32 %v1644, %v1644
    %v1661 = vmul.f32 %v1646, %v1646
    %v1662 = vmul.f32 %v1650, %v1650
    %v1663 = vmul.f32 %v1652, %v1652
    %v1664 = vmul.f32 %v1654, %v1654
    %v1665 = vmul.f32 %v1656, %v1656
    %v1666 = vmul.f32 %v1640, %v1658
    %v1667 = vmul.f32 %v1642, %v1659
    %v1668 = vmul.f32 %v1644, %v1660
    %v1669 = vmul.f32 %v1646, %v1661
    %v1670 = vmul.f32 %v1650, %v1662
    %v1671 = vmul.f32 %v1652, %v1663
    %v1672 = vmul.f32 %v1654, %v1664
    %v1673 = vmul.f32 %v1656, %v1665
    %v1674 = vmul.f32 %v1666, 0.044715
    %v1675 = vmul.f32 %v1667, 0.044715
    %v1676 = vmul.f32 %v1668, 0.044715
    %v1677 = vmul.f32 %v1669, 0.044715
    %v1678 = vmul.f32 %v1670, 0.044715
    %v1679 = vmul.f32 %v1671, 0.044715
    %v1680 = vmul.f32 %v1672, 0.044715
    %v1681 = vmul.f32 %v1673, 0.044715
    %v1682 = vadd.f32 %v1640, %v1674
    %v1683 = vadd.f32 %v1642, %v1675
    %v1684 = vadd.f32 %v1644, %v1676
    %v1685 = vadd.f32 %v1646, %v1677
    %v1686 = vadd.f32 %v1650, %v1678
    %v1687 = vadd.f32 %v1652, %v1679
    %v1688 = vadd.f32 %v1654, %v1680
    %v1689 = vadd.f32 %v1656, %v1681
    %v1690 = vmul.f32 %v1682, 0.7978846
    %v1691 = vmul.f32 %v1683, 0.7978846
    %v1692 = vmul.f32 %v1684, 0.7978846
    %v1693 = vmul.f32 %v1685, 0.7978846
    %v1694 = vmul.f32 %v1686, 0.7978846
    %v1695 = vmul.f32 %v1687, 0.7978846
    %v1696 = vmul.f32 %v1688, 0.7978846
    %v1697 = vmul.f32 %v1689, 0.7978846
    %v1698 = vtanh.pop %v1690
    %v1699 = vtanh.pop %v1691
    %v1700 = vtanh.pop %v1692
    %v1701 = vtanh.pop %v1693
    %v1702 = vtanh.pop %v1694
    %v1703 = vtanh.pop %v1695
    %v1704 = vtanh.pop %v1696
    %v1705 = vtanh.pop %v1697
    %v1706 = vadd.f32 %v1698, 1.0
    %v1707 = vadd.f32 %v1699, 1.0
    %v1708 = vadd.f32 %v1700, 1.0
    %v1709 = vadd.f32 %v1701, 1.0
    %v1710 = vadd.f32 %v1702, 1.0
    %v1711 = vadd.f32 %v1703, 1.0
    %v1712 = vadd.f32 %v1704, 1.0
    %v1713 = vadd.f32 %v1705, 1.0
    %v1714 = vmul.f32 %v1706, 0.5
    %v1715 = vmul.f32 %v1707, 0.5
    %v1716 = vmul.f32 %v1708, 0.5
    %v1717 = vmul.f32 %v1709, 0.5
    %v1718 = vmul.f32 %v1710, 0.5
    %v1719 = vmul.f32 %v1711, 0.5
    %v1720 = vmul.f32 %v1712, 0.5
    %v1721 = vmul.f32 %v1713, 0.5
    %v1722 = vmul.f32 %v1640, %v1714
    %v1723 = vmul.f32 %v1642, %v1715
    %v1724 = vmul.f32 %v1644, %v1716
    %v1725 = vmul.f32 %v1646, %v1717
    %v1726 = vmul.f32 %v1650, %v1718
    %v1727 = vmul.f32 %v1652, %v1719
    %v1728 = vmul.f32 %v1654, %v1720
    %v1729 = vmul.f32 %v1656, %v1721
    %v1730 = vpack.c.bf16 %v1724, %v1722
    %v1731 = vpack.c.bf16 %v1725, %v1723
    %v1732 = vpack.c.bf16 %v1728, %v1726
    %v1733 = vpack.c.bf16 %v1729, %v1727
    %v1734 = vld [vmem:[#allocation19] sm:$0xf]
    %v1735 = vld [vmem:[#allocation19 + $0x4] sm:$0xf]
    %v1736 = vld [vmem:[#allocation19 + $0x8] sm:$0xf]
    %v1737 = vld [vmem:[#allocation19 + $0xc] sm:$0xf]
    %v1738 = vld [vmem:[#allocation19 + $0x10] sm:$0xf]
    %v1739 = vld [vmem:[#allocation19 + $0x14] sm:$0xf]
    %v1740 = vld [vmem:[#allocation19 + $0x18] sm:$0xf]
    %v1741 = vld [vmem:[#allocation19 + $0x1c] sm:$0xf]
    %v1742 = vld [vmem:[#allocation19 + $0x20] sm:$0xf]
    %v1743 = vld [vmem:[#allocation19 + $0x24] sm:$0xf]
    %v1744 = vld [vmem:[#allocation19 + $0x28] sm:$0xf]
    %v1745 = vld [vmem:[#allocation19 + $0x2c] sm:$0xf]
    %v1746 = vld [vmem:[#allocation19 + $0x30] sm:$0xf]
    %v1747 = vld [vmem:[#allocation19 + $0x34] sm:$0xf]
    %v1748 = vld [vmem:[#allocation19 + $0x38] sm:$0xf]
    %v1749 = vld [vmem:[#allocation19 + $0x3c] sm:$0xf]
    %v1750 = vld [vmem:[#allocation19 + $0x40] sm:$0xf]
    %v1751 = vld [vmem:[#allocation19 + $0x44] sm:$0xf]
    %v1752 = vld [vmem:[#allocation19 + $0x48] sm:$0xf]
    %v1753 = vld [vmem:[#allocation19 + $0x4c] sm:$0xf]
    %v1754 = vld [vmem:[#allocation19 + $0x50] sm:$0xf]
    %v1755 = vld [vmem:[#allocation19 + $0x54] sm:$0xf]
    %v1756 = vld [vmem:[#allocation19 + $0x58] sm:$0xf]
    %v1757 = vld [vmem:[#allocation19 + $0x5c] sm:$0xf]
    %v1758 = vld [vmem:[#allocation19 + $0x60] sm:$0xf]
    %v1759 = vld [vmem:[#allocation19 + $0x64] sm:$0xf]
    %v1760 = vld [vmem:[#allocation19 + $0x68] sm:$0xf]
    %v1761 = vld [vmem:[#allocation19 + $0x6c] sm:$0xf]
    %v1762 = vld [vmem:[#allocation19 + $0x70] sm:$0xf]
    %v1763 = vld [vmem:[#allocation19 + $0x74] sm:$0xf]
    %v1764 = vld [vmem:[#allocation19 + $0x78] sm:$0xf]
    %v1765 = vld [vmem:[#allocation19 + $0x7c] sm:$0xf]
    %v1766 = vld [vmem:[#allocation20] sm:$0x1]
    %v1768 = vlaneseq
    %v1769 = vshrl.u32 %v1768, 7
    %v1770 = vsub.s32 0, %v1769
    %v1771 = vrot.slane %v1766, %v1770
    %v1805 = vunpack.c.l.b16 %v1734
    %v1806 = vunpack.c.l.b16 %v1735
    %v1807 = vunpack.c.l.b16 %v1736
    %v1808 = vunpack.c.l.b16 %v1737
    %v1809 = vunpack.c.l.b16 %v1738
    %v1810 = vunpack.c.l.b16 %v1739
    %v1811 = vunpack.c.l.b16 %v1740
    %v1812 = vunpack.c.l.b16 %v1741
    %v1813 = vunpack.c.l.b16 %v1742
    %v1814 = vunpack.c.l.b16 %v1743
    %v1815 = vunpack.c.l.b16 %v1744
    %v1816 = vunpack.c.l.b16 %v1745
    %v1817 = vunpack.c.l.b16 %v1746
    %v1818 = vunpack.c.l.b16 %v1747
    %v1819 = vunpack.c.l.b16 %v1748
    %v1820 = vunpack.c.l.b16 %v1749
    %v1821 = vunpack.c.l.b16 %v1750
    %v1822 = vunpack.c.l.b16 %v1751
    %v1823 = vunpack.c.l.b16 %v1752
    %v1824 = vunpack.c.l.b16 %v1753
    %v1825 = vunpack.c.l.b16 %v1754
    %v1826 = vunpack.c.l.b16 %v1755
    %v1827 = vunpack.c.l.b16 %v1756
    %v1828 = vunpack.c.l.b16 %v1757
    %v1829 = vunpack.c.l.b16 %v1758
    %v1830 = vunpack.c.l.b16 %v1759
    %v1831 = vunpack.c.l.b16 %v1760
    %v1832 = vunpack.c.l.b16 %v1761
    %v1833 = vunpack.c.l.b16 %v1762
    %v1834 = vunpack.c.l.b16 %v1763
    %v1835 = vunpack.c.l.b16 %v1764
    %v1836 = vunpack.c.l.b16 %v1765
    %v1837 = vpack.c.b16 %v1806, %v1805
    %v1838 = vpack.c.b16 %v1808, %v1807
    %v1839 = vpack.c.b16 %v1810, %v1809
    %v1840 = vpack.c.b16 %v1812, %v1811
    %v1841 = vpack.c.b16 %v1814, %v1813
    %v1842 = vpack.c.b16 %v1816, %v1815
    %v1843 = vpack.c.b16 %v1818, %v1817
    %v1844 = vpack.c.b16 %v1820, %v1819
    %v1845 = vpack.c.b16 %v1822, %v1821
    %v1846 = vpack.c.b16 %v1824, %v1823
    %v1847 = vpack.c.b16 %v1826, %v1825
    %v1848 = vpack.c.b16 %v1828, %v1827
    %v1849 = vpack.c.b16 %v1830, %v1829
    %v1850 = vpack.c.b16 %v1832, %v1831
    %v1851 = vpack.c.b16 %v1834, %v1833
    %v1852 = vpack.c.b16 %v1836, %v1835
    %1869 = vmatprep.subr.bf16.mxu0 0
    %1870 = vmatpush1.bf16.msra.mxu0 %v1837
    %1871 = vmatprep.subr.bf16.mxu0 0
    %1872 = vmatpush1.bf16.msra.mxu0 %v1838
    %1873 = vmatprep.subr.bf16.mxu0 0
    %1874 = vmatpush1.bf16.msra.mxu0 %v1839
    %1875 = vmatprep.subr.bf16.mxu0 0
    %1876 = vmatpush1.bf16.msra.mxu0 %v1840
    %1877 = vmatprep.subr.bf16.mxu0 0
    %1878 = vmatpush1.bf16.msra.mxu0 %v1841
    %1879 = vmatprep.subr.bf16.mxu0 0
    %1880 = vmatpush1.bf16.msra.mxu0 %v1842
    %1881 = vmatprep.subr.bf16.mxu0 0
    %1882 = vmatpush1.bf16.msra.mxu0 %v1843
    %1883 = vmatprep.subr.bf16.mxu0 0
    %1884 = vmatpush1.bf16.msra.mxu0 %v1844
    %1885 = vmatprep.subr.bf16.mxu0 0
    %1886 = vmatpush1.bf16.msra.mxu0 %v1845
    %1887 = vmatprep.subr.bf16.mxu0 0
    %1888 = vmatpush1.bf16.msra.mxu0 %v1846
    %1889 = vmatprep.subr.bf16.mxu0 0
    %1890 = vmatpush1.bf16.msra.mxu0 %v1847
    %1891 = vmatprep.subr.bf16.mxu0 0
    %1892 = vmatpush1.bf16.msra.mxu0 %v1848
    %1893 = vmatprep.subr.bf16.mxu0 0
    %1894 = vmatpush1.bf16.msra.mxu0 %v1849
    %1895 = vmatprep.subr.bf16.mxu0 0
    %1896 = vmatpush1.bf16.msra.mxu0 %v1850
    %1897 = vmatprep.subr.bf16.mxu0 0
    %1898 = vmatpush1.bf16.msra.mxu0 %v1851
    %1899 = vmatprep.subr.bf16.mxu0 0
    %1900 = vmatpush1.bf16.msra.mxu0 %v1852
    %1901 = vmatprep.mubr.bf16.mxu0 %v1731
    %1902 = vmatmul.mubr.bf16.gmra.mrb[0].mxu0 %v1730
    %v1903 = vpop.f32.mrb[0].mxu0
    %v1904 = vadd.f32 %v1771, %v1903
    %v1905 = vpop.f32.mrb[0].mxu0
    %v1906 = vpop.f32.mrb[0].mxu0
    %v1907 = vadd.f32 %v1771, %v1906
    %v1908 = vpop.f32.mrb[0].mxu0
    %1909 = vmatprep.mubr.bf16.mxu0 %v1733
    %1910 = vmatmul.mubr.bf16.gmra.mrb[0].mxu0 %v1732
    %v1911 = vpop.f32.mrb[0].mxu0
    %v1912 = vadd.f32 %v1771, %v1911
    %v1913 = vpop.f32.mrb[0].mxu0
    %v1914 = vpop.f32.mrb[0].mxu0
    %v1915 = vadd.f32 %v1771, %v1914
    %v1916 = vpop.f32.mrb[0].mxu0
    %1917 = vdwg.mxu0
    %v1918 = vadd.f32 %v1491, %v1904
    %v1919 = vadd.f32 %v1492, %v1907
    %v1920 = vadd.f32 %v1493, %v1912
    %v1921 = vadd.f32 %v1494, %v1915
    %v1922 = vld [vmem:[#allocation22] sm:$0x1]
    %v1923 = vld [vmem:[#allocation23] sm:$0x1]
    %1924 = vadd.xlane.f32.xlu0 %v1918
    %v1925 = vpop.xlane.xlu0 %1924
    %1926 = vadd.xlane.f32.xlu0 %v1919
    %v1927 = vpop.xlane.xlu0 %1926
    %1928 = vadd.xlane.f32.xlu0 %v1920
    %v1929 = vpop.xlane.xlu0 %1928
    %1930 = vadd.xlane.f32.xlu0 %v1921
    %v1931 = vpop.xlane.xlu0 %1930
    %v1932 = vmul.f32 %v1925, %v801
    %v1933 = vmul.f32 %v1927, %v801
    %v1934 = vmul.f32 %v1929, %v801
    %v1935 = vmul.f32 %v1931, %v801
    %v1936 = vsub.f32 %v1918, %v1932
    %v1937 = vsub.f32 %v1919, %v1933
    %v1938 = vsub.f32 %v1920, %v1934
    %v1939 = vsub.f32 %v1921, %v1935
    %v1940 = vmul.f32 %v1936, %v1936
    %v1941 = vmul.f32 %v1937, %v1937
    %v1942 = vmul.f32 %v1938, %v1938
    %v1943 = vmul.f32 %v1939, %v1939
    %1944 = vadd.xlane.f32.xlu0 %v1940
    %v1945 = vpop.xlane.xlu0 %1944
    %1946 = vadd.xlane.f32.xlu0 %v1941
    %v1947 = vpop.xlane.xlu0 %1946
    %1948 = vadd.xlane.f32.xlu0 %v1942
    %v1949 = vpop.xlane.xlu0 %1948
    %1950 = vadd.xlane.f32.xlu0 %v1943
    %v1951 = vpop.xlane.xlu0 %1950
    %v1952 = vmul.f32 %v1945, %v801
    %v1953 = vmul.f32 %v1947, %v801
    %v1954 = vmul.f32 %v1949, %v801
    %v1955 = vmul.f32 %v1951, %v801
    %v1956 = vadd.f32 %v1952, 1e-05
    %v1957 = vadd.f32 %v1953, 1e-05
    %v1958 = vadd.f32 %v1954, 1e-05
    %v1959 = vadd.f32 %v1955, 1e-05
    %v1960 = vrsqrt.pop %v1956
    %v1961 = vrsqrt.pop %v1957
    %v1962 = vrsqrt.pop %v1958
    %v1963 = vrsqrt.pop %v1959
    %v1964 = vmul.f32 %v1936, %v1960
    %v1965 = vmul.f32 %v1937, %v1961
    %v1966 = vmul.f32 %v1938, %v1962
    %v1967 = vmul.f32 %v1939, %v1963
    %v1969 = vlaneseq
    %v1970 = vshrl.u32 %v1969, 7
    %v1971 = vsub.s32 0, %v1970
    %v1972 = vrot.slane %v1922, %v1971
    %v1974 = vmul.f32 %v1964, %v1972
    %v1975 = vmul.f32 %v1965, %v1972
    %v1976 = vmul.f32 %v1966, %v1972
    %v1977 = vmul.f32 %v1967, %v1972
    %v1979 = vlaneseq
    %v1980 = vshrl.u32 %v1979, 7
    %v1981 = vsub.s32 0, %v1980
    %v1982 = vrot.slane %v1923, %v1981
    %v1984 = vadd.f32 %v1974, %v1982
    %v1985 = vadd.f32 %v1975, %v1982
    %v1986 = vadd.f32 %v1976, %v1982
    %v1987 = vadd.f32 %v1977, %v1982
    %v1988 = vpack.c.bf16 %v1985, %v1984
    %v1989 = vpack.c.bf16 %v1987, %v1986
    %s1990 = scalar_lea.vmem %s17, 192
    %v1991 = vld [vmem:[%s1990] sm:$0xff]
    %v1992 = vld [vmem:[%s1990 + $0x8] sm:$0xf]
    %v1993 = vld [vmem:[%s1990 + $0xc] sm:$0xff]
    %v1994 = vld [vmem:[%s1990 + $0x14] sm:$0xf]
    %v1995 = vld [vmem:[%s1990 + $0x18] sm:$0xff]
    %v1996 = vld [vmem:[%s1990 + $0x20] sm:$0xf]
    %v1997 = vld [vmem:[%s1990 + $0x24] sm:$0xff]
    %v1998 = vld [vmem:[%s1990 + $0x2c] sm:$0xf]
    %v1999 = vld [vmem:[%s1990 + $0x30] sm:$0xff]
    %v2000 = vld [vmem:[%s1990 + $0x38] sm:$0xf]
    %v2001 = vld [vmem:[%s1990 + $0x3c] sm:$0xff]
    %v2002 = vld [vmem:[%s1990 + $0x44] sm:$0xf]
    %v2003 = vld [vmem:[%s1990 + $0x48] sm:$0xff]
    %v2004 = vld [vmem:[%s1990 + $0x50] sm:$0xf]
    %v2005 = vld [vmem:[%s1990 + $0x54] sm:$0xff]
    %v2006 = vld [vmem:[%s1990 + $0x5c] sm:$0xf]
    %v2007 = vld [vmem:[%s1990 + $0x60] sm:$0xff]
    %v2008 = vld [vmem:[%s1990 + $0x68] sm:$0xf]
    %v2009 = vld [vmem:[%s1990 + $0x6c] sm:$0xff]
    %v2010 = vld [vmem:[%s1990 + $0x74] sm:$0xf]
    %v2011 = vld [vmem:[%s1990 + $0x78] sm:$0xff]
    %v2012 = vld [vmem:[%s1990 + $0x80] sm:$0xf]
    %v2013 = vld [vmem:[%s1990 + $0x84] sm:$0xff]
    %v2014 = vld [vmem:[%s1990 + $0x8c] sm:$0xf]
    %v2015 = vld [vmem:[%s1990 + $0x90] sm:$0xff]
    %v2016 = vld [vmem:[%s1990 + $0x98] sm:$0xf]
    %v2017 = vld [vmem:[%s1990 + $0x9c] sm:$0xff]
    %v2018 = vld [vmem:[%s1990 + $0xa4] sm:$0xf]
    %v2019 = vld [vmem:[%s1990 + $0xa8] sm:$0xff]
    %v2020 = vld [vmem:[%s1990 + $0xb0] sm:$0xf]
    %v2021 = vld [vmem:[%s1990 + $0xb4] sm:$0xff]
    %v2022 = vld [vmem:[%s1990 + $0xbc] sm:$0xf]
    %s2023 = scalar_lea.vmem [#allocation10], 3
    %v2024 = vld [vmem:[%s2023] sm:$0x7]
    %v2026 = vlaneseq
    %v2027 = vshrl.u32 %v2026, 7
    %v2028 = vsub.s32 0, %v2027
    %v2029 = vrot.slane %v2024, %v2028
    %v2030 = vlaneseq
    %v2031 = vshrl.u32 %v2030, 7
    %v2032 = vsub.s32 1, %v2031
    %v2033 = vrot.slane %v2024, %v2032
    %v2034 = vlaneseq
    %v2035 = vshrl.u32 %v2034, 7
    %v2036 = vsub.s32 2, %v2035
    %v2037 = vrot.slane %v2024, %v2036
    %v2073 = vunpack.c.l.b16 %v1991
    %v2074 = vunpack.c.h.b16 %v1991
    %v2075 = vunpack.c.l.b16 %v1992
    %v2076 = vunpack.c.l.b16 %v1993
    %v2077 = vunpack.c.h.b16 %v1993
    %v2078 = vunpack.c.l.b16 %v1994
    %v2079 = vunpack.c.l.b16 %v1995
    %v2080 = vunpack.c.h.b16 %v1995
    %v2081 = vunpack.c.l.b16 %v1996
    %v2082 = vunpack.c.l.b16 %v1997
    %v2083 = vunpack.c.h.b16 %v1997
    %v2084 = vunpack.c.l.b16 %v1998
    %v2085 = vunpack.c.l.b16 %v1999
    %v2086 = vunpack.c.h.b16 %v1999
    %v2087 = vunpack.c.l.b16 %v2000
    %v2088 = vunpack.c.l.b16 %v2001
    %v2089 = vunpack.c.h.b16 %v2001
    %v2090 = vunpack.c.l.b16 %v2002
    %v2091 = vunpack.c.l.b16 %v2003
    %v2092 = vunpack.c.h.b16 %v2003
    %v2093 = vunpack.c.l.b16 %v2004
    %v2094 = vunpack.c.l.b16 %v2005
    %v2095 = vunpack.c.h.b16 %v2005
    %v2096 = vunpack.c.l.b16 %v2006
    %v2097 = vunpack.c.l.b16 %v2007
    %v2098 = vunpack.c.h.b16 %v2007
    %v2099 = vunpack.c.l.b16 %v2008
    %v2100 = vunpack.c.l.b16 %v2009
    %v2101 = vunpack.c.h.b16 %v2009
    %v2102 = vunpack.c.l.b16 %v2010
    %v2103 = vunpack.c.l.b16 %v2011
    %v2104 = vunpack.c.h.b16 %v2011
    %v2105 = vunpack.c.l.b16 %v2012
    %v2106 = vunpack.c.l.b16 %v2013
    %v2107 = vunpack.c.h.b16 %v2013
    %v2108 = vunpack.c.l.b16 %v2014
    %v2109 = vunpack.c.l.b16 %v2015
    %v2110 = vunpack.c.h.b16 %v2015
    %v2111 = vunpack.c.l.b16 %v2016
    %v2112 = vunpack.c.l.b16 %v2017
    %v2113 = vunpack.c.h.b16 %v2017
    %v2114 = vunpack.c.l.b16 %v2018
    %v2115 = vunpack.c.l.b16 %v2019
    %v2116 = vunpack.c.h.b16 %v2019
    %v2117 = vunpack.c.l.b16 %v2020
    %v2118 = vunpack.c.l.b16 %v2021
    %v2119 = vunpack.c.h.b16 %v2021
    %v2120 = vunpack.c.l.b16 %v2022
    %v2121 = vpack.c.b16 %v2076, %v2073
    %v2122 = vpack.c.b16 %v2077, %v2074
    %v2123 = vpack.c.b16 %v2078, %v2075
    %v2124 = vpack.c.b16 %v2082, %v2079
    %v2125 = vpack.c.b16 %v2083, %v2080
    %v2126 = vpack.c.b16 %v2084, %v2081
    %v2127 = vpack.c.b16 %v2088, %v2085
    %v2128 = vpack.c.b16 %v2089, %v2086
    %v2129 = vpack.c.b16 %v2090, %v2087
    %v2130 = vpack.c.b16 %v2094, %v2091
    %v2131 = vpack.c.b16 %v2095, %v2092
    %v2132 = vpack.c.b16 %v2096, %v2093
    %v2133 = vpack.c.b16 %v2100, %v2097
    %v2134 = vpack.c.b16 %v2101, %v2098
    %v2135 = vpack.c.b16 %v2102, %v2099
    %v2136 = vpack.c.b16 %v2106, %v2103
    %v2137 = vpack.c.b16 %v2107, %v2104
    %v2138 = vpack.c.b16 %v2108, %v2105
    %v2139 = vpack.c.b16 %v2112, %v2109
    %v2140 = vpack.c.b16 %v2113, %v2110
    %v2141 = vpack.c.b16 %v2114, %v2111
    %v2142 = vpack.c.b16 %v2118, %v2115
    %v2143 = vpack.c.b16 %v2119, %v2116
    %v2144 = vpack.c.b16 %v2120, %v2117
    %2169 = vmatprep.subr.bf16.mxu0 %v2122
    %2170 = vmatpush1.bf16.msra.mxu0 %v2121
    %2171 = vmatprep.subr.bf16.mxu0 %v2125
    %2172 = vmatpush1.bf16.msra.mxu0 %v2124
    %2173 = vmatprep.subr.bf16.mxu0 %v2128
    %2174 = vmatpush1.bf16.msra.mxu0 %v2127
    %2175 = vmatprep.subr.bf16.mxu0 %v2131
    %2176 = vmatpush1.bf16.msra.mxu0 %v2130
    %2177 = vmatprep.subr.bf16.mxu0 %v2134
    %2178 = vmatpush1.bf16.msra.mxu0 %v2133
    %2179 = vmatprep.subr.bf16.mxu0 %v2137
    %2180 = vmatpush1.bf16.msra.mxu0 %v2136
    %2181 = vmatprep.subr.bf16.mxu0 %v2140
    %2182 = vmatpush1.bf16.msra.mxu0 %v2139
    %2183 = vmatprep.subr.bf16.mxu0 %v2143
    %2184 = vmatpush1.bf16.msra.mxu0 %v2142
    %2185 = vmatprep.subr.bf16.mxu0 0
    %2186 = vmatpush1.bf16.msra.mxu0 0
    %2187 = vmatprep.subr.bf16.mxu0 0
    %2188 = vmatpush1.bf16.msra.mxu0 0
    %2189 = vmatprep.subr.bf16.mxu0 0
    %2190 = vmatpush1.bf16.msra.mxu0 0
    %2191 = vmatprep.subr.bf16.mxu0 0
    %2192 = vmatpush1.bf16.msra.mxu0 0
    %2193 = vmatprep.subr.bf16.mxu0 0
    %2194 = vmatpush1.bf16.msra.mxu0 0
    %2195 = vmatprep.subr.bf16.mxu0 0
    %2196 = vmatpush1.bf16.msra.mxu0 0
    %2197 = vmatprep.subr.bf16.mxu0 0
    %2198 = vmatpush1.bf16.msra.mxu0 0
    %2199 = vmatprep.subr.bf16.mxu0 0
    %2200 = vmatpush1.bf16.msra.mxu0 0
    %2201 = vmatprep.mubr.bf16.mxu0 0
    %2202 = vmatmul.mubr.bf16.gmra.mrb[0].mxu0 %v1988
    %v2203 = vpop.f32.mrb[0].mxu0
    %v2204 = vadd.f32 %v2029, %v2203
    %v2205 = vpop.f32.mrb[0].mxu0
    %v2206 = vadd.f32 %v2033, %v2205
    %v2207 = vpop.f32.mrb[0].mxu0
    %v2208 = vadd.f32 %v2029, %v2207
    %v2209 = vpop.f32.mrb[0].mxu0
    %v2210 = vadd.f32 %v2033, %v2209
    %2211 = vmatprep.mubr.bf16.mxu0 0
    %2212 = vmatmul.mubr.bf16.gmra.mrb[0].mxu0 %v1989
    %v2213 = vpop.f32.mrb[0].mxu0
    %v2214 = vadd.f32 %v2029, %v2213
    %v2215 = vpop.f32.mrb[0].mxu0
    %v2216 = vadd.f32 %v2033, %v2215
    %v2217 = vpop.f32.mrb[0].mxu0
    %v2218 = vadd.f32 %v2029, %v2217
    %v2219 = vpop.f32.mrb[0].mxu0
    %v2220 = vadd.f32 %v2033, %v2219
    %2221 = vdwg.mxu0
    %2222 = vmatprep.subr.bf16.mxu0 0
    %2223 = vmatpush1.bf16.msra.mxu0 %v2123
    %2224 = vmatprep.subr.bf16.mxu0 0
    %2225 = vmatpush1.bf16.msra.mxu0 %v2126
    %2226 = vmatprep.subr.bf16.mxu0 0
    %2227 = vmatpush1.bf16.msra.mxu0 %v2129
    %2228 = vmatprep.subr.bf16.mxu0 0
    %2229 = vmatpush1.bf16.msra.mxu0 %v2132
    %2230 = vmatprep.subr.bf16.mxu0 0
    %2231 = vmatpush1.bf16.msra.mxu0 %v2135
    %2232 = vmatprep.subr.bf16.mxu0 0
    %2233 = vmatpush1.bf16.msra.mxu0 %v2138
    %2234 = vmatprep.subr.bf16.mxu0 0
    %2235 = vmatpush1.bf16.msra.mxu0 %v2141
    %2236 = vmatprep.subr.bf16.mxu0 0
    %2237 = vmatpush1.bf16.msra.mxu0 %v2144
    %2238 = vmatprep.subr.bf16.mxu0 0
    %2239 = vmatpush1.bf16.msra.mxu0 0
    %2240 = vmatprep.subr.bf16.mxu0 0
    %2241 = vmatpush1.bf16.msra.mxu0 0
    %2242 = vmatprep.subr.bf16.mxu0 0
    %2243 = vmatpush1.bf16.msra.mxu0 0
    %2244 = vmatprep.subr.bf16.mxu0 0
    %2245 = vmatpush1.bf16.msra.mxu0 0
    %2246 = vmatprep.subr.bf16.mxu0 0
    %2247 = vmatpush1.bf16.msra.mxu0 0
    %2248 = vmatprep.subr.bf16.mxu0 0
    %2249 = vmatpush1.bf16.msra.mxu0 0
    %2250 = vmatprep.subr.bf16.mxu0 0
    %2251 = vmatpush1.bf16.msra.mxu0 0
    %2252 = vmatprep.subr.bf16.mxu0 0
    %2253 = vmatpush1.bf16.msra.mxu0 0
    %2254 = vmatprep.mubr.bf16.mxu0 0
    %2255 = vmatmul.mubr.bf16.gmra.mrb[0].mxu0 %v1988
    %v2256 = vpop.f32.mrb[0].mxu0
    %v2257 = vadd.f32 %v2037, %v2256
    %v2258 = vpop.f32.mrb[0].mxu0
    %v2259 = vpop.f32.mrb[0].mxu0
    %v2260 = vadd.f32 %v2037, %v2259
    %v2261 = vpop.f32.mrb[0].mxu0
    %2262 = vmatprep.mubr.bf16.mxu0 0
    %2263 = vmatmul.mubr.bf16.gmra.mrb[0].mxu0 %v1989
    %v2264 = vpop.f32.mrb[0].mxu0
    %v2265 = vadd.f32 %v2037, %v2264
    %v2266 = vpop.f32.mrb[0].mxu0
    %v2267 = vpop.f32.mrb[0].mxu0
    %v2268 = vadd.f32 %v2037, %v2267
    %v2269 = vpop.f32.mrb[0].mxu0
    %2270 = vdwg.mxu0
    %v2271 = vpack.c.bf16 %v2208, %v2204
    %v2272 = vpack.c.bf16 %v2218, %v2214
    %v2273 = vpack.c.bf16 %v2210, %v2206
    %v2274 = vpack.c.bf16 %v2220, %v2216
    %v2275 = vpack.c.bf16 %v2260, %v2257
    %v2276 = vpack.c.bf16 %v2268, %v2265
    %2277 = vmatprep.subr.bf16.mxu0 0
    %2278 = vmatpush1.bf16.xpose.msra.mxu0 %v2273
    %2279 = vmatprep.subr.bf16.mxu0 0
    %2280 = vmatpush1.bf16.xpose.msra.mxu0 %v2274
    %2281 = vmatprep.subr.bf16.mxu0 0
    %2282 = vmatpush1.bf16.xpose.msra.mxu0 0
    %2283 = vmatprep.subr.bf16.mxu0 0
    %2284 = vmatpush1.bf16.xpose.msra.mxu0 0
    %2285 = vmatprep.subr.bf16.mxu0 0
    %2286 = vmatpush1.bf16.xpose.msra.mxu0 0
    %2287 = vmatprep.subr.bf16.mxu0 0
    %2288 = vmatpush1.bf16.xpose.msra.mxu0 0
    %2289 = vmatprep.subr.bf16.mxu0 0
    %2290 = vmatpush1.bf16.xpose.msra.mxu0 0
    %2291 = vmatprep.subr.bf16.mxu0 0
    %2292 = vmatpush1.bf16.xpose.msra.mxu0 0
    %2293 = vmatprep.subr.bf16.mxu0 0
    %2294 = vmatpush1.bf16.xpose.msra.mxu0 0
    %2295 = vmatprep.subr.bf16.mxu0 0
    %2296 = vmatpush1.bf16.xpose.msra.mxu0 0
    %2297 = vmatprep.subr.bf16.mxu0 0
    %2298 = vmatpush1.bf16.xpose.msra.mxu0 0
    %2299 = vmatprep.subr.bf16.mxu0 0
    %2300 = vmatpush1.bf16.xpose.msra.mxu0 0
    %2301 = vmatprep.subr.bf16.mxu0 0
    %2302 = vmatpush1.bf16.xpose.msra.mxu0 0
    %2303 = vmatprep.subr.bf16.mxu0 0
    %2304 = vmatpush1.bf16.xpose.msra.mxu0 0
    %2305 = vmatprep.subr.bf16.mxu0 0
    %2306 = vmatpush1.bf16.xpose.msra.mxu0 0
    %2307 = vmatprep.subr.bf16.mxu0 0
    %2308 = vmatpush1.bf16.xpose.msra.mxu0 0
    %2309 = vmatprep.mubr.bf16.mxu0 0
    %2310 = vmatmul.mubr.bf16.gmra.mrb[0].mxu0 %v2271
    %v2311 = vpop.f32.mrb[0].mxu0
    %v2312 = vadd.f32 %v862, %v2311
    %v2313 = vpop.f32.mrb[0].mxu0
    %v2314 = vpop.f32.mrb[0].mxu0
    %v2315 = vadd.f32 %v863, %v2314
    %v2316 = vpop.f32.mrb[0].mxu0
    %2317 = vmatprep.mubr.bf16.mxu0 0
    %2318 = vmatmul.mubr.bf16.gmra.mrb[0].mxu0 %v2272
    %v2319 = vpop.f32.mrb[0].mxu0
    %v2320 = vadd.f32 %v864, %v2319
    %v2321 = vpop.f32.mrb[0].mxu0
    %v2322 = vpop.f32.mrb[0].mxu0
    %v2323 = vadd.f32 %v865, %v2322
    %v2324 = vpop.f32.mrb[0].mxu0
    %2325 = vdwg.mxu0
    %v2326 = vsel %vm667, %v2312, -inf
    %2327 = vmax.xlane.f32.xlu0 %v2326
    %v2328 = vpop.xlane.xlu0 %2327
    %v2329 = vsel %vm667, %v2315, -inf
    %2330 = vmax.xlane.f32.xlu0 %v2329
    %v2331 = vpop.xlane.xlu0 %2330
    %v2332 = vsel %vm667, %v2320, -inf
    %2333 = vmax.xlane.f32.xlu0 %v2332
    %v2334 = vpop.xlane.xlu0 %2333
    %v2335 = vsel %vm667, %v2323, -inf
    %2336 = vmax.xlane.f32.xlu0 %v2335
    %v2337 = vpop.xlane.xlu0 %2336
    %v2338 = vsub.f32 %v2312, %v2328
    %v2339 = vsub.f32 %v2315, %v2331
    %v2340 = vsub.f32 %v2320, %v2334
    %v2341 = vsub.f32 %v2323, %v2337
    %v2342 = vmul.f32 %v2338, 1.442695
    %v2343 = vpow.pop %v2342
    %v2344 = vmul.f32 %v2339, 1.442695
    %v2345 = vpow.pop %v2344
    %v2346 = vmul.f32 %v2340, 1.442695
    %v2347 = vpow.pop %v2346
    %v2348 = vmul.f32 %v2341, 1.442695
    %v2349 = vpow.pop %v2348
    %v2350 = vsel %vm667, %v2343, 0.0
    %2351 = vadd.xlane.f32.xlu0 %v2350
    %v2352 = vpop.xlane.xlu0 %2351
    %v2353 = vsel %vm667, %v2345, 0.0
    %2354 = vadd.xlane.f32.xlu0 %v2353
    %v2355 = vpop.xlane.xlu0 %2354
    %v2356 = vsel %vm667, %v2347, 0.0
    %2357 = vadd.xlane.f32.xlu0 %v2356
    %v2358 = vpop.xlane.xlu0 %2357
    %v2359 = vsel %vm667, %v2349, 0.0
    %2360 = vadd.xlane.f32.xlu0 %v2359
    %v2361 = vpop.xlane.xlu0 %2360
    %v2362 = vrcp.pop %v2352
    %v2363 = vrcp.pop %v2355
    %v2364 = vrcp.pop %v2358
    %v2365 = vrcp.pop %v2361
    %v2366 = vmul.f32 %v2343, %v2362
    %v2367 = vmul.f32 %v2345, %v2363
    %v2368 = vmul.f32 %v2347, %v2364
    %v2369 = vmul.f32 %v2349, %v2365
    %v2370 = vpack.c.bf16 %v2367, %v2366
    %v2371 = vpack.c.bf16 %v2369, %v2368
    %v2373 = vsel %vm667, %v2370, 0
    %v2376 = vsel %vm667, %v2371, 0
    %2378 = vmatprep.subr.bf16.mxu0 0
    %2379 = vmatpush1.bf16.msra.mxu0 %v2275
    %2380 = vmatprep.subr.bf16.mxu0 0
    %2381 = vmatpush1.bf16.msra.mxu0 %v2276
    %2382 = vmatprep.subr.bf16.mxu0 0
    %2383 = vmatpush1.bf16.msra.mxu0 0
    %2384 = vmatprep.subr.bf16.mxu0 0
    %2385 = vmatpush1.bf16.msra.mxu0 0
    %2386 = vmatprep.subr.bf16.mxu0 0
    %2387 = vmatpush1.bf16.msra.mxu0 0
    %2388 = vmatprep.subr.bf16.mxu0 0
    %2389 = vmatpush1.bf16.msra.mxu0 0
    %2390 = vmatprep.subr.bf16.mxu0 0
    %2391 = vmatpush1.bf16.msra.mxu0 0
    %2392 = vmatprep.subr.bf16.mxu0 0
    %2393 = vmatpush1.bf16.msra.mxu0 0
    %2394 = vmatprep.subr.bf16.mxu0 0
    %2395 = vmatpush1.bf16.msra.mxu0 0
    %2396 = vmatprep.subr.bf16.mxu0 0
    %2397 = vmatpush1.bf16.msra.mxu0 0
    %2398 = vmatprep.subr.bf16.mxu0 0
    %2399 = vmatpush1.bf16.msra.mxu0 0
    %2400 = vmatprep.subr.bf16.mxu0 0
    %2401 = vmatpush1.bf16.msra.mxu0 0
    %2402 = vmatprep.subr.bf16.mxu0 0
    %2403 = vmatpush1.bf16.msra.mxu0 0
    %2404 = vmatprep.subr.bf16.mxu0 0
    %2405 = vmatpush1.bf16.msra.mxu0 0
    %2406 = vmatprep.subr.bf16.mxu0 0
    %2407 = vmatpush1.bf16.msra.mxu0 0
    %2408 = vmatprep.subr.bf16.mxu0 0
    %2409 = vmatpush1.bf16.msra.mxu0 0
    %2410 = vmatprep.mubr.bf16.mxu0 0
    %2411 = vmatmul.mubr.bf16.gmra.mrb[0].mxu0 %v2373
    %v2412 = vpop.f32.mrb[0].mxu0
    %v2413 = vadd.f32 0.0, %v2412
    %v2414 = vpop.f32.mrb[0].mxu0
    %v2415 = vpop.f32.mrb[0].mxu0
    %v2416 = vadd.f32 0.0, %v2415
    %v2417 = vpop.f32.mrb[0].mxu0
    %2418 = vmatprep.mubr.bf16.mxu0 0
    %2419 = vmatmul.mubr.bf16.gmra.mrb[0].mxu0 %v2376
    %v2420 = vpop.f32.mrb[0].mxu0
    %v2421 = vadd.f32 0.0, %v2420
    %v2422 = vpop.f32.mrb[0].mxu0
    %v2423 = vpop.f32.mrb[0].mxu0
    %v2424 = vadd.f32 0.0, %v2423
    %v2425 = vpop.f32.mrb[0].mxu0
    %2426 = vdwg.mxu0
    %v2427 = vpack.c.bf16 %v2416, %v2413
    %v2428 = vpack.c.bf16 %v2424, %v2421
    %s2429 = scalar_lea.vmem [#allocation11], 64
    %v2430 = vld [vmem:[%s2429] sm:$0xf]
    %v2431 = vld [vmem:[%s2429 + $0x4] sm:$0xf]
    %v2432 = vld [vmem:[%s2429 + $0x8] sm:$0xf]
    %v2433 = vld [vmem:[%s2429 + $0xc] sm:$0xf]
    %v2434 = vld [vmem:[%s2429 + $0x10] sm:$0xf]
    %v2435 = vld [vmem:[%s2429 + $0x14] sm:$0xf]
    %v2436 = vld [vmem:[%s2429 + $0x18] sm:$0xf]
    %v2437 = vld [vmem:[%s2429 + $0x1c] sm:$0xf]
    %v2438 = vld [vmem:[%s2429 + $0x20] sm:$0xf]
    %v2439 = vld [vmem:[%s2429 + $0x24] sm:$0xf]
    %v2440 = vld [vmem:[%s2429 + $0x28] sm:$0xf]
    %v2441 = vld [vmem:[%s2429 + $0x2c] sm:$0xf]
    %v2442 = vld [vmem:[%s2429 + $0x30] sm:$0xf]
    %v2443 = vld [vmem:[%s2429 + $0x34] sm:$0xf]
    %v2444 = vld [vmem:[%s2429 + $0x38] sm:$0xf]
    %v2445 = vld [vmem:[%s2429 + $0x3c] sm:$0xf]
    %s2446 = scalar_lea.vmem %s23, 1
    %v2447 = vld [vmem:[%s2446] sm:$0x1]
    %v2449 = vlaneseq
    %v2450 = vshrl.u32 %v2449, 7
    %v2451 = vsub.s32 0, %v2450
    %v2452 = vrot.slane %v2447, %v2451
    %v2470 = vunpack.c.l.b16 %v2430
    %v2471 = vunpack.c.l.b16 %v2431
    %v2472 = vunpack.c.l.b16 %v2432
    %v2473 = vunpack.c.l.b16 %v2433
    %v2474 = vunpack.c.l.b16 %v2434
    %v2475 = vunpack.c.l.b16 %v2435
    %v2476 = vunpack.c.l.b16 %v2436
    %v2477 = vunpack.c.l.b16 %v2437
    %v2478 = vunpack.c.l.b16 %v2438
    %v2479 = vunpack.c.l.b16 %v2439
    %v2480 = vunpack.c.l.b16 %v2440
    %v2481 = vunpack.c.l.b16 %v2441
    %v2482 = vunpack.c.l.b16 %v2442
    %v2483 = vunpack.c.l.b16 %v2443
    %v2484 = vunpack.c.l.b16 %v2444
    %v2485 = vunpack.c.l.b16 %v2445
    %v2486 = vpack.c.b16 %v2471, %v2470
    %v2487 = vpack.c.b16 %v2473, %v2472
    %v2488 = vpack.c.b16 %v2475, %v2474
    %v2489 = vpack.c.b16 %v2477, %v2476
    %v2490 = vpack.c.b16 %v2479, %v2478
    %v2491 = vpack.c.b16 %v2481, %v2480
    %v2492 = vpack.c.b16 %v2483, %v2482
    %v2493 = vpack.c.b16 %v2485, %v2484
    %2502 = vmatprep.subr.bf16.mxu0 0
    %2503 = vmatpush1.bf16.msra.mxu0 %v2486
    %2504 = vmatprep.subr.bf16.mxu0 0
    %2505 = vmatpush1.bf16.msra.mxu0 %v2487
    %2506 = vmatprep.subr.bf16.mxu0 0
    %2507 = vmatpush1.bf16.msra.mxu0 %v2488
    %2508 = vmatprep.subr.bf16.mxu0 0
    %2509 = vmatpush1.bf16.msra.mxu0 %v2489
    %2510 = vmatprep.subr.bf16.mxu0 0
    %2511 = vmatpush1.bf16.msra.mxu0 %v2490
    %2512 = vmatprep.subr.bf16.mxu0 0
    %2513 = vmatpush1.bf16.msra.mxu0 %v2491
    %2514 = vmatprep.subr.bf16.mxu0 0
    %2515 = vmatpush1.bf16.msra.mxu0 %v2492
    %2516 = vmatprep.subr.bf16.mxu0 0
    %2517 = vmatpush1.bf16.msra.mxu0 %v2493
    %2518 = vmatprep.subr.bf16.mxu0 0
    %2519 = vmatpush1.bf16.msra.mxu0 0
    %2520 = vmatprep.subr.bf16.mxu0 0
    %2521 = vmatpush1.bf16.msra.mxu0 0
    %2522 = vmatprep.subr.bf16.mxu0 0
    %2523 = vmatpush1.bf16.msra.mxu0 0
    %2524 = vmatprep.subr.bf16.mxu0 0
    %2525 = vmatpush1.bf16.msra.mxu0 0
    %2526 = vmatprep.subr.bf16.mxu0 0
    %2527 = vmatpush1.bf16.msra.mxu0 0
    %2528 = vmatprep.subr.bf16.mxu0 0
    %2529 = vmatpush1.bf16.msra.mxu0 0
    %2530 = vmatprep.subr.bf16.mxu0 0
    %2531 = vmatpush1.bf16.msra.mxu0 0
    %2532 = vmatprep.subr.bf16.mxu0 0
    %2533 = vmatpush1.bf16.msra.mxu0 0
    %2534 = vmatprep.mubr.bf16.mxu0 0
    %2535 = vmatmul.mubr.bf16.gmra.mrb[0].mxu0 %v2427
    %v2536 = vpop.f32.mrb[0].mxu0
    %v2537 = vadd.f32 %v2452, %v2536
    %v2538 = vpop.f32.mrb[0].mxu0
    %v2539 = vpop.f32.mrb[0].mxu0
    %v2540 = vadd.f32 %v2452, %v2539
    %v2541 = vpop.f32.mrb[0].mxu0
    %2542 = vmatprep.mubr.bf16.mxu0 0
    %2543 = vmatmul.mubr.bf16.gmra.mrb[0].mxu0 %v2428
    %v2544 = vpop.f32.mrb[0].mxu0
    %v2545 = vadd.f32 %v2452, %v2544
    %v2546 = vpop.f32.mrb[0].mxu0
    %v2547 = vpop.f32.mrb[0].mxu0
    %v2548 = vadd.f32 %v2452, %v2547
    %v2549 = vpop.f32.mrb[0].mxu0
    %2550 = vdwg.mxu0
    %v2551 = vadd.f32 %v1984, %v2537
    %v2552 = vadd.f32 %v1985, %v2540
    %v2553 = vadd.f32 %v1986, %v2545
    %v2554 = vadd.f32 %v1987, %v2548
    %s2555 = scalar_lea.vmem [#allocation13], 1
    %v2556 = vld [vmem:[%s2555] sm:$0x1]
    %s2557 = scalar_lea.vmem [#allocation14], 1
    %v2558 = vld [vmem:[%s2557] sm:$0x1]
    %2559 = vadd.xlane.f32.xlu0 %v2551
    %v2560 = vpop.xlane.xlu0 %2559
    %2561 = vadd.xlane.f32.xlu0 %v2552
    %v2562 = vpop.xlane.xlu0 %2561
    %2563 = vadd.xlane.f32.xlu0 %v2553
    %v2564 = vpop.xlane.xlu0 %2563
    %2565 = vadd.xlane.f32.xlu0 %v2554
    %v2566 = vpop.xlane.xlu0 %2565
    %v2567 = vmul.f32 %v2560, %v801
    %v2568 = vmul.f32 %v2562, %v801
    %v2569 = vmul.f32 %v2564, %v801
    %v2570 = vmul.f32 %v2566, %v801
    %v2571 = vsub.f32 %v2551, %v2567
    %v2572 = vsub.f32 %v2552, %v2568
    %v2573 = vsub.f32 %v2553, %v2569
    %v2574 = vsub.f32 %v2554, %v2570
    %v2575 = vmul.f32 %v2571, %v2571
    %v2576 = vmul.f32 %v2572, %v2572
    %v2577 = vmul.f32 %v2573, %v2573
    %v2578 = vmul.f32 %v2574, %v2574
    %2579 = vadd.xlane.f32.xlu0 %v2575
    %v2580 = vpop.xlane.xlu0 %2579
    %2581 = vadd.xlane.f32.xlu0 %v2576
    %v2582 = vpop.xlane.xlu0 %2581
    %2583 = vadd.xlane.f32.xlu0 %v2577
    %v2584 = vpop.xlane.xlu0 %2583
    %2585 = vadd.xlane.f32.xlu0 %v2578
    %v2586 = vpop.xlane.xlu0 %2585
    %v2587 = vmul.f32 %v2580, %v801
    %v2588 = vmul.f32 %v2582, %v801
    %v2589 = vmul.f32 %v2584, %v801
    %v2590 = vmul.f32 %v2586, %v801
    %v2591 = vadd.f32 %v2587, 1e-05
    %v2592 = vadd.f32 %v2588, 1e-05
    %v2593 = vadd.f32 %v2589, 1e-05
    %v2594 = vadd.f32 %v2590, 1e-05
    %v2595 = vrsqrt.pop %v2591
    %v2596 = vrsqrt.pop %v2592
    %v2597 = vrsqrt.pop %v2593
    %v2598 = vrsqrt.pop %v2594
    %v2599 = vmul.f32 %v2571, %v2595
    %v2600 = vmul.f32 %v2572, %v2596
    %v2601 = vmul.f32 %v2573, %v2597
    %v2602 = vmul.f32 %v2574, %v2598
    %v2604 = vlaneseq
    %v2605 = vshrl.u32 %v2604, 7
    %v2606 = vsub.s32 0, %v2605
    %v2607 = vrot.slane %v2556, %v2606
    %v2609 = vmul.f32 %v2599, %v2607
    %v2610 = vmul.f32 %v2600, %v2607
    %v2611 = vmul.f32 %v2601, %v2607
    %v2612 = vmul.f32 %v2602, %v2607
    %v2614 = vlaneseq
    %v2615 = vshrl.u32 %v2614, 7
    %v2616 = vsub.s32 0, %v2615
    %v2617 = vrot.slane %v2558, %v2616
    %v2619 = vadd.f32 %v2609, %v2617
    %v2620 = vadd.f32 %v2610, %v2617
    %v2621 = vadd.f32 %v2611, %v2617
    %v2622 = vadd.f32 %v2612, %v2617
    %v2623 = vpack.c.bf16 %v2620, %v2619
    %v2624 = vpack.c.bf16 %v2622, %v2621
    %s2625 = scalar_lea.vmem [#allocation16], 128
    %v2626 = vld [vmem:[%s2625] sm:$0xff]
    %v2627 = vld [vmem:[%s2625 + $0x8] sm:$0xff]
    %v2628 = vld [vmem:[%s2625 + $0x10] sm:$0xff]
    %v2629 = vld [vmem:[%s2625 + $0x18] sm:$0xff]
    %v2630 = vld [vmem:[%s2625 + $0x20] sm:$0xff]
    %v2631 = vld [vmem:[%s2625 + $0x28] sm:$0xff]
    %v2632 = vld [vmem:[%s2625 + $0x30] sm:$0xff]
    %v2633 = vld [vmem:[%s2625 + $0x38] sm:$0xff]
    %v2634 = vld [vmem:[%s2625 + $0x40] sm:$0xff]
    %v2635 = vld [vmem:[%s2625 + $0x48] sm:$0xff]
    %v2636 = vld [vmem:[%s2625 + $0x50] sm:$0xff]
    %v2637 = vld [vmem:[%s2625 + $0x58] sm:$0xff]
    %v2638 = vld [vmem:[%s2625 + $0x60] sm:$0xff]
    %v2639 = vld [vmem:[%s2625 + $0x68] sm:$0xff]
    %v2640 = vld [vmem:[%s2625 + $0x70] sm:$0xff]
    %v2641 = vld [vmem:[%s2625 + $0x78] sm:$0xff]
    %s2642 = scalar_lea.vmem [#allocation17], 2
    %v2643 = vld [vmem:[%s2642] sm:$0x3]
    %v2645 = vlaneseq
    %v2646 = vshrl.u32 %v2645, 7
    %v2647 = vsub.s32 0, %v2646
    %v2648 = vrot.slane %v2643, %v2647
    %v2649 = vlaneseq
    %v2650 = vshrl.u32 %v2649, 7
    %v2651 = vsub.s32 1, %v2650
    %v2652 = vrot.slane %v2643, %v2651
    %v2671 = vunpack.c.l.b16 %v2626
    %v2672 = vunpack.c.h.b16 %v2626
    %v2673 = vunpack.c.l.b16 %v2627
    %v2674 = vunpack.c.h.b16 %v2627
    %v2675 = vunpack.c.l.b16 %v2628
    %v2676 = vunpack.c.h.b16 %v2628
    %v2677 = vunpack.c.l.b16 %v2629
    %v2678 = vunpack.c.h.b16 %v2629
    %v2679 = vunpack.c.l.b16 %v2630
    %v2680 = vunpack.c.h.b16 %v2630
    %v2681 = vunpack.c.l.b16 %v2631
    %v2682 = vunpack.c.h.b16 %v2631
    %v2683 = vunpack.c.l.b16 %v2632
    %v2684 = vunpack.c.h.b16 %v2632
    %v2685 = vunpack.c.l.b16 %v2633
    %v2686 = vunpack.c.h.b16 %v2633
    %v2687 = vunpack.c.l.b16 %v2634
    %v2688 = vunpack.c.h.b16 %v2634
    %v2689 = vunpack.c.l.b16 %v2635
    %v2690 = vunpack.c.h.b16 %v2635
    %v2691 = vunpack.c.l.b16 %v2636
    %v2692 = vunpack.c.h.b16 %v2636
    %v2693 = vunpack.c.l.b16 %v2637
    %v2694 = vunpack.c.h.b16 %v2637
    %v2695 = vunpack.c.l.b16 %v2638
    %v2696 = vunpack.c.h.b16 %v2638
    %v2697 = vunpack.c.l.b16 %v2639
    %v2698 = vunpack.c.h.b16 %v2639
    %v2699 = vunpack.c.l.b16 %v2640
    %v2700 = vunpack.c.h.b16 %v2640
    %v2701 = vunpack.c.l.b16 %v2641
    %v2702 = vunpack.c.h.b16 %v2641
    %v2703 = vpack.c.b16 %v2673, %v2671
    %v2704 = vpack.c.b16 %v2674, %v2672
    %v2705 = vpack.c.b16 %v2677, %v2675
    %v2706 = vpack.c.b16 %v2678, %v2676
    %v2707 = vpack.c.b16 %v2681, %v2679
    %v2708 = vpack.c.b16 %v2682, %v2680
    %v2709 = vpack.c.b16 %v2685, %v2683
    %v2710 = vpack.c.b16 %v2686, %v2684
    %v2711 = vpack.c.b16 %v2689, %v2687
    %v2712 = vpack.c.b16 %v2690, %v2688
    %v2713 = vpack.c.b16 %v2693, %v2691
    %v2714 = vpack.c.b16 %v2694, %v2692
    %v2715 = vpack.c.b16 %v2697, %v2695
    %v2716 = vpack.c.b16 %v2698, %v2696
    %v2717 = vpack.c.b16 %v2701, %v2699
    %v2718 = vpack.c.b16 %v2702, %v2700
    %2735 = vmatprep.subr.bf16.mxu0 %v2704
    %2736 = vmatpush1.bf16.msra.mxu0 %v2703
    %2737 = vmatprep.subr.bf16.mxu0 %v2706
    %2738 = vmatpush1.bf16.msra.mxu0 %v2705
    %2739 = vmatprep.subr.bf16.mxu0 %v2708
    %2740 = vmatpush1.bf16.msra.mxu0 %v2707
    %2741 = vmatprep.subr.bf16.mxu0 %v2710
    %2742 = vmatpush1.bf16.msra.mxu0 %v2709
    %2743 = vmatprep.subr.bf16.mxu0 %v2712
    %2744 = vmatpush1.bf16.msra.mxu0 %v2711
    %2745 = vmatprep.subr.bf16.mxu0 %v2714
    %2746 = vmatpush1.bf16.msra.mxu0 %v2713
    %2747 = vmatprep.subr.bf16.mxu0 %v2716
    %2748 = vmatpush1.bf16.msra.mxu0 %v2715
    %2749 = vmatprep.subr.bf16.mxu0 %v2718
    %2750 = vmatpush1.bf16.msra.mxu0 %v2717
    %2751 = vmatprep.subr.bf16.mxu0 0
    %2752 = vmatpush1.bf16.msra.mxu0 0
    %2753 = vmatprep.subr.bf16.mxu0 0
    %2754 = vmatpush1.bf16.msra.mxu0 0
    %2755 = vmatprep.subr.bf16.mxu0 0
    %2756 = vmatpush1.bf16.msra.mxu0 0
    %2757 = vmatprep.subr.bf16.mxu0 0
    %2758 = vmatpush1.bf16.msra.mxu0 0
    %2759 = vmatprep.subr.bf16.mxu0 0
    %2760 = vmatpush1.bf16.msra.mxu0 0
    %2761 = vmatprep.subr.bf16.mxu0 0
    %2762 = vmatpush1.bf16.msra.mxu0 0
    %2763 = vmatprep.subr.bf16.mxu0 0
    %2764 = vmatpush1.bf16.msra.mxu0 0
    %2765 = vmatprep.subr.bf16.mxu0 0
    %2766 = vmatpush1.bf16.msra.mxu0 0
    %2767 = vmatprep.mubr.bf16.mxu0 0
    %2768 = vmatmul.mubr.bf16.gmra.mrb[0].mxu0 %v2623
    %v2769 = vpop.f32.mrb[0].mxu0
    %v2770 = vadd.f32 %v2648, %v2769
    %v2771 = vpop.f32.mrb[0].mxu0
    %v2772 = vadd.f32 %v2652, %v2771
    %v2773 = vpop.f32.mrb[0].mxu0
    %v2774 = vadd.f32 %v2648, %v2773
    %v2775 = vpop.f32.mrb[0].mxu0
    %v2776 = vadd.f32 %v2652, %v2775
    %2777 = vmatprep.mubr.bf16.mxu0 0
    %2778 = vmatmul.mubr.bf16.gmra.mrb[0].mxu0 %v2624
    %v2779 = vpop.f32.mrb[0].mxu0
    %v2780 = vadd.f32 %v2648, %v2779
    %v2781 = vpop.f32.mrb[0].mxu0
    %v2782 = vadd.f32 %v2652, %v2781
    %v2783 = vpop.f32.mrb[0].mxu0
    %v2784 = vadd.f32 %v2648, %v2783
    %v2785 = vpop.f32.mrb[0].mxu0
    %v2786 = vadd.f32 %v2652, %v2785
    %2787 = vdwg.mxu0
    %v2788 = vmul.f32 %v2770, %v2770
    %v2789 = vmul.f32 %v2772, %v2772
    %v2790 = vmul.f32 %v2774, %v2774
    %v2791 = vmul.f32 %v2776, %v2776
    %v2792 = vmul.f32 %v2780, %v2780
    %v2793 = vmul.f32 %v2782, %v2782
    %v2794 = vmul.f32 %v2784, %v2784
    %v2795 = vmul.f32 %v2786, %v2786
    %v2796 = vmul.f32 %v2770, %v2788
    %v2797 = vmul.f32 %v2772, %v2789
    %v2798 = vmul.f32 %v2774, %v2790
    %v2799 = vmul.f32 %v2776, %v2791
    %v2800 = vmul.f32 %v2780, %v2792
    %v2801 = vmul.f32 %v2782, %v2793
    %v2802 = vmul.f32 %v2784, %v2794
    %v2803 = vmul.f32 %v2786, %v2795
    %v2804 = vmul.f32 %v2796, 0.044715
    %v2805 = vmul.f32 %v2797, 0.044715
    %v2806 = vmul.f32 %v2798, 0.044715
    %v2807 = vmul.f32 %v2799, 0.044715
    %v2808 = vmul.f32 %v2800, 0.044715
    %v2809 = vmul.f32 %v2801, 0.044715
    %v2810 = vmul.f32 %v2802, 0.044715
    %v2811 = vmul.f32 %v2803, 0.044715
    %v2812 = vadd.f32 %v2770, %v2804
    %v2813 = vadd.f32 %v2772, %v2805
    %v2814 = vadd.f32 %v2774, %v2806
    %v2815 = vadd.f32 %v2776, %v2807
    %v2816 = vadd.f32 %v2780, %v2808
    %v2817 = vadd.f32 %v2782, %v2809
    %v2818 = vadd.f32 %v2784, %v2810
    %v2819 = vadd.f32 %v2786, %v2811
    %v2820 = vmul.f32 %v2812, 0.7978846
    %v2821 = vmul.f32 %v2813, 0.7978846
    %v2822 = vmul.f32 %v2814, 0.7978846
    %v2823 = vmul.f32 %v2815, 0.7978846
    %v2824 = vmul.f32 %v2816, 0.7978846
    %v2825 = vmul.f32 %v2817, 0.7978846
    %v2826 = vmul.f32 %v2818, 0.7978846
    %v2827 = vmul.f32 %v2819, 0.7978846
    %v2828 = vtanh.pop %v2820
    %v2829 = vtanh.pop %v2821
    %v2830 = vtanh.pop %v2822
    %v2831 = vtanh.pop %v2823
    %v2832 = vtanh.pop %v2824
    %v2833 = vtanh.pop %v2825
    %v2834 = vtanh.pop %v2826
    %v2835 = vtanh.pop %v2827
    %v2836 = vadd.f32 %v2828, 1.0
    %v2837 = vadd.f32 %v2829, 1.0
    %v2838 = vadd.f32 %v2830, 1.0
    %v2839 = vadd.f32 %v2831, 1.0
    %v2840 = vadd.f32 %v2832, 1.0
    %v2841 = vadd.f32 %v2833, 1.0
    %v2842 = vadd.f32 %v2834, 1.0
    %v2843 = vadd.f32 %v2835, 1.0
    %v2844 = vmul.f32 %v2836, 0.5
    %v2845 = vmul.f32 %v2837, 0.5
    %v2846 = vmul.f32 %v2838, 0.5
    %v2847 = vmul.f32 %v2839, 0.5
    %v2848 = vmul.f32 %v2840, 0.5
    %v2849 = vmul.f32 %v2841, 0.5
    %v2850 = vmul.f32 %v2842, 0.5
    %v2851 = vmul.f32 %v2843, 0.5
    %v2852 = vmul.f32 %v2770, %v2844
    %v2853 = vmul.f32 %v2772, %v2845
    %v2854 = vmul.f32 %v2774, %v2846
    %v2855 = vmul.f32 %v2776, %v2847
    %v2856 = vmul.f32 %v2780, %v2848
    %v2857 = vmul.f32 %v2782, %v2849
    %v2858 = vmul.f32 %v2784, %v2850
    %v2859 = vmul.f32 %v2786, %v2851
    %v2860 = vpack.c.bf16 %v2854, %v2852
    %v2861 = vpack.c.bf16 %v2855, %v2853
    %v2862 = vpack.c.bf16 %v2858, %v2856
    %v2863 = vpack.c.bf16 %v2859, %v2857
    %s2864 = scalar_lea.vmem [#allocation19], 128
    %v2865 = vld [vmem:[%s2864] sm:$0xf]
    %v2866 = vld [vmem:[%s2864 + $0x4] sm:$0xf]
    %v2867 = vld [vmem:[%s2864 + $0x8] sm:$0xf]
    %v2868 = vld [vmem:[%s2864 + $0xc] sm:$0xf]
    %v2869 = vld [vmem:[%s2864 + $0x10] sm:$0xf]
    %v2870 = vld [vmem:[%s2864 + $0x14] sm:$0xf]
    %v2871 = vld [vmem:[%s2864 + $0x18] sm:$0xf]
    %v2872 = vld [vmem:[%s2864 + $0x1c] sm:$0xf]
    %v2873 = vld [vmem:[%s2864 + $0x20] sm:$0xf]
    %v2874 = vld [vmem:[%s2864 + $0x24] sm:$0xf]
    %v2875 = vld [vmem:[%s2864 + $0x28] sm:$0xf]
    %v2876 = vld [vmem:[%s2864 + $0x2c] sm:$0xf]
    %v2877 = vld [vmem:[%s2864 + $0x30] sm:$0xf]
    %v2878 = vld [vmem:[%s2864 + $0x34] sm:$0xf]
    %v2879 = vld [vmem:[%s2864 + $0x38] sm:$0xf]
    %v2880 = vld [vmem:[%s2864 + $0x3c] sm:$0xf]
    %v2881 = vld [vmem:[%s2864 + $0x40] sm:$0xf]
    %v2882 = vld [vmem:[%s2864 + $0x44] sm:$0xf]
    %v2883 = vld [vmem:[%s2864 + $0x48] sm:$0xf]
    %v2884 = vld [vmem:[%s2864 + $0x4c] sm:$0xf]
    %v2885 = vld [vmem:[%s2864 + $0x50] sm:$0xf]
    %v2886 = vld [vmem:[%s2864 + $0x54] sm:$0xf]
    %v2887 = vld [vmem:[%s2864 + $0x58] sm:$0xf]
    %v2888 = vld [vmem:[%s2864 + $0x5c] sm:$0xf]
    %v2889 = vld [vmem:[%s2864 + $0x60] sm:$0xf]
    %v2890 = vld [vmem:[%s2864 + $0x64] sm:$0xf]
    %v2891 = vld [vmem:[%s2864 + $0x68] sm:$0xf]
    %v2892 = vld [vmem:[%s2864 + $0x6c] sm:$0xf]
    %v2893 = vld [vmem:[%s2864 + $0x70] sm:$0xf]
    %v2894 = vld [vmem:[%s2864 + $0x74] sm:$0xf]
    %v2895 = vld [vmem:[%s2864 + $0x78] sm:$0xf]
    %v2896 = vld [vmem:[%s2864 + $0x7c] sm:$0xf]
    %s2897 = scalar_lea.vmem [#allocation20], 1
    %v2898 = vld [vmem:[%s2897] sm:$0x1]
    %v2900 = vlaneseq
    %v2901 = vshrl.u32 %v2900, 7
    %v2902 = vsub.s32 0, %v2901
    %v2903 = vrot.slane %v2898, %v2902
    %v2937 = vunpack.c.l.b16 %v2865
    %v2938 = vunpack.c.l.b16 %v2866
    %v2939 = vunpack.c.l.b16 %v2867
    %v2940 = vunpack.c.l.b16 %v2868
    %v2941 = vunpack.c.l.b16 %v2869
    %v2942 = vunpack.c.l.b16 %v2870
    %v2943 = vunpack.c.l.b16 %v2871
    %v2944 = vunpack.c.l.b16 %v2872
    %v2945 = vunpack.c.l.b16 %v2873
    %v2946 = vunpack.c.l.b16 %v2874
    %v2947 = vunpack.c.l.b16 %v2875
    %v2948 = vunpack.c.l.b16 %v2876
    %v2949 = vunpack.c.l.b16 %v2877
    %v2950 = vunpack.c.l.b16 %v2878
    %v2951 = vunpack.c.l.b16 %v2879
    %v2952 = vunpack.c.l.b16 %v2880
    %v2953 = vunpack.c.l.b16 %v2881
    %v2954 = vunpack.c.l.b16 %v2882
    %v2955 = vunpack.c.l.b16 %v2883
    %v2956 = vunpack.c.l.b16 %v2884
    %v2957 = vunpack.c.l.b16 %v2885
    %v2958 = vunpack.c.l.b16 %v2886
    %v2959 = vunpack.c.l.b16 %v2887
    %v2960 = vunpack.c.l.b16 %v2888
    %v2961 = vunpack.c.l.b16 %v2889
    %v2962 = vunpack.c.l.b16 %v2890
    %v2963 = vunpack.c.l.b16 %v2891
    %v2964 = vunpack.c.l.b16 %v2892
    %v2965 = vunpack.c.l.b16 %v2893
    %v2966 = vunpack.c.l.b16 %v2894
    %v2967 = vunpack.c.l.b16 %v2895
    %v2968 = vunpack.c.l.b16 %v2896
    %v2969 = vpack.c.b16 %v2938, %v2937
    %v2970 = vpack.c.b16 %v2940, %v2939
    %v2971 = vpack.c.b16 %v2942, %v2941
    %v2972 = vpack.c.b16 %v2944, %v2943
    %v2973 = vpack.c.b16 %v2946, %v2945
    %v2974 = vpack.c.b16 %v2948, %v2947
    %v2975 = vpack.c.b16 %v2950, %v2949
    %v2976 = vpack.c.b16 %v2952, %v2951
    %v2977 = vpack.c.b16 %v2954, %v2953
    %v2978 = vpack.c.b16 %v2956, %v2955
    %v2979 = vpack.c.b16 %v2958, %v2957
    %v2980 = vpack.c.b16 %v2960, %v2959
    %v2981 = vpack.c.b16 %v2962, %v2961
    %v2982 = vpack.c.b16 %v2964, %v2963
    %v2983 = vpack.c.b16 %v2966, %v2965
    %v2984 = vpack.c.b16 %v2968, %v2967
    %3001 = vmatprep.subr.bf16.mxu0 0
    %3002 = vmatpush1.bf16.msra.mxu0 %v2969
    %3003 = vmatprep.subr.bf16.mxu0 0
    %3004 = vmatpush1.bf16.msra.mxu0 %v2970
    %3005 = vmatprep.subr.bf16.mxu0 0
    %3006 = vmatpush1.bf16.msra.mxu0 %v2971
    %3007 = vmatprep.subr.bf16.mxu0 0
    %3008 = vmatpush1.bf16.msra.mxu0 %v2972
    %3009 = vmatprep.subr.bf16.mxu0 0
    %3010 = vmatpush1.bf16.msra.mxu0 %v2973
    %3011 = vmatprep.subr.bf16.mxu0 0
    %3012 = vmatpush1.bf16.msra.mxu0 %v2974
    %3013 = vmatprep.subr.bf16.mxu0 0
    %3014 = vmatpush1.bf16.msra.mxu0 %v2975
    %3015 = vmatprep.subr.bf16.mxu0 0
    %3016 = vmatpush1.bf16.msra.mxu0 %v2976
    %3017 = vmatprep.subr.bf16.mxu0 0
    %3018 = vmatpush1.bf16.msra.mxu0 %v2977
    %3019 = vmatprep.subr.bf16.mxu0 0
    %3020 = vmatpush1.bf16.msra.mxu0 %v2978
    %3021 = vmatprep.subr.bf16.mxu0 0
    %3022 = vmatpush1.bf16.msra.mxu0 %v2979
    %3023 = vmatprep.subr.bf16.mxu0 0
    %3024 = vmatpush1.bf16.msra.mxu0 %v2980
    %3025 = vmatprep.subr.bf16.mxu0 0
    %3026 = vmatpush1.bf16.msra.mxu0 %v2981
    %3027 = vmatprep.subr.bf16.mxu0 0
    %3028 = vmatpush1.bf16.msra.mxu0 %v2982
    %3029 = vmatprep.subr.bf16.mxu0 0
    %3030 = vmatpush1.bf16.msra.mxu0 %v2983
    %3031 = vmatprep.subr.bf16.mxu0 0
    %3032 = vmatpush1.bf16.msra.mxu0 %v2984
    %3033 = vmatprep.mubr.bf16.mxu0 %v2861
    %3034 = vmatmul.mubr.bf16.gmra.mrb[0].mxu0 %v2860
    %v3035 = vpop.f32.mrb[0].mxu0
    %v3036 = vadd.f32 %v2903, %v3035
    %v3037 = vpop.f32.mrb[0].mxu0
    %v3038 = vpop.f32.mrb[0].mxu0
    %v3039 = vpop.f32.mrb[0].mxu0
    %3040 = vmatprep.mubr.bf16.mxu0 %v2863
    %3041 = vmatmul.mubr.bf16.gmra.mrb[0].mxu0 %v2862
    %v3042 = vpop.f32.mrb[0].mxu0
    %v3043 = vadd.f32 %v2903, %v3042
    %v3044 = vpop.f32.mrb[0].mxu0
    %v3045 = vpop.f32.mrb[0].mxu0
    %v3046 = vpop.f32.mrb[0].mxu0
    %3047 = vdwg.mxu0
    %v3048 = vadd.f32 %v2619, %v3036
    %v3049 = vadd.f32 %v2621, %v3043
    %s3050 = scalar_lea.vmem [#allocation22], 1
    %v3051 = vld [vmem:[%s3050] sm:$0x1]
    %s3052 = scalar_lea.vmem [#allocation23], 1
    %v3053 = vld [vmem:[%s3052] sm:$0x1]
    %3054 = vadd.xlane.f32.xlu0 %v3048
    %v3055 = vpop.xlane.xlu0 %3054
    %3056 = vadd.xlane.f32.xlu0 %v3049
    %v3057 = vpop.xlane.xlu0 %3056
    %v3058 = vmul.f32 %v3055, %v801
    %v3059 = vmul.f32 %v3057, %v801
    %v3060 = vsub.f32 %v3048, %v3058
    %v3061 = vsub.f32 %v3049, %v3059
    %v3062 = vmul.f32 %v3060, %v3060
    %v3063 = vmul.f32 %v3061, %v3061
    %3064 = vadd.xlane.f32.xlu0 %v3062
    %v3065 = vpop.xlane.xlu0 %3064
    %3066 = vadd.xlane.f32.xlu0 %v3063
    %v3067 = vpop.xlane.xlu0 %3066
    %v3068 = vmul.f32 %v3065, %v801
    %v3069 = vmul.f32 %v3067, %v801
    %v3070 = vadd.f32 %v3068, 1e-05
    %v3071 = vadd.f32 %v3069, 1e-05
    %v3072 = vrsqrt.pop %v3070
    %v3073 = vrsqrt.pop %v3071
    %v3074 = vmul.f32 %v3060, %v3072
    %v3075 = vmul.f32 %v3061, %v3073
    %v3077 = vlaneseq
    %v3078 = vshrl.u32 %v3077, 7
    %v3079 = vsub.s32 0, %v3078
    %v3080 = vrot.slane %v3051, %v3079
    %v3082 = vmul.f32 %v3074, %v3080
    %v3083 = vmul.f32 %v3075, %v3080
    %v3085 = vlaneseq
    %v3086 = vshrl.u32 %v3085, 7
    %v3087 = vsub.s32 0, %v3086
    %v3088 = vrot.slane %v3053, %v3087
    %v3090 = vadd.f32 %v3082, %v3088
    %v3091 = vadd.f32 %v3083, %v3088
    %v3093 = vrot.slane %v3091, 7
    %vm3095 = vcmask 1040384
    %v3096 = vsel %vm3095, %v3090, %v3093
    %v3097 = vld [vmem:[%s41] sm:$0xf]
    %v3098 = vld [vmem:[%s41 + $0x4] sm:$0xf]
    %v3099 = vld [vmem:[%s41 + $0x8] sm:$0xf]
    %v3100 = vld [vmem:[%s41 + $0xc] sm:$0xf]
    %v3101 = vld [vmem:[%s43] sm:$0xf]
    %v3102 = vld [vmem:[%s43 + $0x4] sm:$0xf]
    %v3103 = vld [vmem:[%s43 + $0x8] sm:$0xf]
    %v3104 = vld [vmem:[%s43 + $0xc] sm:$0xf]
    %v3105 = vld [vmem:[#allocation25] sm:$0xf]
    %v3106 = vld [vmem:[#allocation25 + $0x4] sm:$0xf]
    %v3107 = vld [vmem:[#allocation25 + $0x8] sm:$0xf]
    %v3108 = vld [vmem:[#allocation25 + $0xc] sm:$0xf]
    %v3109 = vld [vmem:[#allocation25 + $0x10] sm:$0xf]
    %v3110 = vld [vmem:[#allocation25 + $0x14] sm:$0xf]
    %v3111 = vld [vmem:[#allocation25 + $0x18] sm:$0xf]
    %v3112 = vld [vmem:[#allocation25 + $0x1c] sm:$0xf]
    %v3113 = vld [vmem:[#allocation25 + $0x20] sm:$0xf]
    %v3114 = vld [vmem:[#allocation25 + $0x24] sm:$0xf]
    %v3115 = vld [vmem:[#allocation25 + $0x28] sm:$0xf]
    %v3116 = vld [vmem:[#allocation25 + $0x2c] sm:$0xf]
    %v3117 = vld [vmem:[#allocation25 + $0x30] sm:$0xf]
    %v3118 = vld [vmem:[#allocation25 + $0x34] sm:$0xf]
    %v3119 = vld [vmem:[#allocation25 + $0x38] sm:$0xf]
    %v3120 = vld [vmem:[#allocation25 + $0x3c] sm:$0xf]
    %v3125 = vunpack.c.l.b16 %v3097
    %v3126 = vunpack.c.l.b16 %v3098
    %v3127 = vunpack.c.l.b16 %v3099
    %v3128 = vunpack.c.l.b16 %v3100
    %v3129 = vpack.c.b16 %v3126, %v3125
    %v3130 = vpack.c.b16 %v3128, %v3127
    %v3149 = vunpack.c.l.b16 %v3105
    %v3150 = vunpack.c.l.b16 %v3106
    %v3151 = vunpack.c.l.b16 %v3107
    %v3152 = vunpack.c.l.b16 %v3108
    %v3153 = vunpack.c.l.b16 %v3109
    %v3154 = vunpack.c.l.b16 %v3110
    %v3155 = vunpack.c.l.b16 %v3111
    %v3156 = vunpack.c.l.b16 %v3112
    %v3157 = vunpack.c.l.b16 %v3113
    %v3158 = vunpack.c.l.b16 %v3114
    %v3159 = vunpack.c.l.b16 %v3115
    %v3160 = vunpack.c.l.b16 %v3116
    %v3161 = vunpack.c.l.b16 %v3117
    %v3162 = vunpack.c.l.b16 %v3118
    %v3163 = vunpack.c.l.b16 %v3119
    %v3164 = vunpack.c.l.b16 %v3120
    %v3165 = vpack.c.b16 %v3150, %v3149
    %v3166 = vpack.c.b16 %v3152, %v3151
    %v3167 = vpack.c.b16 %v3154, %v3153
    %v3168 = vpack.c.b16 %v3156, %v3155
    %v3169 = vpack.c.b16 %v3158, %v3157
    %v3170 = vpack.c.b16 %v3160, %v3159
    %v3171 = vpack.c.b16 %v3162, %v3161
    %v3172 = vpack.c.b16 %v3164, %v3163
    %3181 = vmatprep.subr.bf16.mxu0 0
    %3182 = vmatpush1.bf16.msra.mxu0 %v3165
    %3183 = vmatprep.subr.bf16.mxu0 0
    %3184 = vmatpush1.bf16.msra.mxu0 %v3166
    %3185 = vmatprep.subr.bf16.mxu0 0
    %3186 = vmatpush1.bf16.msra.mxu0 %v3167
    %3187 = vmatprep.subr.bf16.mxu0 0
    %3188 = vmatpush1.bf16.msra.mxu0 %v3168
    %3189 = vmatprep.subr.bf16.mxu0 0
    %3190 = vmatpush1.bf16.msra.mxu0 %v3169
    %3191 = vmatprep.subr.bf16.mxu0 0
    %3192 = vmatpush1.bf16.msra.mxu0 %v3170
    %3193 = vmatprep.subr.bf16.mxu0 0
    %3194 = vmatpush1.bf16.msra.mxu0 %v3171
    %3195 = vmatprep.subr.bf16.mxu0 0
    %3196 = vmatpush1.bf16.msra.mxu0 %v3172
    %3197 = vmatprep.subr.bf16.mxu0 0
    %3198 = vmatpush1.bf16.msra.mxu0 0
    %3199 = vmatprep.subr.bf16.mxu0 0
    %3200 = vmatpush1.bf16.msra.mxu0 0
    %3201 = vmatprep.subr.bf16.mxu0 0
    %3202 = vmatpush1.bf16.msra.mxu0 0
    %3203 = vmatprep.subr.bf16.mxu0 0
    %3204 = vmatpush1.bf16.msra.mxu0 0
    %3205 = vmatprep.subr.bf16.mxu0 0
    %3206 = vmatpush1.bf16.msra.mxu0 0
    %3207 = vmatprep.subr.bf16.mxu0 0
    %3208 = vmatpush1.bf16.msra.mxu0 0
    %3209 = vmatprep.subr.bf16.mxu0 0
    %3210 = vmatpush1.bf16.msra.mxu0 0
    %3211 = vmatprep.subr.bf16.mxu0 0
    %3212 = vmatpush1.bf16.msra.mxu0 0
    %3213 = vmatprep.mubr.bf16.mxu0 0
    %3214 = vmatmul.mubr.bf16.gmra.mrb[0].mxu0 %v3129
    %v3215 = vpop.f32.mrb[0].mxu0
    %v3216 = vadd.f32 0.0, %v3215
    %v3217 = vpop.f32.mrb[0].mxu0
    %v3218 = vpop.f32.mrb[0].mxu0
    %v3219 = vadd.f32 0.0, %v3218
    %v3220 = vpop.f32.mrb[0].mxu0
    %3221 = vmatprep.mubr.bf16.mxu0 0
    %3222 = vmatmul.mubr.bf16.gmra.mrb[0].mxu0 %v3130
    %v3223 = vpop.f32.mrb[0].mxu0
    %v3224 = vadd.f32 0.0, %v3223
    %v3225 = vpop.f32.mrb[0].mxu0
    %v3226 = vpop.f32.mrb[0].mxu0
    %v3227 = vadd.f32 0.0, %v3226
    %v3228 = vpop.f32.mrb[0].mxu0
    %3229 = vdwg.mxu0
    %v3230 = vpack.c.bf16 %v3219, %v3216
    %v3231 = vpack.c.bf16 %v3227, %v3224
    %v3232 = vld [vmem:[#allocation26] sm:$0x1]
    %v3234 = vlaneseq
    %v3235 = vshrl.u32 %v3234, 7
    %v3236 = vsub.s32 0, %v3235
    %v3237 = vrot.slane %v3232, %v3236
    %v3243 = vunpack.c.l.b16 %v3101
    %v3244 = vunpack.c.l.b16 %v3102
    %v3245 = vunpack.c.l.b16 %v3103
    %v3246 = vunpack.c.l.b16 %v3104
    %v3247 = vpack.c.b16 %v3244, %v3243
    %v3248 = vpack.c.b16 %v3246, %v3245
    %v3250 = vsel %vm667, %v3247, 0
    %v3253 = vsel %vm667, %v3248, 0
    %3255 = vmatprep.subr.bf16.mxu0 0
    %3256 = vmatpush1.bf16.msra.mxu0 %v3230
    %3257 = vmatprep.subr.bf16.mxu0 0
    %3258 = vmatpush1.bf16.msra.mxu0 %v3231
    %3259 = vmatprep.subr.bf16.mxu0 0
    %3260 = vmatpush1.bf16.msra.mxu0 0
    %3261 = vmatprep.subr.bf16.mxu0 0
    %3262 = vmatpush1.bf16.msra.mxu0 0
    %3263 = vmatprep.subr.bf16.mxu0 0
    %3264 = vmatpush1.bf16.msra.mxu0 0
    %3265 = vmatprep.subr.bf16.mxu0 0
    %3266 = vmatpush1.bf16.msra.mxu0 0
    %3267 = vmatprep.subr.bf16.mxu0 0
    %3268 = vmatpush1.bf16.msra.mxu0 0
    %3269 = vmatprep.subr.bf16.mxu0 0
    %3270 = vmatpush1.bf16.msra.mxu0 0
    %3271 = vmatprep.subr.bf16.mxu0 0
    %3272 = vmatpush1.bf16.msra.mxu0 0
    %3273 = vmatprep.subr.bf16.mxu0 0
    %3274 = vmatpush1.bf16.msra.mxu0 0
    %3275 = vmatprep.subr.bf16.mxu0 0
    %3276 = vmatpush1.bf16.msra.mxu0 0
    %3277 = vmatprep.subr.bf16.mxu0 0
    %3278 = vmatpush1.bf16.msra.mxu0 0
    %3279 = vmatprep.subr.bf16.mxu0 0
    %3280 = vmatpush1.bf16.msra.mxu0 0
    %3281 = vmatprep.subr.bf16.mxu0 0
    %3282 = vmatpush1.bf16.msra.mxu0 0
    %3283 = vmatprep.subr.bf16.mxu0 0
    %3284 = vmatpush1.bf16.msra.mxu0 0
    %3285 = vmatprep.subr.bf16.mxu0 0
    %3286 = vmatpush1.bf16.msra.mxu0 0
    %3287 = vmatprep.mubr.bf16.mxu0 0
    %3288 = vmatmul.mubr.bf16.gmra.mrb[0].mxu0 %v3250
    %v3289 = vpop.f32.mrb[0].mxu0
    %v3290 = vadd.f32 %v3237, %v3289
    %v3291 = vpop.f32.mrb[0].mxu0
    %v3292 = vpop.f32.mrb[0].mxu0
    %v3293 = vadd.f32 %v3237, %v3292
    %v3294 = vpop.f32.mrb[0].mxu0
    %3295 = vmatprep.mubr.bf16.mxu0 0
    %3296 = vmatmul.mubr.bf16.gmra.mrb[0].mxu0 %v3253
    %v3297 = vpop.f32.mrb[0].mxu0
    %v3298 = vadd.f32 %v3237, %v3297
    %v3299 = vpop.f32.mrb[0].mxu0
    %v3300 = vpop.f32.mrb[0].mxu0
    %v3301 = vadd.f32 %v3237, %v3300
    %v3302 = vpop.f32.mrb[0].mxu0
    %3303 = vdwg.mxu0
    %v3304 = vmax.f32 %v3290, 0.0
    %v3305 = vmax.f32 %v3293, 0.0
    %v3306 = vmax.f32 %v3298, 0.0
    %v3307 = vmax.f32 %v3301, 0.0
    %v3308 = vpack.c.bf16 %v3305, %v3304
    %v3309 = vpack.c.bf16 %v3307, %v3306
    %v3310 = vld [vmem:[#allocation28] sm:$0xf]
    %v3311 = vld [vmem:[#allocation28 + $0x4] sm:$0xf]
    %v3312 = vld [vmem:[#allocation28 + $0x8] sm:$0xf]
    %v3313 = vld [vmem:[#allocation28 + $0xc] sm:$0xf]
    %v3314 = vld [vmem:[#allocation28 + $0x10] sm:$0xf]
    %v3315 = vld [vmem:[#allocation28 + $0x14] sm:$0xf]
    %v3316 = vld [vmem:[#allocation28 + $0x18] sm:$0xf]
    %v3317 = vld [vmem:[#allocation28 + $0x1c] sm:$0xf]
    %v3318 = vld [vmem:[#allocation28 + $0x20] sm:$0xf]
    %v3319 = vld [vmem:[#allocation28 + $0x24] sm:$0xf]
    %v3320 = vld [vmem:[#allocation28 + $0x28] sm:$0xf]
    %v3321 = vld [vmem:[#allocation28 + $0x2c] sm:$0xf]
    %v3322 = vld [vmem:[#allocation28 + $0x30] sm:$0xf]
    %v3323 = vld [vmem:[#allocation28 + $0x34] sm:$0xf]
    %v3324 = vld [vmem:[#allocation28 + $0x38] sm:$0xf]
    %v3325 = vld [vmem:[#allocation28 + $0x3c] sm:$0xf]
    %v3342 = vunpack.c.l.b16 %v3310
    %v3343 = vunpack.c.l.b16 %v3311
    %v3344 = vunpack.c.l.b16 %v3312
    %v3345 = vunpack.c.l.b16 %v3313
    %v3346 = vunpack.c.l.b16 %v3314
    %v3347 = vunpack.c.l.b16 %v3315
    %v3348 = vunpack.c.l.b16 %v3316
    %v3349 = vunpack.c.l.b16 %v3317
    %v3350 = vunpack.c.l.b16 %v3318
    %v3351 = vunpack.c.l.b16 %v3319
    %v3352 = vunpack.c.l.b16 %v3320
    %v3353 = vunpack.c.l.b16 %v3321
    %v3354 = vunpack.c.l.b16 %v3322
    %v3355 = vunpack.c.l.b16 %v3323
    %v3356 = vunpack.c.l.b16 %v3324
    %v3357 = vunpack.c.l.b16 %v3325
    %v3358 = vpack.c.b16 %v3343, %v3342
    %v3359 = vpack.c.b16 %v3345, %v3344
    %v3360 = vpack.c.b16 %v3347, %v3346
    %v3361 = vpack.c.b16 %v3349, %v3348
    %v3362 = vpack.c.b16 %v3351, %v3350
    %v3363 = vpack.c.b16 %v3353, %v3352
    %v3364 = vpack.c.b16 %v3355, %v3354
    %v3365 = vpack.c.b16 %v3357, %v3356
    %3374 = vmatprep.subr.bf16.mxu0 0
    %3375 = vmatpush1.bf16.msra.mxu0 %v3358
    %3376 = vmatprep.subr.bf16.mxu0 0
    %3377 = vmatpush1.bf16.msra.mxu0 %v3359
    %3378 = vmatprep.subr.bf16.mxu0 0
    %3379 = vmatpush1.bf16.msra.mxu0 %v3360
    %3380 = vmatprep.subr.bf16.mxu0 0
    %3381 = vmatpush1.bf16.msra.mxu0 %v3361
    %3382 = vmatprep.subr.bf16.mxu0 0
    %3383 = vmatpush1.bf16.msra.mxu0 %v3362
    %3384 = vmatprep.subr.bf16.mxu0 0
    %3385 = vmatpush1.bf16.msra.mxu0 %v3363
    %3386 = vmatprep.subr.bf16.mxu0 0
    %3387 = vmatpush1.bf16.msra.mxu0 %v3364
    %3388 = vmatprep.subr.bf16.mxu0 0
    %3389 = vmatpush1.bf16.msra.mxu0 %v3365
    %3390 = vmatprep.subr.bf16.mxu0 0
    %3391 = vmatpush1.bf16.msra.mxu0 0
    %3392 = vmatprep.subr.bf16.mxu0 0
    %3393 = vmatpush1.bf16.msra.mxu0 0
    %3394 = vmatprep.subr.bf16.mxu0 0
    %3395 = vmatpush1.bf16.msra.mxu0 0
    %3396 = vmatprep.subr.bf16.mxu0 0
    %3397 = vmatpush1.bf16.msra.mxu0 0
    %3398 = vmatprep.subr.bf16.mxu0 0
    %3399 = vmatpush1.bf16.msra.mxu0 0
    %3400 = vmatprep.subr.bf16.mxu0 0
    %3401 = vmatpush1.bf16.msra.mxu0 0
    %3402 = vmatprep.subr.bf16.mxu0 0
    %3403 = vmatpush1.bf16.msra.mxu0 0
    %3404 = vmatprep.subr.bf16.mxu0 0
    %3405 = vmatpush1.bf16.msra.mxu0 0
    %3406 = vmatprep.mubr.bf16.mxu0 0
    %3407 = vmatmul.mubr.bf16.gmra.mrb[0].mxu0 %v3308
    %v3408 = vpop.f32.mrb[0].mxu0
    %v3409 = vadd.f32 0.0, %v3408
    %v3410 = vpop.f32.mrb[0].mxu0
    %v3411 = vpop.f32.mrb[0].mxu0
    %v3412 = vadd.f32 0.0, %v3411
    %v3413 = vpop.f32.mrb[0].mxu0
    %3414 = vmatprep.mubr.bf16.mxu0 0
    %3415 = vmatmul.mubr.bf16.gmra.mrb[0].mxu0 %v3309
    %v3416 = vpop.f32.mrb[0].mxu0
    %v3417 = vadd.f32 0.0, %v3416
    %v3418 = vpop.f32.mrb[0].mxu0
    %v3419 = vpop.f32.mrb[0].mxu0
    %v3420 = vadd.f32 0.0, %v3419
    %v3421 = vpop.f32.mrb[0].mxu0
    %3422 = vdwg.mxu0
    %v3423 = vpack.c.bf16 %v3412, %v3409
    %v3424 = vpack.c.bf16 %v3420, %v3417
    %v3425 = vld [vmem:[#allocation29] sm:$0x1]
    %v3427 = vlaneseq
    %v3428 = vshrl.u32 %v3427, 7
    %v3429 = vsub.s32 0, %v3428
    %v3430 = vrot.slane %v3425, %v3429
    %3432 = vmatprep.subr.bf16.mxu0 0
    %3433 = vmatpush1.bf16.msra.mxu0 %v3423
    %3434 = vmatprep.subr.bf16.mxu0 0
    %3435 = vmatpush1.bf16.msra.mxu0 %v3424
    %3436 = vmatprep.subr.bf16.mxu0 0
    %3437 = vmatpush1.bf16.msra.mxu0 0
    %3438 = vmatprep.subr.bf16.mxu0 0
    %3439 = vmatpush1.bf16.msra.mxu0 0
    %3440 = vmatprep.subr.bf16.mxu0 0
    %3441 = vmatpush1.bf16.msra.mxu0 0
    %3442 = vmatprep.subr.bf16.mxu0 0
    %3443 = vmatpush1.bf16.msra.mxu0 0
    %3444 = vmatprep.subr.bf16.mxu0 0
    %3445 = vmatpush1.bf16.msra.mxu0 0
    %3446 = vmatprep.subr.bf16.mxu0 0
    %3447 = vmatpush1.bf16.msra.mxu0 0
    %3448 = vmatprep.subr.bf16.mxu0 0
    %3449 = vmatpush1.bf16.msra.mxu0 0
    %3450 = vmatprep.subr.bf16.mxu0 0
    %3451 = vmatpush1.bf16.msra.mxu0 0
    %3452 = vmatprep.subr.bf16.mxu0 0
    %3453 = vmatpush1.bf16.msra.mxu0 0
    %3454 = vmatprep.subr.bf16.mxu0 0
    %3455 = vmatpush1.bf16.msra.mxu0 0
    %3456 = vmatprep.subr.bf16.mxu0 0
    %3457 = vmatpush1.bf16.msra.mxu0 0
    %3458 = vmatprep.subr.bf16.mxu0 0
    %3459 = vmatpush1.bf16.msra.mxu0 0
    %3460 = vmatprep.subr.bf16.mxu0 0
    %3461 = vmatpush1.bf16.msra.mxu0 0
    %3462 = vmatprep.subr.bf16.mxu0 0
    %3463 = vmatpush1.bf16.msra.mxu0 0
    %3464 = vmatprep.mubr.bf16.mxu0 0
    %3465 = vmatmul.mubr.bf16.gmra.mrb[0].mxu0 %v3250
    %v3466 = vpop.f32.mrb[0].mxu0
    %v3467 = vadd.f32 %v3430, %v3466
    %v3468 = vpop.f32.mrb[0].mxu0
    %v3469 = vpop.f32.mrb[0].mxu0
    %v3470 = vadd.f32 %v3430, %v3469
    %v3471 = vpop.f32.mrb[0].mxu0
    %3472 = vmatprep.mubr.bf16.mxu0 0
    %3473 = vmatmul.mubr.bf16.gmra.mrb[0].mxu0 %v3253
    %v3474 = vpop.f32.mrb[0].mxu0
    %v3475 = vadd.f32 %v3430, %v3474
    %v3476 = vpop.f32.mrb[0].mxu0
    %v3477 = vpop.f32.mrb[0].mxu0
    %v3478 = vadd.f32 %v3430, %v3477
    %v3479 = vpop.f32.mrb[0].mxu0
    %3480 = vdwg.mxu0
    %v3481 = vmax.f32 %v3467, 0.0
    %v3482 = vmax.f32 %v3470, 0.0
    %v3483 = vmax.f32 %v3475, 0.0
    %v3484 = vmax.f32 %v3478, 0.0
    %v3485 = vld [vmem:[%s45] sm:$0xff]
    %v3486 = vld [vmem:[%s45 + $0x8] sm:$0xff]
    %v3487 = vld [vmem:[%s45 + $0x10] sm:$0xff]
    %v3488 = vld [vmem:[%s45 + $0x18] sm:$0xff]
    %3490 = vset.pattern.permute.xlu0 0
    %3491 = vperm.xlu0 %3490, %v3485
    %v3492 = vpop.permute.xlu0 %3491
    %3495 = vset.pattern.permute.xlu0 0
    %3496 = vperm.xlu0 %3495, %v3486
    %v3497 = vpop.permute.xlu0 %3496
    %3500 = vset.pattern.permute.xlu0 0
    %3501 = vperm.xlu0 %3500, %v3487
    %v3502 = vpop.permute.xlu0 %3501
    %3505 = vset.pattern.permute.xlu0 0
    %3506 = vperm.xlu0 %3505, %v3488
    %v3507 = vpop.permute.xlu0 %3506
    %v3509 = vmul.f32 %v3481, %v3492
    %v3510 = vmul.f32 %v3482, %v3497
    %v3511 = vmul.f32 %v3483, %v3502
    %v3512 = vmul.f32 %v3484, %v3507
    %v3513 = vadd.f32 %v3509, %v3510
    %v3514 = vrot.slane %v3513, 4
    %v3515 = vadd.f32 %v3513, %v3514
    %v3516 = vrot.slane %v3515, 2
    %v3517 = vadd.f32 %v3515, %v3516
    %v3518 = vrot.slane %v3517, 1
    %v3519 = vadd.f32 %v3517, %v3518
    %v3520 = vadd.f32 %v3511, %v3512
    %v3521 = vrot.slane %v3520, 4
    %v3522 = vadd.f32 %v3520, %v3521
    %v3523 = vrot.slane %v3522, 2
    %v3524 = vadd.f32 %v3522, %v3523
    %v3525 = vrot.slane %v3524, 1
    %v3526 = vadd.f32 %v3524, %v3525
    %v3527 = vsel %vm3095, %v3519, %v3526
    %v3528 = vpack.c.bf16 %v3096, %v3096
    %v3529 = vpack.c.bf16 %v3527, %v3527
    %v3530 = vld [vmem:[%s55] sm:$0xf]
    %v3531 = vld [vmem:[%s55 + $0x4] sm:$0xf]
    %v3532 = vld [vmem:[%s55 + $0x8] sm:$0xf]
    %v3533 = vld [vmem:[%s55 + $0xc] sm:$0xf]
    %v3534 = vld [vmem:[%s55 + $0x10] sm:$0xf]
    %v3535 = vld [vmem:[%s55 + $0x14] sm:$0xf]
    %v3536 = vld [vmem:[%s55 + $0x18] sm:$0xf]
    %v3537 = vld [vmem:[%s55 + $0x1c] sm:$0xf]
    %v3538 = vld [vmem:[%s55 + $0x20] sm:$0xf]
    %v3539 = vld [vmem:[%s55 + $0x24] sm:$0xf]
    %v3540 = vld [vmem:[%s55 + $0x28] sm:$0xf]
    %v3541 = vld [vmem:[%s55 + $0x2c] sm:$0xf]
    %v3542 = vld [vmem:[%s55 + $0x30] sm:$0xf]
    %v3543 = vld [vmem:[%s55 + $0x34] sm:$0xf]
    %v3544 = vld [vmem:[%s55 + $0x38] sm:$0xf]
    %v3545 = vld [vmem:[%s55 + $0x3c] sm:$0xf]
    %v3546 = vld [vmem:[%s55 + $0x40] sm:$0xf]
    %v3547 = vld [vmem:[%s55 + $0x44] sm:$0xf]
    %v3548 = vld [vmem:[%s55 + $0x48] sm:$0xf]
    %v3549 = vld [vmem:[%s55 + $0x4c] sm:$0xf]
    %v3550 = vld [vmem:[%s55 + $0x50] sm:$0xf]
    %v3551 = vld [vmem:[%s55 + $0x54] sm:$0xf]
    %v3552 = vld [vmem:[%s55 + $0x58] sm:$0xf]
    %v3553 = vld [vmem:[%s55 + $0x5c] sm:$0xf]
    %v3554 = vld [vmem:[%s55 + $0x60] sm:$0xf]
    %v3555 = vld [vmem:[%s55 + $0x64] sm:$0xf]
    %v3556 = vld [vmem:[%s55 + $0x68] sm:$0xf]
    %v3557 = vld [vmem:[%s55 + $0x6c] sm:$0xf]
    %v3558 = vld [vmem:[%s55 + $0x70] sm:$0xf]
    %v3559 = vld [vmem:[%s55 + $0x74] sm:$0xf]
    %v3560 = vld [vmem:[%s55 + $0x78] sm:$0xf]
    %v3561 = vld [vmem:[%s55 + $0x7c] sm:$0xf]
    %v3562 = vld [vmem:[#allocation31] sm:$0x1]
    %v3564 = vlaneseq
    %v3565 = vshrl.u32 %v3564, 7
    %v3566 = vsub.s32 0, %v3565
    %v3567 = vrot.slane %v3562, %v3566
    %v3601 = vunpack.c.l.b16 %v3530
    %v3602 = vunpack.c.l.b16 %v3531
    %v3603 = vunpack.c.l.b16 %v3532
    %v3604 = vunpack.c.l.b16 %v3533
    %v3605 = vunpack.c.l.b16 %v3534
    %v3606 = vunpack.c.l.b16 %v3535
    %v3607 = vunpack.c.l.b16 %v3536
    %v3608 = vunpack.c.l.b16 %v3537
    %v3609 = vunpack.c.l.b16 %v3538
    %v3610 = vunpack.c.l.b16 %v3539
    %v3611 = vunpack.c.l.b16 %v3540
    %v3612 = vunpack.c.l.b16 %v3541
    %v3613 = vunpack.c.l.b16 %v3542
    %v3614 = vunpack.c.l.b16 %v3543
    %v3615 = vunpack.c.l.b16 %v3544
    %v3616 = vunpack.c.l.b16 %v3545
    %v3617 = vunpack.c.l.b16 %v3546
    %v3618 = vunpack.c.l.b16 %v3547
    %v3619 = vunpack.c.l.b16 %v3548
    %v3620 = vunpack.c.l.b16 %v3549
    %v3621 = vunpack.c.l.b16 %v3550
    %v3622 = vunpack.c.l.b16 %v3551
    %v3623 = vunpack.c.l.b16 %v3552
    %v3624 = vunpack.c.l.b16 %v3553
    %v3625 = vunpack.c.l.b16 %v3554
    %v3626 = vunpack.c.l.b16 %v3555
    %v3627 = vunpack.c.l.b16 %v3556
    %v3628 = vunpack.c.l.b16 %v3557
    %v3629 = vunpack.c.l.b16 %v3558
    %v3630 = vunpack.c.l.b16 %v3559
    %v3631 = vunpack.c.l.b16 %v3560
    %v3632 = vunpack.c.l.b16 %v3561
    %v3633 = vpack.c.b16 %v3602, %v3601
    %v3634 = vpack.c.b16 %v3604, %v3603
    %v3635 = vpack.c.b16 %v3606, %v3605
    %v3636 = vpack.c.b16 %v3608, %v3607
    %v3637 = vpack.c.b16 %v3610, %v3609
    %v3638 = vpack.c.b16 %v3612, %v3611
    %v3639 = vpack.c.b16 %v3614, %v3613
    %v3640 = vpack.c.b16 %v3616, %v3615
    %v3641 = vpack.c.b16 %v3618, %v3617
    %v3642 = vpack.c.b16 %v3620, %v3619
    %v3643 = vpack.c.b16 %v3622, %v3621
    %v3644 = vpack.c.b16 %v3624, %v3623
    %v3645 = vpack.c.b16 %v3626, %v3625
    %v3646 = vpack.c.b16 %v3628, %v3627
    %v3647 = vpack.c.b16 %v3630, %v3629
    %v3648 = vpack.c.b16 %v3632, %v3631
    %3665 = vmatprep.subr.bf16.mxu0 0
    %3666 = vmatpush1.bf16.msra.mxu0 %v3633
    %3667 = vmatprep.subr.bf16.mxu0 0
    %3668 = vmatpush1.bf16.msra.mxu0 %v3634
    %3669 = vmatprep.subr.bf16.mxu0 0
    %3670 = vmatpush1.bf16.msra.mxu0 %v3635
    %3671 = vmatprep.subr.bf16.mxu0 0
    %3672 = vmatpush1.bf16.msra.mxu0 %v3636
    %3673 = vmatprep.subr.bf16.mxu0 0
    %3674 = vmatpush1.bf16.msra.mxu0 %v3637
    %3675 = vmatprep.subr.bf16.mxu0 0
    %3676 = vmatpush1.bf16.msra.mxu0 %v3638
    %3677 = vmatprep.subr.bf16.mxu0 0
    %3678 = vmatpush1.bf16.msra.mxu0 %v3639
    %3679 = vmatprep.subr.bf16.mxu0 0
    %3680 = vmatpush1.bf16.msra.mxu0 %v3640
    %3681 = vmatprep.subr.bf16.mxu0 0
    %3682 = vmatpush1.bf16.msra.mxu0 %v3641
    %3683 = vmatprep.subr.bf16.mxu0 0
    %3684 = vmatpush1.bf16.msra.mxu0 %v3642
    %3685 = vmatprep.subr.bf16.mxu0 0
    %3686 = vmatpush1.bf16.msra.mxu0 %v3643
    %3687 = vmatprep.subr.bf16.mxu0 0
    %3688 = vmatpush1.bf16.msra.mxu0 %v3644
    %3689 = vmatprep.subr.bf16.mxu0 0
    %3690 = vmatpush1.bf16.msra.mxu0 %v3645
    %3691 = vmatprep.subr.bf16.mxu0 0
    %3692 = vmatpush1.bf16.msra.mxu0 %v3646
    %3693 = vmatprep.subr.bf16.mxu0 0
    %3694 = vmatpush1.bf16.msra.mxu0 %v3647
    %3695 = vmatprep.subr.bf16.mxu0 0
    %3696 = vmatpush1.bf16.msra.mxu0 %v3648
    %3697 = vmatprep.mubr.bf16.mxu0 %v3529
    %3698 = vmatmul.mubr.bf16.gmra.mrb[0].mxu0 %v3528
    %v3699 = vpop.f32.mrb[0].mxu0
    %v3700 = vadd.f32 %v3567, %v3699
    %v3701 = vpop.f32.mrb[0].mxu0
    %v3702 = vpop.f32.mrb[0].mxu0
    %v3703 = vpop.f32.mrb[0].mxu0
    %3704 = vdwg.mxu0
    %v3705 = vtanh.pop %v3700
    %v3706 = vpack.c.bf16 %v3705, %v3705
    %v3707 = vld [vmem:[#allocation32] sm:$0xf]
    %v3708 = vld [vmem:[#allocation32 + $0x4] sm:$0xf]
    %v3709 = vld [vmem:[#allocation32 + $0x8] sm:$0xf]
    %v3710 = vld [vmem:[#allocation32 + $0xc] sm:$0xf]
    %v3711 = vld [vmem:[#allocation32 + $0x10] sm:$0xf]
    %v3712 = vld [vmem:[#allocation32 + $0x14] sm:$0xf]
    %v3713 = vld [vmem:[#allocation32 + $0x18] sm:$0xf]
    %v3714 = vld [vmem:[#allocation32 + $0x1c] sm:$0xf]
    %v3715 = vld [vmem:[#allocation32 + $0x20] sm:$0xf]
    %v3716 = vld [vmem:[#allocation32 + $0x24] sm:$0xf]
    %v3717 = vld [vmem:[#allocation32 + $0x28] sm:$0xf]
    %v3718 = vld [vmem:[#allocation32 + $0x2c] sm:$0xf]
    %v3719 = vld [vmem:[#allocation32 + $0x30] sm:$0xf]
    %v3720 = vld [vmem:[#allocation32 + $0x34] sm:$0xf]
    %v3721 = vld [vmem:[#allocation32 + $0x38] sm:$0xf]
    %v3722 = vld [vmem:[#allocation32 + $0x3c] sm:$0xf]
    %v3723 = vld [vmem:[#allocation34] sm:$0x1]
    %v3725 = vlaneseq
    %v3726 = vshrl.u32 %v3725, 7
    %v3727 = vsub.s32 0, %v3726
    %v3728 = vrot.slane %v3723, %v3727
    %v3746 = vunpack.c.l.b16 %v3707
    %v3747 = vunpack.c.l.b16 %v3708
    %v3748 = vunpack.c.l.b16 %v3709
    %v3749 = vunpack.c.l.b16 %v3710
    %v3750 = vunpack.c.l.b16 %v3711
    %v3751 = vunpack.c.l.b16 %v3712
    %v3752 = vunpack.c.l.b16 %v3713
    %v3753 = vunpack.c.l.b16 %v3714
    %v3754 = vunpack.c.l.b16 %v3715
    %v3755 = vunpack.c.l.b16 %v3716
    %v3756 = vunpack.c.l.b16 %v3717
    %v3757 = vunpack.c.l.b16 %v3718
    %v3758 = vunpack.c.l.b16 %v3719
    %v3759 = vunpack.c.l.b16 %v3720
    %v3760 = vunpack.c.l.b16 %v3721
    %v3761 = vunpack.c.l.b16 %v3722
    %v3762 = vpack.c.b16 %v3747, %v3746
    %v3763 = vpack.c.b16 %v3749, %v3748
    %v3764 = vpack.c.b16 %v3751, %v3750
    %v3765 = vpack.c.b16 %v3753, %v3752
    %v3766 = vpack.c.b16 %v3755, %v3754
    %v3767 = vpack.c.b16 %v3757, %v3756
    %v3768 = vpack.c.b16 %v3759, %v3758
    %v3769 = vpack.c.b16 %v3761, %v3760
    %3778 = vmatprep.subr.bf16.mxu0 0
    %3779 = vmatpush1.bf16.msra.mxu0 %v3762
    %3780 = vmatprep.subr.bf16.mxu0 0
    %3781 = vmatpush1.bf16.msra.mxu0 %v3763
    %3782 = vmatprep.subr.bf16.mxu0 0
    %3783 = vmatpush1.bf16.msra.mxu0 %v3764
    %3784 = vmatprep.subr.bf16.mxu0 0
    %3785 = vmatpush1.bf16.msra.mxu0 %v3765
    %3786 = vmatprep.subr.bf16.mxu0 0
    %3787 = vmatpush1.bf16.msra.mxu0 %v3766
    %3788 = vmatprep.subr.bf16.mxu0 0
    %3789 = vmatpush1.bf16.msra.mxu0 %v3767
    %3790 = vmatprep.subr.bf16.mxu0 0
    %3791 = vmatpush1.bf16.msra.mxu0 %v3768
    %3792 = vmatprep.subr.bf16.mxu0 0
    %3793 = vmatpush1.bf16.msra.mxu0 %v3769
    %3794 = vmatprep.subr.bf16.mxu0 0
    %3795 = vmatpush1.bf16.msra.mxu0 0
    %3796 = vmatprep.subr.bf16.mxu0 0
    %3797 = vmatpush1.bf16.msra.mxu0 0
    %3798 = vmatprep.subr.bf16.mxu0 0
    %3799 = vmatpush1.bf16.msra.mxu0 0
    %3800 = vmatprep.subr.bf16.mxu0 0
    %3801 = vmatpush1.bf16.msra.mxu0 0
    %3802 = vmatprep.subr.bf16.mxu0 0
    %3803 = vmatpush1.bf16.msra.mxu0 0
    %3804 = vmatprep.subr.bf16.mxu0 0
    %3805 = vmatpush1.bf16.msra.mxu0 0
    %3806 = vmatprep.subr.bf16.mxu0 0
    %3807 = vmatpush1.bf16.msra.mxu0 0
    %3808 = vmatprep.subr.bf16.mxu0 0
    %3809 = vmatpush1.bf16.msra.mxu0 0
    %3810 = vmatprep.mubr.bf16.mxu0 0
    %3811 = vmatmul.mubr.bf16.gmra.mrb[0].mxu0 %v3706
    %v3812 = vpop.f32.mrb[0].mxu0
    %v3813 = vadd.f32 %v3728, %v3812
    %v3814 = vpop.f32.mrb[0].mxu0
    %v3815 = vpop.f32.mrb[0].mxu0
    %v3816 = vpop.f32.mrb[0].mxu0
    %3817 = vdwg.mxu0
    %3818 = vst [vmem:[#allocation35] sm:$0x3] %v3813
    // Predicated region
    $region210: #{_forward_core.1} parent=1 // pred_check
      _
    $region211: #{_forward_core.1} parent=1 // pred_check_branch
      %3820 = sbr.rel (0) target = $region213
    $region212: #{_forward_core.1} parent=1 // pred_region
      %s3822 = ssub.s32 32, 32
      %3823 = vsyncadd [#allocation4], %s3822
      %s3825 = sshll.u32 [#allocation35], 4
      %s3826 = int_to_ptr.vmem [resolvable:$true] %s3825
      %3828 = dma.vmem_to_hbm [thread:$0]  %s3826, 32, %s63, [#allocation4]
    $region213: #{_forward_core.1} parent=1 // pred_fallthru
      _
    // Predicated region
    $region214: #{_forward_core.1} parent=1 // pred_check
      _
    $region215: #{_forward_core.1} parent=1 // pred_check_branch
      %3830 = sbr.rel (0) target = $region217
    $region216: #{_forward_core.1} parent=1 // pred_region
      %3831 = dma.done [#allocation4], 32
    $region217: #{_forward_core.1} parent=1 // pred_fallthru
      _
    %3832 = vsyncpa [#allocation3], 1
    %3833 = vsyncpa [#allocation6], 1
    %3834 = vsyncpa [#allocation9], 1
    %3835 = vsyncpa [#allocation12], 1
    %3836 = vsyncpa [#allocation15], 1
    %3837 = vsyncpa [#allocation18], 1
    %3838 = vsyncpa [#allocation21], 1
    %3839 = vsyncpa [#allocation24], 1
    %3840 = vsyncpa [#allocation27], 1
    %3841 = vsyncpa [#allocation30], 1
    %3842 = vsyncpa [#allocation33], 1
    %3843 = vsyncpa [#allocation4], 1

</llo_original>
